<compile_context>
chip_gen: v7x
topology: tpu7x:2x2x1
jax: 0.10.0
libtpu: 0.0.40
codegen_flags: <defaults>
</compile_context>

<pallas_src>
import functools

import jax
import jax.numpy as jnp
from jax.experimental import pallas as pl
from jax.experimental.pallas import tpu as pltpu

# ----------------------- model hyper-parameters (small proxy) -----------------
K_POINTS = 7                 # K in the reference module
C1 = 32                      # cnn1 output channels (proxy)
TRANSPOSE_INPUT_FEATS = 64   # cnn2 output channels (proxy for 256/512/832)
NUM_OF_FEATS = 128           # cnn3 output channels (proxy for 512/1024)
DECONV_HIDDEN = 64           # proxy for 512 inside self.deconv
POSE_HIDDEN = 256            # Linear(K*2, 256) as in the module
ALPHA = 1000.0


def _round_up(x, m):
    return (x + m - 1) // m * m


# ------------------- tiled matmul + bias + activation kernel -------------------
def _matmul_kernel(a_ref, b_ref, bias_ref, o_ref, acc_ref, *, act):
    k = pl.program_id(2)

    @pl.when(k == 0)
    def _init():
        acc_ref[...] = jnp.zeros_like(acc_ref)

    acc_ref[...] += jnp.dot(a_ref[...], b_ref[...],
                            preferred_element_type=jnp.float32)

    @pl.when(k == pl.num_programs(2) - 1)
    def _finalize():
        r = acc_ref[...] + bias_ref[...]
        if act == "relu":
            r = jnp.maximum(r, 0.0)
        o_ref[...] = r.astype(o_ref.dtype)


def pallas_matmul(a, b, bias, act=None, out_dtype=jnp.bfloat16):
    """o = act(a @ b + bias); a:(M,K), b:(K,N), bias:(N,).

    bf16 MXU inputs, fp32 accumulator; operands padded so that N and K are
    multiples of 128 (lane-dense stores, aligned contraction) and M is a
    multiple of the row tile.  Padding is zero so results are unchanged after
    slicing back to (M, N).
    """
    M, K = a.shape
    Kb, N = b.shape
    assert K == Kb

    if M >= 256:
        tm = 256
        Mp = _round_up(M, tm)
    else:
        Mp = _round_up(M, 16)
        tm = Mp
    Np = _round_up(N, 128)
    tn = 256 if (Np >= 256 and Np % 256 == 0) else 128
    Kp = _round_up(K, 128)
    tk = 512 if Kp % 512 == 0 else (256 if Kp % 256 == 0 else 128)

    a_p = jnp.pad(a.astype(jnp.bfloat16), ((0, Mp - M), (0, Kp - K)))
    b_p = jnp.pad(b.astype(jnp.bfloat16), ((0, Kp - K), (0, Np - N)))
    bias_p = jnp.pad(bias.astype(jnp.float32).reshape(1, N), ((0, 0), (0, Np - N)))

    grid = (Mp // tm, Np // tn, Kp // tk)

    out = pl.pallas_call(
        functools.partial(_matmul_kernel, act=act),
        out_shape=jax.ShapeDtypeStruct((Mp, Np), out_dtype),
        grid_spec=pltpu.PrefetchScalarGridSpec(
            num_scalar_prefetch=0,
            grid=grid,
            in_specs=[
                pl.BlockSpec((tm, tk), lambda i, j, k: (i, k)),
                pl.BlockSpec((tk, tn), lambda i, j, k: (k, j)),
                pl.BlockSpec((1, tn), lambda i, j, k: (0, j)),
            ],
            out_specs=pl.BlockSpec((tm, tn), lambda i, j, k: (i, j)),
            scratch_shapes=[pltpu.VMEM((tm, tn), jnp.float32)],
        ),
        compiler_params=pltpu.CompilerParams(
            dimension_semantics=("parallel", "parallel", "arbitrary"),
            vmem_limit_bytes=32 * 1024 * 1024,
        ),
    )(a_p, b_p, bias_p)
    return out[:M, :N]


# ------------- fused head: global_pool + dc3 + soft_argmax + pose_fc -----------
def _head_kernel(out3_ref, d2_ref, w3_ref, b3_ref, idx_ref,
                 fcx_ref, fcy_ref, fcb_ref, fff_ref, pose_ref,
                 *, alpha, heat_h, heat_w):
    # global average pool of out3 for this batch element -> (1, C3)
    fff_ref[0] = jnp.mean(out3_ref[0].astype(jnp.float32), axis=0, keepdims=True)

    # dc3: 1x1 conv to K heatmap channels.  Kept entirely in VMEM (never a
    # lane-width-7 HBM store).
    x = d2_ref[0]                                                    # (HW16, Ch)
    heat = jnp.dot(x, w3_ref[...],
                   preferred_element_type=jnp.float32) + b3_ref[...]  # (HW16, K)

    # soft_argmax, reference semantics: softmax(alpha * heat) over the whole
    # heatmap, expectation of the FLAT index, then floor / mod decomposition.
    v = heat * alpha
    m = jnp.max(v, axis=0, keepdims=True)                            # (1, K)
    e = jnp.exp(v - m)
    s = jnp.sum(e, axis=0, keepdims=True)                            # (1, K)
    w_idx = jnp.sum(e * idx_ref[...], axis=0, keepdims=True)         # (1, K)
    ind = w_idx / s
    f = jnp.floor(ind)
    yy = jnp.mod(f, float(heat_w))                                   # column
    xx = jnp.mod(jnp.floor(f / float(heat_w)), float(heat_h))        # row

    # pose_fc: Linear(2K, P) + ReLU.  fc_w was pre-split into the rows that
    # multiply x-coords (even rows) and y-coords (odd rows), so there is no
    # in-kernel interleave/reshape.
    pose = (jnp.dot(xx, fcx_ref[...], preferred_element_type=jnp.float32)
            + jnp.dot(yy, fcy_ref[...], preferred_element_type=jnp.float32)
            + fcb_ref[...])
    pose_ref[0] = jnp.maximum(pose, 0.0)


def head_pallas(out3_b, d2_b, w3, b3, flat_idx, fc_w, fc_b, heat_h, heat_w):
    N, HW3, C3 = out3_b.shape
    _, HW16, Ch = d2_b.shape
    K = w3.shape[-1]
    P = fc_w.shape[-1]

    w3m = w3.reshape(Ch, K).astype(jnp.bfloat16)
    b3m = b3.reshape(1, K).astype(jnp.float32)
    fcx = fc_w[0::2, :].astype(jnp.float32)   # rows multiplying x coordinates
    fcy = fc_w[1::2, :].astype(jnp.float32)   # rows multiplying y coordinates
    fcbm = fc_b.reshape(1, P).astype(jnp.float32)

    fff, pose = pl.pallas_call(
        functools.partial(_head_kernel, alpha=ALPHA, heat_h=heat_h, heat_w=heat_w),
        out_shape=(jax.ShapeDtypeStruct((N, 1, C3), jnp.float32),
                   jax.ShapeDtypeStruct((N, 1, P), jnp.float32)),
        grid_spec=pltpu.PrefetchScalarGridSpec(
            num_scalar_prefetch=0,
            grid=(N,),
            in_specs=[
                pl.BlockSpec((1, HW3, C3), lambda n: (n, 0, 0)),
                pl.BlockSpec((1, HW16, Ch), lambda n: (n, 0, 0)),
                pl.BlockSpec((Ch, K), lambda n: (0, 0)),
                pl.BlockSpec((1, K), lambda n: (0, 0)),
                pl.BlockSpec((HW16, 1), lambda n: (0, 0)),
                pl.BlockSpec((K, P), lambda n: (0, 0)),
                pl.BlockSpec((K, P), lambda n: (0, 0)),
                pl.BlockSpec((1, P), lambda n: (0, 0)),
            ],
            out_specs=[
                pl.BlockSpec((1, 1, C3), lambda n: (n, 0, 0)),
                pl.BlockSpec((1, 1, P), lambda n: (n, 0, 0)),
            ],
        ),
        compiler_params=pltpu.CompilerParams(
            dimension_semantics=("parallel",),
            vmem_limit_bytes=32 * 1024 * 1024,
        ),
    )(out3_b, d2_b, w3m, b3m, flat_idx, fcx, fcy, fcbm)
    return fff.reshape(N, C3), pose.reshape(N, P)


def _heatmap_flat_index(h2, w2):
    """Flat heatmap index for each row of the un-shuffled deconv output.

    Rows are ordered (h, w, di, dj, di2, dj2); the corresponding heatmap pixel
    is (Y, X) = (4h + 2*di + di2, 4w + 2*dj + dj2) on a (4*h2, 4*w2) map, so
    flat = Y * (4*w2) + X.
    """
    hh = jnp.arange(h2).reshape(h2, 1, 1, 1, 1, 1)
    ww = jnp.arange(w2).reshape(1, w2, 1, 1, 1, 1)
    di = jnp.arange(2).reshape(1, 1, 2, 1, 1, 1)
    dj = jnp.arange(2).reshape(1, 1, 1, 2, 1, 1)
    di2 = jnp.arange(2).reshape(1, 1, 1, 1, 2, 1)
    dj2 = jnp.arange(2).reshape(1, 1, 1, 1, 1, 2)
    yy = 4 * hh + 2 * di + di2
    xx = 4 * ww + 2 * dj + dj2
    flat = yy * (4 * w2) + xx                     # broadcasts to (h2,w2,2,2,2,2)
    return flat.reshape(h2 * w2 * 16, 1).astype(jnp.float32)


# ----------------------------- conv / deconv glue -------------------------------
def _im2col(x, kh, kw, stride, pad):
    """x: (N,H,W,C) -> (N,Ho,Wo, kh*kw*C) with feature order (kh, kw, C)."""
    N, H, W, C = x.shape
    xp = jnp.pad(x, ((0, 0), (pad, pad), (pad, pad), (0, 0)))
    Ho = (H + 2 * pad - kh) // stride + 1
    Wo = (W + 2 * pad - kw) // stride + 1
    cols = []
    for di in range(kh):
        for dj in range(kw):
            cols.append(xp[:, di:di + stride * Ho:stride, dj:dj + stride * Wo:stride, :])
    return jnp.concatenate(cols, axis=-1), Ho, Wo


def conv2d(x, w, b, stride, pad, act=None):
    """x:(N,H,W,Cin), w:(kh,kw,Cin,Cout), b:(Cout,) -> (N,Ho,Wo,Cout) in bf16."""
    # TODO(synk): im2col is still materialized by XLA (in bf16); an in-kernel
    # windowed BlockSpec would remove that traffic for stride-1 3x3 convs, but
    # all convs here are strided so the inflation is small.
    kh, kw, Cin, Cout = w.shape
    cols, Ho, Wo = _im2col(x, kh, kw, stride, pad)
    Nb = x.shape[0]
    out = pallas_matmul(cols.reshape(Nb * Ho * Wo, kh * kw * Cin),
                        w.reshape(kh * kw * Cin, Cout), b, act=act)
    return out.reshape(Nb, Ho, Wo, Cout)


def deconv2x2_rows(x_rows, w, b, act="relu"):
    """ConvTranspose2d(kernel=2, stride=2) without materializing the pixel
    shuffle.  x_rows:(R, Cin), w:(Cin,2,2,Cout) -> (4R, Cout), rows ordered
    (r, di, dj): each input pixel expands into its 2x2 output sub-pixels as 4
    consecutive rows (a pure, copy-free reshape)."""
    Cin, _, _, Cout = w.shape
    wm = w.reshape(Cin, 4 * Cout)            # columns ordered (di, dj, cout)
    bias_t = jnp.tile(b, 4)
    y = pallas_matmul(x_rows, wm, bias_t, act=act)     # (R, 4*Cout)
    return y.reshape(-1, Cout)                         # (4R, Cout)


# ----------------------------- parameters --------------------------------------
def init_params(key):
    ks = jax.random.split(key, 8)

    def w(k, shape, fan_in):
        return jax.random.normal(k, shape, jnp.float32) / jnp.sqrt(float(fan_in))

    return {
        "cnn1_w": w(ks[0], (3, 3, 3, C1), 3 * 3 * 3),
        "cnn1_b": jnp.zeros((C1,), jnp.float32),
        "cnn2_w": w(ks[1], (3, 3, C1, TRANSPOSE_INPUT_FEATS), 3 * 3 * C1),
        "cnn2_b": jnp.zeros((TRANSPOSE_INPUT_FEATS,), jnp.float32),
        "cnn3_w": w(ks[2], (3, 3, TRANSPOSE_INPUT_FEATS, NUM_OF_FEATS),
                    3 * 3 * TRANSPOSE_INPUT_FEATS),
        "cnn3_b": jnp.zeros((NUM_OF_FEATS,), jnp.float32),
        "dc1_w": w(ks[3], (TRANSPOSE_INPUT_FEATS, 2, 2, DECONV_HIDDEN),
                   TRANSPOSE_INPUT_FEATS),
        "dc1_b": jnp.zeros((DECONV_HIDDEN,), jnp.float32),
        "dc2_w": w(ks[4], (DECONV_HIDDEN, 2, 2, DECONV_HIDDEN), DECONV_HIDDEN),
        "dc2_b": jnp.zeros((DECONV_HIDDEN,), jnp.float32),
        "dc3_w": w(ks[5], (1, 1, DECONV_HIDDEN, K_POINTS), DECONV_HIDDEN),
        "dc3_b": jnp.zeros((K_POINTS,), jnp.float32),
        "fc_w": w(ks[6], (K_POINTS * 2, POSE_HIDDEN), K_POINTS * 2),
        "fc_b": jnp.zeros((POSE_HIDDEN,), jnp.float32),
    }


# ----------------------------- SMC forward --------------------------------------
def smc_forward(params, x_nchw):
    x = jnp.transpose(x_nchw, (0, 2, 3, 1)).astype(jnp.bfloat16)   # NCHW -> NHWC
    N = x.shape[0]

    out1 = conv2d(x, params["cnn1_w"], params["cnn1_b"], stride=4, pad=1, act="relu")
    out2 = conv2d(out1, params["cnn2_w"], params["cnn2_b"], stride=2, pad=1, act="relu")
    out3 = conv2d(out2, params["cnn3_w"], params["cnn3_b"], stride=2, pad=1, act="relu")

    _, H2, W2, Cin2 = out2.shape
    H3, W3, C3 = out3.shape[1], out3.shape[2], out3.shape[3]

    # deconv head (ConvTranspose 2x2 s2, twice) kept in un-shuffled layout.
    d1_px = deconv2x2_rows(out2.reshape(N * H2 * W2, Cin2),
                           params["dc1_w"], params["dc1_b"], act="relu")
    d2_px = deconv2x2_rows(d1_px, params["dc2_w"], params["dc2_b"], act="relu")

    HW16 = H2 * W2 * 16
    d2_b = d2_px.reshape(N, HW16, DECONV_HIDDEN)
    out3_b = out3.reshape(N, H3 * W3, C3)
    flat_idx = _heatmap_flat_index(H2, W2)

    # fused: global_pool(out3) + dc3 1x1 conv + soft_argmax + pose_fc
    full_frame_features, pose_feats = head_pallas(
        out3_b, d2_b, params["dc3_w"], params["dc3_b"], flat_idx,
        params["fc_w"], params["fc_b"], heat_h=4 * H2, heat_w=4 * W2)

    out = jnp.concatenate([full_frame_features, pose_feats], axis=-1)
    return out, full_frame_features, pose_feats


# ----------------------------- driver --------------------------------------------
if __name__ == "__main__":
    key = jax.random.PRNGKey(0)
    pkey, xkey = jax.random.split(key)
    params = init_params(pkey)

    # batch_size_x_Timesteps=2, C=3, H=W=32
    x = jax.random.normal(xkey, (2, 3, 32, 32), jnp.float32)

    out, fff, pose = jax.jit(smc_forward)(params, x)
    jax.block_until_ready((out, fff, pose))

    assert out.shape == (2, NUM_OF_FEATS + POSE_HIDDEN)
    assert fff.shape == (2, NUM_OF_FEATS)
    assert pose.shape == (2, POSE_HIDDEN)
    print("KERNEL_OK")
</pallas_src>

<mosaic_0001>
module attributes {stable_mosaic.version = 11 : i64} {
  func.func @_matmul_kernel(%arg0: i32, %arg1: i32, %arg2: i32, %arg3: memref<128x128xbf16, #tpu.memory_space<vmem>>, %arg4: memref<128x128xbf16, #tpu.memory_space<vmem>>, %arg5: memref<1x128xf32, #tpu.memory_space<vmem>>, %arg6: memref<128x128xbf16, #tpu.memory_space<vmem>>, %arg7: memref<128x128xf32, #tpu.memory_space<vmem>>) attributes {dimension_semantics = [#tpu.dimension_semantics<parallel>, #tpu.dimension_semantics<parallel>, #tpu.dimension_semantics<arbitrary>], iteration_bounds = array<i64: 1, 1, 1>, scalar_prefetch = 0 : i64, scratch_operands = 1 : i64, tpu.core_type = #tpu.core_type<tc>, window_params = [{transform_indices = @transform_0, window_bounds = array<i64: 128, 128>}, {transform_indices = @transform_1, window_bounds = array<i64: 128, 128>}, {transform_indices = @transform_2, window_bounds = array<i64: 1, 128>}, {transform_indices = @transform_3, window_bounds = array<i64: 128, 128>}]} {
    %c0_i32 = arith.constant 0 : i32
    %0 = arith.cmpi eq, %arg2, %c0_i32 : i32
    %1 = arith.extui %0 : i1 to i32
    %c0_i32_0 = arith.constant 0 : i32
    %2 = arith.cmpi ne, %1, %c0_i32_0 : i32
    scf.if %2 {
      %cst_10 = arith.constant 0.000000e+00 : f32
      %12 = vector.broadcast %cst_10 : f32 to vector<128x128xf32>
      %c0_11 = arith.constant 0 : index
      %c0_12 = arith.constant 0 : index
      %13 = vector.load %arg7[%c0_11, %c0_12] : memref<128x128xf32, #tpu.memory_space<vmem>>, vector<128x128xf32>
      tpu.vector_store %arg7[%c0_11, %c0_12], %12 {strides = array<i32>} : memref<128x128xf32, #tpu.memory_space<vmem>>, vector<128x128xf32>,
    } else {
    }
    %c0 = arith.constant 0 : index
    %c0_1 = arith.constant 0 : index
    %3 = vector.load %arg7[%c0, %c0_1] : memref<128x128xf32, #tpu.memory_space<vmem>>, vector<128x128xf32>
    %c0_2 = arith.constant 0 : index
    %c0_3 = arith.constant 0 : index
    %4 = vector.load %arg3[%c0_2, %c0_3] : memref<128x128xbf16, #tpu.memory_space<vmem>>, vector<128x128xbf16>
    %c0_4 = arith.constant 0 : index
    %c0_5 = arith.constant 0 : index
    %5 = vector.load %arg4[%c0_4, %c0_5] : memref<128x128xbf16, #tpu.memory_space<vmem>>, vector<128x128xbf16>
    %cst = arith.constant dense<0.000000e+00> : vector<128x128xf32>
    %6 = tpu.matmul %4, %5, %cst {dimension_numbers = #tpu.dot_dimension_numbers<[1], [0], [0], [1], [0, 0, 1, 1], [], []>} : vector<128x128xbf16>, vector<128x128xbf16>, vector<128x128xf32> -> vector<128x128xf32>
    %7 = arith.addf %3, %6 : vector<128x128xf32>
    %c0_6 = arith.constant 0 : index
    %c0_7 = arith.constant 0 : index
    %8 = vector.load %arg7[%c0_6, %c0_7] : memref<128x128xf32, #tpu.memory_space<vmem>>, vector<128x128xf32>
    tpu.vector_store %arg7[%c0_6, %c0_7], %7 {strides = array<i32>} : memref<128x128xf32, #tpu.memory_space<vmem>>, vector<128x128xf32>,
    %c0_i32_8 = arith.constant 0 : i32
    %9 = arith.cmpi eq, %arg2, %c0_i32_8 : i32
    %10 = arith.extui %9 : i1 to i32
    %c0_i32_9 = arith.constant 0 : i32
    %11 = arith.cmpi ne, %10, %c0_i32_9 : i32
    scf.if %11 {
      %c0_10 = arith.constant 0 : index
      %c0_11 = arith.constant 0 : index
      %12 = vector.load %arg7[%c0_10, %c0_11] : memref<128x128xf32, #tpu.memory_space<vmem>>, vector<128x128xf32>
      %c0_12 = arith.constant 0 : index
      %c0_13 = arith.constant 0 : index
      %13 = vector.load %arg5[%c0_12, %c0_13] : memref<1x128xf32, #tpu.memory_space<vmem>>, vector<1x128xf32>
      %14 = vector.broadcast %13 : vector<1x128xf32> to vector<128x128xf32>
      %15 = arith.addf %12, %14 : vector<128x128xf32>
      %cst_14 = arith.constant 0.000000e+00 : f32
      %16 = vector.broadcast %cst_14 : f32 to vector<128x128xf32>
      %17 = arith.maximumf %15, %16 : vector<128x128xf32>
      %18 = arith.truncf %17 : vector<128x128xf32> to vector<128x128xbf16>
      %c0_15 = arith.constant 0 : index
      %c0_16 = arith.constant 0 : index
      %19 = vector.load %arg6[%c0_15, %c0_16] : memref<128x128xbf16, #tpu.memory_space<vmem>>, vector<128x128xbf16>
      tpu.vector_store %arg6[%c0_15, %c0_16], %18 {strides = array<i32>} : memref<128x128xbf16, #tpu.memory_space<vmem>>, vector<128x128xbf16>,
    } else {
    }
    return
  }
  func.func @transform_0(%arg0: i32, %arg1: i32, %arg2: i32) -> (i32, i32) {
    %c0_i32 = arith.constant 0 : i32
    return %arg0, %arg2 : i32, i32
  }
  func.func @transform_1(%arg0: i32, %arg1: i32, %arg2: i32) -> (i32, i32) {
    %c0_i32 = arith.constant 0 : i32
    return %arg2, %arg1 : i32, i32
  }
  func.func @transform_2(%arg0: i32, %arg1: i32, %arg2: i32) -> (i32, i32) {
    %c0_i32 = arith.constant 0 : i32
    %c0_i32_0 = arith.constant 0 : i32
    return %c0_i32, %arg1 : i32, i32
  }
  func.func @transform_3(%arg0: i32, %arg1: i32, %arg2: i32) -> (i32, i32) {
    %c0_i32 = arith.constant 0 : i32
    return %arg0, %arg1 : i32, i32
  }
}

module attributes {stable_mosaic.version = 11 : i64} {
  func.func @_matmul_kernel(%arg0: i32, %arg1: i32, %arg2: i32, %arg3: memref<32x128xbf16, #tpu.memory_space<vmem>>, %arg4: memref<128x128xbf16, #tpu.memory_space<vmem>>, %arg5: memref<1x128xf32, #tpu.memory_space<vmem>>, %arg6: memref<32x128xbf16, #tpu.memory_space<vmem>>, %arg7: memref<32x128xf32, #tpu.memory_space<vmem>>) attributes {dimension_semantics = [#tpu.dimension_semantics<parallel>, #tpu.dimension_semantics<parallel>, #tpu.dimension_semantics<arbitrary>], iteration_bounds = array<i64: 1, 1, 3>, scalar_prefetch = 0 : i64, scratch_operands = 1 : i64, tpu.core_type = #tpu.core_type<tc>, window_params = [{transform_indices = @transform_0, window_bounds = array<i64: 32, 128>}, {transform_indices = @transform_1, window_bounds = array<i64: 128, 128>}, {transform_indices = @transform_2, window_bounds = array<i64: 1, 128>}, {transform_indices = @transform_3, window_bounds = array<i64: 32, 128>}]} {
    %c0_i32 = arith.constant 0 : i32
    %0 = arith.cmpi eq, %arg2, %c0_i32 : i32
    %1 = arith.extui %0 : i1 to i32
    %c0_i32_0 = arith.constant 0 : i32
    %2 = arith.cmpi ne, %1, %c0_i32_0 : i32
    scf.if %2 {
      %cst_9 = arith.constant 0.000000e+00 : f32
      %12 = vector.broadcast %cst_9 : f32 to vector<32x128xf32>
      %c0_10 = arith.constant 0 : index
      %c0_11 = arith.constant 0 : index
      %13 = vector.load %arg7[%c0_10, %c0_11] : memref<32x128xf32, #tpu.memory_space<vmem>>, vector<32x128xf32>
      tpu.vector_store %arg7[%c0_10, %c0_11], %12 {strides = array<i32>} : memref<32x128xf32, #tpu.memory_space<vmem>>, vector<32x128xf32>,
    } else {
    }
    %c0 = arith.constant 0 : index
    %c0_1 = arith.constant 0 : index
    %3 = vector.load %arg7[%c0, %c0_1] : memref<32x128xf32, #tpu.memory_space<vmem>>, vector<32x128xf32>
    %c0_2 = arith.constant 0 : index
    %c0_3 = arith.constant 0 : index
    %4 = vector.load %arg3[%c0_2, %c0_3] : memref<32x128xbf16, #tpu.memory_space<vmem>>, vector<32x128xbf16>
    %c0_4 = arith.constant 0 : index
    %c0_5 = arith.constant 0 : index
    %5 = vector.load %arg4[%c0_4, %c0_5] : memref<128x128xbf16, #tpu.memory_space<vmem>>, vector<128x128xbf16>
    %cst = arith.constant dense<0.000000e+00> : vector<32x128xf32>
    %6 = tpu.matmul %4, %5, %cst {dimension_numbers = #tpu.dot_dimension_numbers<[1], [0], [0], [1], [0, 0, 1, 1], [], []>} : vector<32x128xbf16>, vector<128x128xbf16>, vector<32x128xf32> -> vector<32x128xf32>
    %7 = arith.addf %3, %6 : vector<32x128xf32>
    %c0_6 = arith.constant 0 : index
    %c0_7 = arith.constant 0 : index
    %8 = vector.load %arg7[%c0_6, %c0_7] : memref<32x128xf32, #tpu.memory_space<vmem>>, vector<32x128xf32>
    tpu.vector_store %arg7[%c0_6, %c0_7], %7 {strides = array<i32>} : memref<32x128xf32, #tpu.memory_space<vmem>>, vector<32x128xf32>,
    %c2_i32 = arith.constant 2 : i32
    %9 = arith.cmpi eq, %arg2, %c2_i32 : i32
    %10 = arith.extui %9 : i1 to i32
    %c0_i32_8 = arith.constant 0 : i32
    %11 = arith.cmpi ne, %10, %c0_i32_8 : i32
    scf.if %11 {
      %c0_9 = arith.constant 0 : index
      %c0_10 = arith.constant 0 : index
      %12 = vector.load %arg7[%c0_9, %c0_10] : memref<32x128xf32, #tpu.memory_space<vmem>>, vector<32x128xf32>
      %c0_11 = arith.constant 0 : index
      %c0_12 = arith.constant 0 : index
      %13 = vector.load %arg5[%c0_11, %c0_12] : memref<1x128xf32, #tpu.memory_space<vmem>>, vector<1x128xf32>
      %14 = vector.broadcast %13 : vector<1x128xf32> to vector<32x128xf32>
      %15 = arith.addf %12, %14 : vector<32x128xf32>
      %cst_13 = arith.constant 0.000000e+00 : f32
      %16 = vector.broadcast %cst_13 : f32 to vector<32x128xf32>
      %17 = arith.maximumf %15, %16 : vector<32x128xf32>
      %18 = arith.truncf %17 : vector<32x128xf32> to vector<32x128xbf16>
      %c0_14 = arith.constant 0 : index
      %c0_15 = arith.constant 0 : index
      %19 = vector.load %arg6[%c0_14, %c0_15] : memref<32x128xbf16, #tpu.memory_space<vmem>>, vector<32x128xbf16>
      tpu.vector_store %arg6[%c0_14, %c0_15], %18 {strides = array<i32>} : memref<32x128xbf16, #tpu.memory_space<vmem>>, vector<32x128xbf16>,
    } else {
    }
    return
  }
  func.func @transform_0(%arg0: i32, %arg1: i32, %arg2: i32) -> (i32, i32) {
    %c0_i32 = arith.constant 0 : i32
    return %arg0, %arg2 : i32, i32
  }
  func.func @transform_1(%arg0: i32, %arg1: i32, %arg2: i32) -> (i32, i32) {
    %c0_i32 = arith.constant 0 : i32
    return %arg2, %arg1 : i32, i32
  }
  func.func @transform_2(%arg0: i32, %arg1: i32, %arg2: i32) -> (i32, i32) {
    %c0_i32 = arith.constant 0 : i32
    %c0_i32_0 = arith.constant 0 : i32
    return %c0_i32, %arg1 : i32, i32
  }
  func.func @transform_3(%arg0: i32, %arg1: i32, %arg2: i32) -> (i32, i32) {
    %c0_i32 = arith.constant 0 : i32
    return %arg0, %arg1 : i32, i32
  }
}

module attributes {stable_mosaic.version = 11 : i64} {
  func.func @_matmul_kernel(%arg0: i32, %arg1: i32, %arg2: i32, %arg3: memref<32x128xbf16, #tpu.memory_space<vmem>>, %arg4: memref<128x256xbf16, #tpu.memory_space<vmem>>, %arg5: memref<1x256xf32, #tpu.memory_space<vmem>>, %arg6: memref<32x256xbf16, #tpu.memory_space<vmem>>, %arg7: memref<32x256xf32, #tpu.memory_space<vmem>>) attributes {dimension_semantics = [#tpu.dimension_semantics<parallel>, #tpu.dimension_semantics<parallel>, #tpu.dimension_semantics<arbitrary>], iteration_bounds = array<i64: 1, 1, 1>, scalar_prefetch = 0 : i64, scratch_operands = 1 : i64, tpu.core_type = #tpu.core_type<tc>, window_params = [{transform_indices = @transform_0, window_bounds = array<i64: 32, 128>}, {transform_indices = @transform_1, window_bounds = array<i64: 128, 256>}, {transform_indices = @transform_2, window_bounds = array<i64: 1, 256>}, {transform_indices = @transform_3, window_bounds = array<i64: 32, 256>}]} {
    %c0_i32 = arith.constant 0 : i32
    %0 = arith.cmpi eq, %arg2, %c0_i32 : i32
    %1 = arith.extui %0 : i1 to i32
    %c0_i32_0 = arith.constant 0 : i32
    %2 = arith.cmpi ne, %1, %c0_i32_0 : i32
    scf.if %2 {
      %cst_10 = arith.constant 0.000000e+00 : f32
      %12 = vector.broadcast %cst_10 : f32 to vector<32x256xf32>
      %c0_11 = arith.constant 0 : index
      %c0_12 = arith.constant 0 : index
      %13 = vector.load %arg7[%c0_11, %c0_12] : memref<32x256xf32, #tpu.memory_space<vmem>>, vector<32x256xf32>
      tpu.vector_store %arg7[%c0_11, %c0_12], %12 {strides = array<i32>} : memref<32x256xf32, #tpu.memory_space<vmem>>, vector<32x256xf32>,
    } else {
    }
    %c0 = arith.constant 0 : index
    %c0_1 = arith.constant 0 : index
    %3 = vector.load %arg7[%c0, %c0_1] : memref<32x256xf32, #tpu.memory_space<vmem>>, vector<32x256xf32>
    %c0_2 = arith.constant 0 : index
    %c0_3 = arith.constant 0 : index
    %4 = vector.load %arg3[%c0_2, %c0_3] : memref<32x128xbf16, #tpu.memory_space<vmem>>, vector<32x128xbf16>
    %c0_4 = arith.constant 0 : index
    %c0_5 = arith.constant 0 : index
    %5 = vector.load %arg4[%c0_4, %c0_5] : memref<128x256xbf16, #tpu.memory_space<vmem>>, vector<128x256xbf16>
    %cst = arith.constant dense<0.000000e+00> : vector<32x256xf32>
    %6 = tpu.matmul %4, %5, %cst {dimension_numbers = #tpu.dot_dimension_numbers<[1], [0], [0], [1], [0, 0, 1, 1], [], []>} : vector<32x128xbf16>, vector<128x256xbf16>, vector<32x256xf32> -> vector<32x256xf32>
    %7 = arith.addf %3, %6 : vector<32x256xf32>
    %c0_6 = arith.constant 0 : index
    %c0_7 = arith.constant 0 : index
    %8 = vector.load %arg7[%c0_6, %c0_7] : memref<32x256xf32, #tpu.memory_space<vmem>>, vector<32x256xf32>
    tpu.vector_store %arg7[%c0_6, %c0_7], %7 {strides = array<i32>} : memref<32x256xf32, #tpu.memory_space<vmem>>, vector<32x256xf32>,
    %c0_i32_8 = arith.constant 0 : i32
    %9 = arith.cmpi eq, %arg2, %c0_i32_8 : i32
    %10 = arith.extui %9 : i1 to i32
    %c0_i32_9 = arith.constant 0 : i32
    %11 = arith.cmpi ne, %10, %c0_i32_9 : i32
    scf.if %11 {
      %c0_10 = arith.constant 0 : index
      %c0_11 = arith.constant 0 : index
      %12 = vector.load %arg7[%c0_10, %c0_11] : memref<32x256xf32, #tpu.memory_space<vmem>>, vector<32x256xf32>
      %c0_12 = arith.constant 0 : index
      %c0_13 = arith.constant 0 : index
      %13 = vector.load %arg5[%c0_12, %c0_13] : memref<1x256xf32, #tpu.memory_space<vmem>>, vector<1x256xf32>
      %14 = vector.broadcast %13 : vector<1x256xf32> to vector<32x256xf32>
      %15 = arith.addf %12, %14 : vector<32x256xf32>
      %cst_14 = arith.constant 0.000000e+00 : f32
      %16 = vector.broadcast %cst_14 : f32 to vector<32x256xf32>
      %17 = arith.maximumf %15, %16 : vector<32x256xf32>
      %18 = arith.truncf %17 : vector<32x256xf32> to vector<32x256xbf16>
      %c0_15 = arith.constant 0 : index
      %c0_16 = arith.constant 0 : index
      %19 = vector.load %arg6[%c0_15, %c0_16] : memref<32x256xbf16, #tpu.memory_space<vmem>>, vector<32x256xbf16>
      tpu.vector_store %arg6[%c0_15, %c0_16], %18 {strides = array<i32>} : memref<32x256xbf16, #tpu.memory_space<vmem>>, vector<32x256xbf16>,
    } else {
    }
    return
  }
  func.func @transform_0(%arg0: i32, %arg1: i32, %arg2: i32) -> (i32, i32) {
    %c0_i32 = arith.constant 0 : i32
    return %arg0, %arg2 : i32, i32
  }
  func.func @transform_1(%arg0: i32, %arg1: i32, %arg2: i32) -> (i32, i32) {
    %c0_i32 = arith.constant 0 : i32
    return %arg2, %arg1 : i32, i32
  }
  func.func @transform_2(%arg0: i32, %arg1: i32, %arg2: i32) -> (i32, i32) {
    %c0_i32 = arith.constant 0 : i32
    %c0_i32_0 = arith.constant 0 : i32
    return %c0_i32, %arg1 : i32, i32
  }
  func.func @transform_3(%arg0: i32, %arg1: i32, %arg2: i32) -> (i32, i32) {
    %c0_i32 = arith.constant 0 : i32
    return %arg0, %arg1 : i32, i32
  }
}

module attributes {stable_mosaic.version = 11 : i64} {
  func.func @_matmul_kernel(%arg0: i32, %arg1: i32, %arg2: i32, %arg3: memref<128x128xbf16, #tpu.memory_space<vmem>>, %arg4: memref<128x256xbf16, #tpu.memory_space<vmem>>, %arg5: memref<1x256xf32, #tpu.memory_space<vmem>>, %arg6: memref<128x256xbf16, #tpu.memory_space<vmem>>, %arg7: memref<128x256xf32, #tpu.memory_space<vmem>>) attributes {dimension_semantics = [#tpu.dimension_semantics<parallel>, #tpu.dimension_semantics<parallel>, #tpu.dimension_semantics<arbitrary>], iteration_bounds = array<i64: 1, 1, 1>, scalar_prefetch = 0 : i64, scratch_operands = 1 : i64, tpu.core_type = #tpu.core_type<tc>, window_params = [{transform_indices = @transform_0, window_bounds = array<i64: 128, 128>}, {transform_indices = @transform_1, window_bounds = array<i64: 128, 256>}, {transform_indices = @transform_2, window_bounds = array<i64: 1, 256>}, {transform_indices = @transform_3, window_bounds = array<i64: 128, 256>}]} {
    %c0_i32 = arith.constant 0 : i32
    %0 = arith.cmpi eq, %arg2, %c0_i32 : i32
    %1 = arith.extui %0 : i1 to i32
    %c0_i32_0 = arith.constant 0 : i32
    %2 = arith.cmpi ne, %1, %c0_i32_0 : i32
    scf.if %2 {
      %cst_10 = arith.constant 0.000000e+00 : f32
      %12 = vector.broadcast %cst_10 : f32 to vector<128x256xf32>
      %c0_11 = arith.constant 0 : index
      %c0_12 = arith.constant 0 : index
      %13 = vector.load %arg7[%c0_11, %c0_12] : memref<128x256xf32, #tpu.memory_space<vmem>>, vector<128x256xf32>
      tpu.vector_store %arg7[%c0_11, %c0_12], %12 {strides = array<i32>} : memref<128x256xf32, #tpu.memory_space<vmem>>, vector<128x256xf32>,
    } else {
    }
    %c0 = arith.constant 0 : index
    %c0_1 = arith.constant 0 : index
    %3 = vector.load %arg7[%c0, %c0_1] : memref<128x256xf32, #tpu.memory_space<vmem>>, vector<128x256xf32>
    %c0_2 = arith.constant 0 : index
    %c0_3 = arith.constant 0 : index
    %4 = vector.load %arg3[%c0_2, %c0_3] : memref<128x128xbf16, #tpu.memory_space<vmem>>, vector<128x128xbf16>
    %c0_4 = arith.constant 0 : index
    %c0_5 = arith.constant 0 : index
    %5 = vector.load %arg4[%c0_4, %c0_5] : memref<128x256xbf16, #tpu.memory_space<vmem>>, vector<128x256xbf16>
    %cst = arith.constant dense<0.000000e+00> : vector<128x256xf32>
    %6 = tpu.matmul %4, %5, %cst {dimension_numbers = #tpu.dot_dimension_numbers<[1], [0], [0], [1], [0, 0, 1, 1], [], []>} : vector<128x128xbf16>, vector<128x256xbf16>, vector<128x256xf32> -> vector<128x256xf32>
    %7 = arith.addf %3, %6 : vector<128x256xf32>
    %c0_6 = arith.constant 0 : index
    %c0_7 = arith.constant 0 : index
    %8 = vector.load %arg7[%c0_6, %c0_7] : memref<128x256xf32, #tpu.memory_space<vmem>>, vector<128x256xf32>
    tpu.vector_store %arg7[%c0_6, %c0_7], %7 {strides = array<i32>} : memref<128x256xf32, #tpu.memory_space<vmem>>, vector<128x256xf32>,
    %c0_i32_8 = arith.constant 0 : i32
    %9 = arith.cmpi eq, %arg2, %c0_i32_8 : i32
    %10 = arith.extui %9 : i1 to i32
    %c0_i32_9 = arith.constant 0 : i32
    %11 = arith.cmpi ne, %10, %c0_i32_9 : i32
    scf.if %11 {
      %c0_10 = arith.constant 0 : index
      %c0_11 = arith.constant 0 : index
      %12 = vector.load %arg7[%c0_10, %c0_11] : memref<128x256xf32, #tpu.memory_space<vmem>>, vector<128x256xf32>
      %c0_12 = arith.constant 0 : index
      %c0_13 = arith.constant 0 : index
      %13 = vector.load %arg5[%c0_12, %c0_13] : memref<1x256xf32, #tpu.memory_space<vmem>>, vector<1x256xf32>
      %14 = vector.broadcast %13 : vector<1x256xf32> to vector<128x256xf32>
      %15 = arith.addf %12, %14 : vector<128x256xf32>
      %cst_14 = arith.constant 0.000000e+00 : f32
      %16 = vector.broadcast %cst_14 : f32 to vector<128x256xf32>
      %17 = arith.maximumf %15, %16 : vector<128x256xf32>
      %18 = arith.truncf %17 : vector<128x256xf32> to vector<128x256xbf16>
      %c0_15 = arith.constant 0 : index
      %c0_16 = arith.constant 0 : index
      %19 = vector.load %arg6[%c0_15, %c0_16] : memref<128x256xbf16, #tpu.memory_space<vmem>>, vector<128x256xbf16>
      tpu.vector_store %arg6[%c0_15, %c0_16], %18 {strides = array<i32>} : memref<128x256xbf16, #tpu.memory_space<vmem>>, vector<128x256xbf16>,
    } else {
    }
    return
  }
  func.func @transform_0(%arg0: i32, %arg1: i32, %arg2: i32) -> (i32, i32) {
    %c0_i32 = arith.constant 0 : i32
    return %arg0, %arg2 : i32, i32
  }
  func.func @transform_1(%arg0: i32, %arg1: i32, %arg2: i32) -> (i32, i32) {
    %c0_i32 = arith.constant 0 : i32
    return %arg2, %arg1 : i32, i32
  }
  func.func @transform_2(%arg0: i32, %arg1: i32, %arg2: i32) -> (i32, i32) {
    %c0_i32 = arith.constant 0 : i32
    %c0_i32_0 = arith.constant 0 : i32
    return %c0_i32, %arg1 : i32, i32
  }
  func.func @transform_3(%arg0: i32, %arg1: i32, %arg2: i32) -> (i32, i32) {
    %c0_i32 = arith.constant 0 : i32
    return %arg0, %arg1 : i32, i32
  }
}

module attributes {stable_mosaic.version = 11 : i64} {
  func.func @_matmul_kernel(%arg0: i32, %arg1: i32, %arg2: i32, %arg3: memref<16x128xbf16, #tpu.memory_space<vmem>>, %arg4: memref<128x128xbf16, #tpu.memory_space<vmem>>, %arg5: memref<1x128xf32, #tpu.memory_space<vmem>>, %arg6: memref<16x128xbf16, #tpu.memory_space<vmem>>, %arg7: memref<16x128xf32, #tpu.memory_space<vmem>>) attributes {dimension_semantics = [#tpu.dimension_semantics<parallel>, #tpu.dimension_semantics<parallel>, #tpu.dimension_semantics<arbitrary>], iteration_bounds = array<i64: 1, 1, 5>, scalar_prefetch = 0 : i64, scratch_operands = 1 : i64, tpu.core_type = #tpu.core_type<tc>, window_params = [{transform_indices = @transform_0, window_bounds = array<i64: 16, 128>}, {transform_indices = @transform_1, window_bounds = array<i64: 128, 128>}, {transform_indices = @transform_2, window_bounds = array<i64: 1, 128>}, {transform_indices = @transform_3, window_bounds = array<i64: 16, 128>}]} {
    %c0_i32 = arith.constant 0 : i32
    %0 = arith.cmpi eq, %arg2, %c0_i32 : i32
    %1 = arith.extui %0 : i1 to i32
    %c0_i32_0 = arith.constant 0 : i32
    %2 = arith.cmpi ne, %1, %c0_i32_0 : i32
    scf.if %2 {
      %cst_9 = arith.constant 0.000000e+00 : f32
      %12 = vector.broadcast %cst_9 : f32 to vector<16x128xf32>
      %c0_10 = arith.constant 0 : index
      %c0_11 = arith.constant 0 : index
      %13 = vector.load %arg7[%c0_10, %c0_11] : memref<16x128xf32, #tpu.memory_space<vmem>>, vector<16x128xf32>
      tpu.vector_store %arg7[%c0_10, %c0_11], %12 {strides = array<i32>} : memref<16x128xf32, #tpu.memory_space<vmem>>, vector<16x128xf32>,
    } else {
    }
    %c0 = arith.constant 0 : index
    %c0_1 = arith.constant 0 : index
    %3 = vector.load %arg7[%c0, %c0_1] : memref<16x128xf32, #tpu.memory_space<vmem>>, vector<16x128xf32>
    %c0_2 = arith.constant 0 : index
    %c0_3 = arith.constant 0 : index
    %4 = vector.load %arg3[%c0_2, %c0_3] : memref<16x128xbf16, #tpu.memory_space<vmem>>, vector<16x128xbf16>
    %c0_4 = arith.constant 0 : index
    %c0_5 = arith.constant 0 : index
    %5 = vector.load %arg4[%c0_4, %c0_5] : memref<128x128xbf16, #tpu.memory_space<vmem>>, vector<128x128xbf16>
    %cst = arith.constant dense<0.000000e+00> : vector<16x128xf32>
    %6 = tpu.matmul %4, %5, %cst {dimension_numbers = #tpu.dot_dimension_numbers<[1], [0], [0], [1], [0, 0, 1, 1], [], []>} : vector<16x128xbf16>, vector<128x128xbf16>, vector<16x128xf32> -> vector<16x128xf32>
    %7 = arith.addf %3, %6 : vector<16x128xf32>
    %c0_6 = arith.constant 0 : index
    %c0_7 = arith.constant 0 : index
    %8 = vector.load %arg7[%c0_6, %c0_7] : memref<16x128xf32, #tpu.memory_space<vmem>>, vector<16x128xf32>
    tpu.vector_store %arg7[%c0_6, %c0_7], %7 {strides = array<i32>} : memref<16x128xf32, #tpu.memory_space<vmem>>, vector<16x128xf32>,
    %c4_i32 = arith.constant 4 : i32
    %9 = arith.cmpi eq, %arg2, %c4_i32 : i32
    %10 = arith.extui %9 : i1 to i32
    %c0_i32_8 = arith.constant 0 : i32
    %11 = arith.cmpi ne, %10, %c0_i32_8 : i32
    scf.if %11 {
      %c0_9 = arith.constant 0 : index
      %c0_10 = arith.constant 0 : index
      %12 = vector.load %arg7[%c0_9, %c0_10] : memref<16x128xf32, #tpu.memory_space<vmem>>, vector<16x128xf32>
      %c0_11 = arith.constant 0 : index
      %c0_12 = arith.constant 0 : index
      %13 = vector.load %arg5[%c0_11, %c0_12] : memref<1x128xf32, #tpu.memory_space<vmem>>, vector<1x128xf32>
      %14 = vector.broadcast %13 : vector<1x128xf32> to vector<16x128xf32>
      %15 = arith.addf %12, %14 : vector<16x128xf32>
      %cst_13 = arith.constant 0.000000e+00 : f32
      %16 = vector.broadcast %cst_13 : f32 to vector<16x128xf32>
      %17 = arith.maximumf %15, %16 : vector<16x128xf32>
      %18 = arith.truncf %17 : vector<16x128xf32> to vector<16x128xbf16>
      %c0_14 = arith.constant 0 : index
      %c0_15 = arith.constant 0 : index
      %19 = vector.load %arg6[%c0_14, %c0_15] : memref<16x128xbf16, #tpu.memory_space<vmem>>, vector<16x128xbf16>
      tpu.vector_store %arg6[%c0_14, %c0_15], %18 {strides = array<i32>} : memref<16x128xbf16, #tpu.memory_space<vmem>>, vector<16x128xbf16>,
    } else {
    }
    return
  }
  func.func @transform_0(%arg0: i32, %arg1: i32, %arg2: i32) -> (i32, i32) {
    %c0_i32 = arith.constant 0 : i32
    return %arg0, %arg2 : i32, i32
  }
  func.func @transform_1(%arg0: i32, %arg1: i32, %arg2: i32) -> (i32, i32) {
    %c0_i32 = arith.constant 0 : i32
    return %arg2, %arg1 : i32, i32
  }
  func.func @transform_2(%arg0: i32, %arg1: i32, %arg2: i32) -> (i32, i32) {
    %c0_i32 = arith.constant 0 : i32
    %c0_i32_0 = arith.constant 0 : i32
    return %c0_i32, %arg1 : i32, i32
  }
  func.func @transform_3(%arg0: i32, %arg1: i32, %arg2: i32) -> (i32, i32) {
    %c0_i32 = arith.constant 0 : i32
    return %arg0, %arg1 : i32, i32
  }
}

module attributes {stable_mosaic.version = 11 : i64} {
  func.func @_head_kernel(%arg0: i32, %arg1: memref<1x4x128xbf16, #tpu.memory_space<vmem>>, %arg2: memref<1x256x64xbf16, #tpu.memory_space<vmem>>, %arg3: memref<64x7xbf16, #tpu.memory_space<vmem>>, %arg4: memref<1x7xf32, #tpu.memory_space<vmem>>, %arg5: memref<256x1xf32, #tpu.memory_space<vmem>>, %arg6: memref<7x256xf32, #tpu.memory_space<vmem>>, %arg7: memref<7x256xf32, #tpu.memory_space<vmem>>, %arg8: memref<1x256xf32, #tpu.memory_space<vmem>>, %arg9: memref<1x1x128xf32, #tpu.memory_space<vmem>>, %arg10: memref<1x1x256xf32, #tpu.memory_space<vmem>>) attributes {dimension_semantics = [#tpu.dimension_semantics<parallel>], iteration_bounds = array<i64: 2>, scalar_prefetch = 0 : i64, scratch_operands = 0 : i64, tpu.core_type = #tpu.core_type<tc>, window_params = [{transform_indices = @transform_0, window_bounds = array<i64: 1, 4, 128>}, {transform_indices = @transform_1, window_bounds = array<i64: 1, 256, 64>}, {pipeline_mode = #tpu.pipeline_mode<synchronous>, transform_indices = @transform_2, window_bounds = array<i64: 64, 7>}, {pipeline_mode = #tpu.pipeline_mode<synchronous>, transform_indices = @transform_3, window_bounds = array<i64: 1, 7>}, {pipeline_mode = #tpu.pipeline_mode<synchronous>, transform_indices = @transform_4, window_bounds = array<i64: 256, 1>}, {pipeline_mode = #tpu.pipeline_mode<synchronous>, transform_indices = @transform_5, window_bounds = array<i64: 7, 256>}, {pipeline_mode = #tpu.pipeline_mode<synchronous>, transform_indices = @transform_6, window_bounds = array<i64: 7, 256>}, {pipeline_mode = #tpu.pipeline_mode<synchronous>, transform_indices = @transform_7, window_bounds = array<i64: 1, 256>}, {transform_indices = @transform_8, window_bounds = array<i64: 1, 1, 128>}, {transform_indices = @transform_9, window_bounds = array<i64: 1, 1, 256>}]} {
    %c0 = arith.constant 0 : index
    %c0_0 = arith.constant 0 : index
    %c0_1 = arith.constant 0 : index
    %0 = vector.load %arg1[%c0, %c0_0, %c0_1] : memref<1x4x128xbf16, #tpu.memory_space<vmem>>, vector<1x4x128xbf16>
    %1 = vector.shape_cast %0 : vector<1x4x128xbf16> to vector<4x128xbf16>
    %2 = arith.extf %1 : vector<4x128xbf16> to vector<4x128xf32>
    %cst = arith.constant dense<0.000000e+00> : vector<128xf32>
    %3 = vector.multi_reduction <add>, %2, %cst [0] : vector<4x128xf32> to vector<128xf32>
    %4 = vector.shape_cast %3 : vector<128xf32> to vector<1x128xf32>
    %cst_2 = arith.constant 4.000000e+00 : f32
    %5 = vector.broadcast %cst_2 : f32 to vector<1x128xf32>
    %6 = arith.divf %4, %5 : vector<1x128xf32>
    %c0_3 = arith.constant 0 : index
    %c0_4 = arith.constant 0 : index
    %c0_5 = arith.constant 0 : index
    %7 = vector.load %arg9[%c0_3, %c0_4, %c0_5] : memref<1x1x128xf32, #tpu.memory_space<vmem>>, vector<1x1x128xf32>
    %8 = vector.shape_cast %7 : vector<1x1x128xf32> to vector<1x128xf32>
    %9 = vector.shape_cast %6 : vector<1x128xf32> to vector<1x1x128xf32>
    tpu.vector_store %arg9[%c0_3, %c0_4, %c0_5], %9 {strides = array<i32>} : memref<1x1x128xf32, #tpu.memory_space<vmem>>, vector<1x1x128xf32>,
    %c0_6 = arith.constant 0 : index
    %c0_7 = arith.constant 0 : index
    %c0_8 = arith.constant 0 : index
    %10 = vector.load %arg2[%c0_6, %c0_7, %c0_8] : memref<1x256x64xbf16, #tpu.memory_space<vmem>>, vector<1x256x64xbf16>
    %11 = vector.shape_cast %10 : vector<1x256x64xbf16> to vector<256x64xbf16>
    %c0_9 = arith.constant 0 : index
    %c0_10 = arith.constant 0 : index
    %12 = vector.load %arg3[%c0_9, %c0_10] : memref<64x7xbf16, #tpu.memory_space<vmem>>, vector<64x7xbf16>
    %cst_11 = arith.constant dense<0.000000e+00> : vector<256x7xf32>
    %13 = tpu.matmul %11, %12, %cst_11 {dimension_numbers = #tpu.dot_dimension_numbers<[1], [0], [0], [1], [0, 0, 1, 1], [], []>} : vector<256x64xbf16>, vector<64x7xbf16>, vector<256x7xf32> -> vector<256x7xf32>
    %c0_12 = arith.constant 0 : index
    %c0_13 = arith.constant 0 : index
    %14 = vector.load %arg4[%c0_12, %c0_13] : memref<1x7xf32, #tpu.memory_space<vmem>>, vector<1x7xf32>
    %15 = vector.broadcast %14 : vector<1x7xf32> to vector<256x7xf32>
    %16 = arith.addf %13, %15 : vector<256x7xf32>
    %cst_14 = arith.constant 1.000000e+03 : f32
    %17 = vector.broadcast %cst_14 : f32 to vector<256x7xf32>
    %18 = arith.mulf %16, %17 : vector<256x7xf32>
    %cst_15 = arith.constant dense<0xFF800000> : vector<7xf32>
    %19 = vector.multi_reduction <maximumf>, %18, %cst_15 [0] : vector<256x7xf32> to vector<7xf32>
    %20 = vector.shape_cast %19 : vector<7xf32> to vector<1x7xf32>
    %21 = vector.broadcast %20 : vector<1x7xf32> to vector<256x7xf32>
    %22 = arith.subf %18, %21 : vector<256x7xf32>
    %23 = math.exp %22 : vector<256x7xf32>
    %cst_16 = arith.constant dense<0.000000e+00> : vector<7xf32>
    %24 = vector.multi_reduction <add>, %23, %cst_16 [0] : vector<256x7xf32> to vector<7xf32>
    %25 = vector.shape_cast %24 : vector<7xf32> to vector<1x7xf32>
    %c0_17 = arith.constant 0 : index
    %c0_18 = arith.constant 0 : index
    %26 = vector.load %arg5[%c0_17, %c0_18] : memref<256x1xf32, #tpu.memory_space<vmem>>, vector<256x1xf32>
    %27 = vector.broadcast %26 : vector<256x1xf32> to vector<256x7xf32>
    %28 = arith.mulf %23, %27 : vector<256x7xf32>
    %cst_19 = arith.constant dense<0.000000e+00> : vector<7xf32>
    %29 = vector.multi_reduction <add>, %28, %cst_19 [0] : vector<256x7xf32> to vector<7xf32>
    %30 = vector.shape_cast %29 : vector<7xf32> to vector<1x7xf32>
    %31 = arith.divf %30, %25 : vector<1x7xf32>
    %32 = math.floor %31 : vector<1x7xf32>
    %cst_20 = arith.constant 1.600000e+01 : f32
    %33 = vector.broadcast %cst_20 : f32 to vector<1x7xf32>
    %34 = arith.remf %32, %33 : vector<1x7xf32>
    %cst_21 = arith.constant 0.000000e+00 : f32
    %35 = vector.broadcast %cst_21 : f32 to vector<1x7xf32>
    %36 = arith.cmpf one, %34, %35 : vector<1x7xf32>
    %cst_22 = arith.constant 0.000000e+00 : f32
    %37 = vector.broadcast %cst_22 : f32 to vector<1x7xf32>
    %38 = arith.cmpf olt, %34, %37 : vector<1x7xf32>
    %cst_23 = arith.constant 0.000000e+00 : f32
    %39 = arith.cmpf olt, %cst_20, %cst_23 : f32
    %40 = vector.broadcast %39 : i1 to vector<1x7xi1>
    %41 = vector.broadcast %40 : vector<1x7xi1> to vector<1x7xi1>
    %42 = arith.xori %38, %41 : vector<1x7xi1>
    %43 = arith.andi %42, %36 : vector<1x7xi1>
    %44 = vector.broadcast %cst_20 : f32 to vector<1x7xf32>
    %45 = arith.addf %34, %44 : vector<1x7xf32>
    %46 = arith.select %43, %45, %34 : vector<1x7xi1>, vector<1x7xf32>
    %cst_24 = arith.constant 1.600000e+01 : f32
    %47 = vector.broadcast %cst_24 : f32 to vector<1x7xf32>
    %48 = arith.divf %32, %47 : vector<1x7xf32>
    %49 = math.floor %48 : vector<1x7xf32>
    %cst_25 = arith.constant 1.600000e+01 : f32
    %50 = vector.broadcast %cst_25 : f32 to vector<1x7xf32>
    %51 = arith.remf %49, %50 : vector<1x7xf32>
    %cst_26 = arith.constant 0.000000e+00 : f32
    %52 = vector.broadcast %cst_26 : f32 to vector<1x7xf32>
    %53 = arith.cmpf one, %51, %52 : vector<1x7xf32>
    %cst_27 = arith.constant 0.000000e+00 : f32
    %54 = vector.broadcast %cst_27 : f32 to vector<1x7xf32>
    %55 = arith.cmpf olt, %51, %54 : vector<1x7xf32>
    %cst_28 = arith.constant 0.000000e+00 : f32
    %56 = arith.cmpf olt, %cst_25, %cst_28 : f32
    %57 = vector.broadcast %56 : i1 to vector<1x7xi1>
    %58 = vector.broadcast %57 : vector<1x7xi1> to vector<1x7xi1>
    %59 = arith.xori %55, %58 : vector<1x7xi1>
    %60 = arith.andi %59, %53 : vector<1x7xi1>
    %61 = vector.broadcast %cst_25 : f32 to vector<1x7xf32>
    %62 = arith.addf %51, %61 : vector<1x7xf32>
    %63 = arith.select %60, %62, %51 : vector<1x7xi1>, vector<1x7xf32>
    %c0_29 = arith.constant 0 : index
    %c0_30 = arith.constant 0 : index
    %64 = vector.load %arg6[%c0_29, %c0_30] : memref<7x256xf32, #tpu.memory_space<vmem>>, vector<7x256xf32>
    %cst_31 = arith.constant dense<0.000000e+00> : vector<1x256xf32>
    %65 = tpu.matmul %63, %64, %cst_31 {dimension_numbers = #tpu.dot_dimension_numbers<[1], [0], [0], [1], [0, 0, 1, 1], [], []>} : vector<1x7xf32>, vector<7x256xf32>, vector<1x256xf32> -> vector<1x256xf32>
    %c0_32 = arith.constant 0 : index
    %c0_33 = arith.constant 0 : index
    %66 = vector.load %arg7[%c0_32, %c0_33] : memref<7x256xf32, #tpu.memory_space<vmem>>, vector<7x256xf32>
    %cst_34 = arith.constant dense<0.000000e+00> : vector<1x256xf32>
    %67 = tpu.matmul %46, %66, %cst_34 {dimension_numbers = #tpu.dot_dimension_numbers<[1], [0], [0], [1], [0, 0, 1, 1], [], []>} : vector<1x7xf32>, vector<7x256xf32>, vector<1x256xf32> -> vector<1x256xf32>
    %68 = arith.addf %65, %67 : vector<1x256xf32>
    %c0_35 = arith.constant 0 : index
    %c0_36 = arith.constant 0 : index
    %69 = vector.load %arg8[%c0_35, %c0_36] : memref<1x256xf32, #tpu.memory_space<vmem>>, vector<1x256xf32>
    %70 = arith.addf %68, %69 : vector<1x256xf32>
    %cst_37 = arith.constant 0.000000e+00 : f32
    %71 = vector.broadcast %cst_37 : f32 to vector<1x256xf32>
    %72 = arith.maximumf %70, %71 : vector<1x256xf32>
    %c0_38 = arith.constant 0 : index
    %c0_39 = arith.constant 0 : index
    %c0_40 = arith.constant 0 : index
    %73 = vector.load %arg10[%c0_38, %c0_39, %c0_40] : memref<1x1x256xf32, #tpu.memory_space<vmem>>, vector<1x1x256xf32>
    %74 = vector.shape_cast %73 : vector<1x1x256xf32> to vector<1x256xf32>
    %75 = vector.shape_cast %72 : vector<1x256xf32> to vector<1x1x256xf32>
    tpu.vector_store %arg10[%c0_38, %c0_39, %c0_40], %75 {strides = array<i32>} : memref<1x1x256xf32, #tpu.memory_space<vmem>>, vector<1x1x256xf32>,
    return
  }
  func.func @transform_0(%arg0: i32) -> (i32, i32, i32) {
    %c0_i32 = arith.constant 0 : i32
    %c0_i32_0 = arith.constant 0 : i32
    %c0_i32_1 = arith.constant 0 : i32
    return %arg0, %c0_i32, %c0_i32_0 : i32, i32, i32
  }
  func.func @transform_1(%arg0: i32) -> (i32, i32, i32) {
    %c0_i32 = arith.constant 0 : i32
    %c0_i32_0 = arith.constant 0 : i32
    %c0_i32_1 = arith.constant 0 : i32
    return %arg0, %c0_i32, %c0_i32_0 : i32, i32, i32
  }
  func.func @transform_2(%arg0: i32) -> (i32, i32) {
    %c0_i32 = arith.constant 0 : i32
    %c0_i32_0 = arith.constant 0 : i32
    %c0_i32_1 = arith.constant 0 : i32
    return %c0_i32, %c0_i32_0 : i32, i32
  }
  func.func @transform_3(%arg0: i32) -> (i32, i32) {
    %c0_i32 = arith.constant 0 : i32
    %c0_i32_0 = arith.constant 0 : i32
    %c0_i32_1 = arith.constant 0 : i32
    return %c0_i32, %c0_i32_0 : i32, i32
  }
  func.func @transform_4(%arg0: i32) -> (i32, i32) {
    %c0_i32 = arith.constant 0 : i32
    %c0_i32_0 = arith.constant 0 : i32
    %c0_i32_1 = arith.constant 0 : i32
    return %c0_i32, %c0_i32_0 : i32, i32
  }
  func.func @transform_5(%arg0: i32) -> (i32, i32) {
    %c0_i32 = arith.constant 0 : i32
    %c0_i32_0 = arith.constant 0 : i32
    %c0_i32_1 = arith.constant 0 : i32
    return %c0_i32, %c0_i32_0 : i32, i32
  }
  func.func @transform_6(%arg0: i32) -> (i32, i32) {
    %c0_i32 = arith.constant 0 : i32
    %c0_i32_0 = arith.constant 0 : i32
    %c0_i32_1 = arith.constant 0 : i32
    return %c0_i32, %c0_i32_0 : i32, i32
  }
  func.func @transform_7(%arg0: i32) -> (i32, i32) {
    %c0_i32 = arith.constant 0 : i32
    %c0_i32_0 = arith.constant 0 : i32
    %c0_i32_1 = arith.constant 0 : i32
    return %c0_i32, %c0_i32_0 : i32, i32
  }
  func.func @transform_8(%arg0: i32) -> (i32, i32, i32) {
    %c0_i32 = arith.constant 0 : i32
    %c0_i32_0 = arith.constant 0 : i32
    %c0_i32_1 = arith.constant 0 : i32
    return %arg0, %c0_i32, %c0_i32_0 : i32, i32, i32
  }
  func.func @transform_9(%arg0: i32) -> (i32, i32, i32) {
    %c0_i32 = arith.constant 0 : i32
    %c0_i32_0 = arith.constant 0 : i32
    %c0_i32_1 = arith.constant 0 : i32
    return %arg0, %c0_i32, %c0_i32_0 : i32, i32, i32
  }
}

</mosaic_0001>

<llo_original>
// kernel: smc_forward.6
$region0: #{smc_forward.6}
  #allocation0 [shape = 'u32[]', space=smem, size = 0x4, offset = 0x4, fixed_abs, tag = 'smem constant byte address 0x4 - core index']
  #allocation1 [shape = 'u32[144,128]{1,0:T(1,128)}', space=vmem, size = 0x12000, scoped, tag = 'internal scratch']
  #allocation2 [shape = 'f32[128,128]{1,0:T(8,128)}', space=vmem, size = 0x10000, scoped, tag = 'scratch operand']
  %s0 = inlined_call_operand.vmem [shape: bf16[128,128], index: 0, kind: input, shape index: {}]
  %s1 = inlined_call_operand.vmem [shape: bf16[128,128], index: 1, kind: input, shape index: {}]
  %s2 = inlined_call_operand.vmem [shape: f32[1,128], index: 2, kind: input, shape index: {}]
  %s3 = inlined_call_operand.vmem [shape: bf16[128,128], index: 3, kind: output, shape index: {}]
  %s4 = sld [smem:[#allocation0]]
  $region30: #{smc_forward.6} parent=0
    _
  %s6 = ssub.s32 1, %s4
  %s7 = scalar_select 0, %s6, %s4
  // Predicated region
  $region2: #{smc_forward.6} parent=0 // pred_check
    _
  $region3: #{smc_forward.6} parent=0 // pred_check_branch
    %9 = sbr.rel (0) target = $region5
  $region4: #{smc_forward.6} parent=0 // pred_region
    _
  $region5: #{smc_forward.6} parent=0 // pred_fallthru
    _
  // Predicated region
  $region6: #{smc_forward.6} parent=0 // pred_check
    _
  $region7: #{smc_forward.6} parent=0 // pred_check_branch
    %11 = sbr.rel (0) target = $region9
  $region8: #{smc_forward.6} parent=0 // pred_region
    _
  $region9: #{smc_forward.6} parent=0 // pred_fallthru
    _
  // Predicated region
  $region10: #{smc_forward.6} parent=0 // pred_check
    _
  $region11: #{smc_forward.6} parent=0 // pred_check_branch
    %13 = sbr.rel (0) target = $region13
  $region12: #{smc_forward.6} parent=0 // pred_region
    _
  $region13: #{smc_forward.6} parent=0 // pred_fallthru
    _
  %p15 = scmp.eq.s32.totalorder 0, 0
  // Predicated region
  $region14: #{smc_forward.6} parent=0 // pred_check
    %p16 = pneg %p15
  $region15: #{smc_forward.6} parent=0 // pred_check_branch
    %18 = sbr.rel (%p16) target = $region17
  $region16: #{smc_forward.6} parent=0 // pred_region
    %19 = vst [vmem:[#allocation2] sm:$0xff] 0.0
    %20 = vst [vmem:[#allocation2 + $0x8] sm:$0xff] 0.0
    %21 = vst [vmem:[#allocation2 + $0x10] sm:$0xff] 0.0
    %22 = vst [vmem:[#allocation2 + $0x18] sm:$0xff] 0.0
    %23 = vst [vmem:[#allocation2 + $0x20] sm:$0xff] 0.0
    %24 = vst [vmem:[#allocation2 + $0x28] sm:$0xff] 0.0
    %25 = vst [vmem:[#allocation2 + $0x30] sm:$0xff] 0.0
    %26 = vst [vmem:[#allocation2 + $0x38] sm:$0xff] 0.0
    %27 = vst [vmem:[#allocation2 + $0x40] sm:$0xff] 0.0
    %28 = vst [vmem:[#allocation2 + $0x48] sm:$0xff] 0.0
    %29 = vst [vmem:[#allocation2 + $0x50] sm:$0xff] 0.0
    %30 = vst [vmem:[#allocation2 + $0x58] sm:$0xff] 0.0
    %31 = vst [vmem:[#allocation2 + $0x60] sm:$0xff] 0.0
    %32 = vst [vmem:[#allocation2 + $0x68] sm:$0xff] 0.0
    %33 = vst [vmem:[#allocation2 + $0x70] sm:$0xff] 0.0
    %34 = vst [vmem:[#allocation2 + $0x78] sm:$0xff] 0.0
  $region17: #{smc_forward.6} parent=0 // pred_fallthru
    _
  %v35 = vld [vmem:[#allocation2] sm:$0xff]
  %v36 = vld [vmem:[#allocation2 + $0x8] sm:$0xff]
  %v37 = vld [vmem:[#allocation2 + $0x10] sm:$0xff]
  %v38 = vld [vmem:[#allocation2 + $0x18] sm:$0xff]
  %v39 = vld [vmem:[#allocation2 + $0x20] sm:$0xff]
  %v40 = vld [vmem:[#allocation2 + $0x28] sm:$0xff]
  %v41 = vld [vmem:[#allocation2 + $0x30] sm:$0xff]
  %v42 = vld [vmem:[#allocation2 + $0x38] sm:$0xff]
  %v43 = vld [vmem:[#allocation2 + $0x40] sm:$0xff]
  %v44 = vld [vmem:[#allocation2 + $0x48] sm:$0xff]
  %v45 = vld [vmem:[#allocation2 + $0x50] sm:$0xff]
  %v46 = vld [vmem:[#allocation2 + $0x58] sm:$0xff]
  %v47 = vld [vmem:[#allocation2 + $0x60] sm:$0xff]
  %v48 = vld [vmem:[#allocation2 + $0x68] sm:$0xff]
  %v49 = vld [vmem:[#allocation2 + $0x70] sm:$0xff]
  %v50 = vld [vmem:[#allocation2 + $0x78] sm:$0xff]
  %v51 = vld [vmem:[%s0] sm:$0xf]
  %v52 = vld [vmem:[%s0 + $0x4] sm:$0xf]
  %v53 = vld [vmem:[%s0 + $0x8] sm:$0xf]
  %v54 = vld [vmem:[%s0 + $0xc] sm:$0xf]
  %v55 = vld [vmem:[%s0 + $0x10] sm:$0xf]
  %v56 = vld [vmem:[%s0 + $0x14] sm:$0xf]
  %v57 = vld [vmem:[%s0 + $0x18] sm:$0xf]
  %v58 = vld [vmem:[%s0 + $0x1c] sm:$0xf]
  %v59 = vld [vmem:[%s0 + $0x20] sm:$0xf]
  %v60 = vld [vmem:[%s0 + $0x24] sm:$0xf]
  %v61 = vld [vmem:[%s0 + $0x28] sm:$0xf]
  %v62 = vld [vmem:[%s0 + $0x2c] sm:$0xf]
  %v63 = vld [vmem:[%s0 + $0x30] sm:$0xf]
  %v64 = vld [vmem:[%s0 + $0x34] sm:$0xf]
  %v65 = vld [vmem:[%s0 + $0x38] sm:$0xf]
  %v66 = vld [vmem:[%s0 + $0x3c] sm:$0xf]
  %v67 = vld [vmem:[%s1] sm:$0xf]
  %v68 = vld [vmem:[%s1 + $0x4] sm:$0xf]
  %v69 = vld [vmem:[%s1 + $0x8] sm:$0xf]
  %v70 = vld [vmem:[%s1 + $0xc] sm:$0xf]
  %v71 = vld [vmem:[%s1 + $0x10] sm:$0xf]
  %v72 = vld [vmem:[%s1 + $0x14] sm:$0xf]
  %v73 = vld [vmem:[%s1 + $0x18] sm:$0xf]
  %v74 = vld [vmem:[%s1 + $0x1c] sm:$0xf]
  %v75 = vld [vmem:[%s1 + $0x20] sm:$0xf]
  %v76 = vld [vmem:[%s1 + $0x24] sm:$0xf]
  %v77 = vld [vmem:[%s1 + $0x28] sm:$0xf]
  %v78 = vld [vmem:[%s1 + $0x2c] sm:$0xf]
  %v79 = vld [vmem:[%s1 + $0x30] sm:$0xf]
  %v80 = vld [vmem:[%s1 + $0x34] sm:$0xf]
  %v81 = vld [vmem:[%s1 + $0x38] sm:$0xf]
  %v82 = vld [vmem:[%s1 + $0x3c] sm:$0xf]
  %v99 = vunpack.c.l.b16 %v51
  %v100 = vunpack.c.l.b16 %v52
  %v101 = vunpack.c.l.b16 %v53
  %v102 = vunpack.c.l.b16 %v54
  %v103 = vunpack.c.l.b16 %v55
  %v104 = vunpack.c.l.b16 %v56
  %v105 = vunpack.c.l.b16 %v57
  %v106 = vunpack.c.l.b16 %v58
  %v107 = vunpack.c.l.b16 %v59
  %v108 = vunpack.c.l.b16 %v60
  %v109 = vunpack.c.l.b16 %v61
  %v110 = vunpack.c.l.b16 %v62
  %v111 = vunpack.c.l.b16 %v63
  %v112 = vunpack.c.l.b16 %v64
  %v113 = vunpack.c.l.b16 %v65
  %v114 = vunpack.c.l.b16 %v66
  %v115 = vpack.c.b16 %v100, %v99
  %v116 = vpack.c.b16 %v102, %v101
  %v117 = vpack.c.b16 %v104, %v103
  %v118 = vpack.c.b16 %v106, %v105
  %v119 = vpack.c.b16 %v108, %v107
  %v120 = vpack.c.b16 %v110, %v109
  %v121 = vpack.c.b16 %v112, %v111
  %v122 = vpack.c.b16 %v114, %v113
  %v147 = vunpack.c.l.b16 %v67
  %v148 = vunpack.c.l.b16 %v68
  %v149 = vunpack.c.l.b16 %v69
  %v150 = vunpack.c.l.b16 %v70
  %v151 = vunpack.c.l.b16 %v71
  %v152 = vunpack.c.l.b16 %v72
  %v153 = vunpack.c.l.b16 %v73
  %v154 = vunpack.c.l.b16 %v74
  %v155 = vunpack.c.l.b16 %v75
  %v156 = vunpack.c.l.b16 %v76
  %v157 = vunpack.c.l.b16 %v77
  %v158 = vunpack.c.l.b16 %v78
  %v159 = vunpack.c.l.b16 %v79
  %v160 = vunpack.c.l.b16 %v80
  %v161 = vunpack.c.l.b16 %v81
  %v162 = vunpack.c.l.b16 %v82
  %v163 = vpack.c.b16 %v148, %v147
  %v164 = vpack.c.b16 %v150, %v149
  %v165 = vpack.c.b16 %v152, %v151
  %v166 = vpack.c.b16 %v154, %v153
  %v167 = vpack.c.b16 %v156, %v155
  %v168 = vpack.c.b16 %v158, %v157
  %v169 = vpack.c.b16 %v160, %v159
  %v170 = vpack.c.b16 %v162, %v161
  %179 = vmatprep.subr.bf16.mxu0 0
  %180 = vmatpush1.bf16.msra.mxu0 %v163
  %181 = vmatprep.subr.bf16.mxu0 0
  %182 = vmatpush1.bf16.msra.mxu0 %v164
  %183 = vmatprep.subr.bf16.mxu0 0
  %184 = vmatpush1.bf16.msra.mxu0 %v165
  %185 = vmatprep.subr.bf16.mxu0 0
  %186 = vmatpush1.bf16.msra.mxu0 %v166
  %187 = vmatprep.subr.bf16.mxu0 0
  %188 = vmatpush1.bf16.msra.mxu0 %v167
  %189 = vmatprep.subr.bf16.mxu0 0
  %190 = vmatpush1.bf16.msra.mxu0 %v168
  %191 = vmatprep.subr.bf16.mxu0 0
  %192 = vmatpush1.bf16.msra.mxu0 %v169
  %193 = vmatprep.subr.bf16.mxu0 0
  %194 = vmatpush1.bf16.msra.mxu0 %v170
  %195 = vmatprep.subr.bf16.mxu0 0
  %196 = vmatpush1.bf16.msra.mxu0 0
  %197 = vmatprep.subr.bf16.mxu0 0
  %198 = vmatpush1.bf16.msra.mxu0 0
  %199 = vmatprep.subr.bf16.mxu0 0
  %200 = vmatpush1.bf16.msra.mxu0 0
  %201 = vmatprep.subr.bf16.mxu0 0
  %202 = vmatpush1.bf16.msra.mxu0 0
  %203 = vmatprep.subr.bf16.mxu0 0
  %204 = vmatpush1.bf16.msra.mxu0 0
  %205 = vmatprep.subr.bf16.mxu0 0
  %206 = vmatpush1.bf16.msra.mxu0 0
  %207 = vmatprep.subr.bf16.mxu0 0
  %208 = vmatpush1.bf16.msra.mxu0 0
  %209 = vmatprep.subr.bf16.mxu0 0
  %210 = vmatpush1.bf16.msra.mxu0 0
  %211 = vmatprep.mubr.bf16.mxu0 0
  %212 = vmatmul.mubr.bf16.gmra.mrb[0].mxu0 %v115
  %v213 = vpop.f32.mrb[0].mxu0
  %v214 = vadd.f32 0.0, %v213
  %v215 = vpop.f32.mrb[0].mxu0
  %v216 = vpop.f32.mrb[0].mxu0
  %v217 = vadd.f32 0.0, %v216
  %v218 = vpop.f32.mrb[0].mxu0
  %219 = vmatprep.mubr.bf16.mxu0 0
  %220 = vmatmul.mubr.bf16.gmra.mrb[0].mxu0 %v116
  %v221 = vpop.f32.mrb[0].mxu0
  %v222 = vadd.f32 0.0, %v221
  %v223 = vpop.f32.mrb[0].mxu0
  %v224 = vpop.f32.mrb[0].mxu0
  %v225 = vadd.f32 0.0, %v224
  %v226 = vpop.f32.mrb[0].mxu0
  %227 = vmatprep.mubr.bf16.mxu0 0
  %228 = vmatmul.mubr.bf16.gmra.mrb[0].mxu0 %v117
  %v229 = vpop.f32.mrb[0].mxu0
  %v230 = vadd.f32 0.0, %v229
  %v231 = vpop.f32.mrb[0].mxu0
  %v232 = vpop.f32.mrb[0].mxu0
  %v233 = vadd.f32 0.0, %v232
  %v234 = vpop.f32.mrb[0].mxu0
  %235 = vmatprep.mubr.bf16.mxu0 0
  %236 = vmatmul.mubr.bf16.gmra.mrb[0].mxu0 %v118
  %v237 = vpop.f32.mrb[0].mxu0
  %v238 = vadd.f32 0.0, %v237
  %v239 = vpop.f32.mrb[0].mxu0
  %v240 = vpop.f32.mrb[0].mxu0
  %v241 = vadd.f32 0.0, %v240
  %v242 = vpop.f32.mrb[0].mxu0
  %243 = vmatprep.mubr.bf16.mxu0 0
  %244 = vmatmul.mubr.bf16.gmra.mrb[0].mxu0 %v119
  %v245 = vpop.f32.mrb[0].mxu0
  %v246 = vadd.f32 0.0, %v245
  %v247 = vpop.f32.mrb[0].mxu0
  %v248 = vpop.f32.mrb[0].mxu0
  %v249 = vadd.f32 0.0, %v248
  %v250 = vpop.f32.mrb[0].mxu0
  %251 = vmatprep.mubr.bf16.mxu0 0
  %252 = vmatmul.mubr.bf16.gmra.mrb[0].mxu0 %v120
  %v253 = vpop.f32.mrb[0].mxu0
  %v254 = vadd.f32 0.0, %v253
  %v255 = vpop.f32.mrb[0].mxu0
  %v256 = vpop.f32.mrb[0].mxu0
  %v257 = vadd.f32 0.0, %v256
  %v258 = vpop.f32.mrb[0].mxu0
  %259 = vmatprep.mubr.bf16.mxu0 0
  %260 = vmatmul.mubr.bf16.gmra.mrb[0].mxu0 %v121
  %v261 = vpop.f32.mrb[0].mxu0
  %v262 = vadd.f32 0.0, %v261
  %v263 = vpop.f32.mrb[0].mxu0
  %v264 = vpop.f32.mrb[0].mxu0
  %v265 = vadd.f32 0.0, %v264
  %v266 = vpop.f32.mrb[0].mxu0
  %267 = vmatprep.mubr.bf16.mxu0 0
  %268 = vmatmul.mubr.bf16.gmra.mrb[0].mxu0 %v122
  %v269 = vpop.f32.mrb[0].mxu0
  %v270 = vadd.f32 0.0, %v269
  %v271 = vpop.f32.mrb[0].mxu0
  %v272 = vpop.f32.mrb[0].mxu0
  %v273 = vadd.f32 0.0, %v272
  %v274 = vpop.f32.mrb[0].mxu0
  %275 = vdwg.mxu0
  %v276 = vadd.f32 %v35, %v214
  %v277 = vadd.f32 %v36, %v217
  %v278 = vadd.f32 %v37, %v222
  %v279 = vadd.f32 %v38, %v225
  %v280 = vadd.f32 %v39, %v230
  %v281 = vadd.f32 %v40, %v233
  %v282 = vadd.f32 %v41, %v238
  %v283 = vadd.f32 %v42, %v241
  %v284 = vadd.f32 %v43, %v246
  %v285 = vadd.f32 %v44, %v249
  %v286 = vadd.f32 %v45, %v254
  %v287 = vadd.f32 %v46, %v257
  %v288 = vadd.f32 %v47, %v262
  %v289 = vadd.f32 %v48, %v265
  %v290 = vadd.f32 %v49, %v270
  %v291 = vadd.f32 %v50, %v273
  %292 = vst [vmem:[#allocation2] sm:$0xff] %v276
  %293 = vst [vmem:[#allocation2 + $0x8] sm:$0xff] %v277
  %294 = vst [vmem:[#allocation2 + $0x10] sm:$0xff] %v278
  %295 = vst [vmem:[#allocation2 + $0x18] sm:$0xff] %v279
  %296 = vst [vmem:[#allocation2 + $0x20] sm:$0xff] %v280
  %297 = vst [vmem:[#allocation2 + $0x28] sm:$0xff] %v281
  %298 = vst [vmem:[#allocation2 + $0x30] sm:$0xff] %v282
  %299 = vst [vmem:[#allocation2 + $0x38] sm:$0xff] %v283
  %300 = vst [vmem:[#allocation2 + $0x40] sm:$0xff] %v284
  %301 = vst [vmem:[#allocation2 + $0x48] sm:$0xff] %v285
  %302 = vst [vmem:[#allocation2 + $0x50] sm:$0xff] %v286
  %303 = vst [vmem:[#allocation2 + $0x58] sm:$0xff] %v287
  %304 = vst [vmem:[#allocation2 + $0x60] sm:$0xff] %v288
  %305 = vst [vmem:[#allocation2 + $0x68] sm:$0xff] %v289
  %306 = vst [vmem:[#allocation2 + $0x70] sm:$0xff] %v290
  %307 = vst [vmem:[#allocation2 + $0x78] sm:$0xff] %v291
  // Predicated region
  $region18: #{smc_forward.6} parent=0 // pred_check
    %p308 = pneg %p15
  $region19: #{smc_forward.6} parent=0 // pred_check_branch
    %310 = sbr.rel (%p308) target = $region21
  $region20: #{smc_forward.6} parent=0 // pred_region
    %v311 = vld [vmem:[#allocation2] sm:$0xff]
    %v312 = vld [vmem:[#allocation2 + $0x8] sm:$0xff]
    %v313 = vld [vmem:[#allocation2 + $0x10] sm:$0xff]
    %v314 = vld [vmem:[#allocation2 + $0x18] sm:$0xff]
    %v315 = vld [vmem:[#allocation2 + $0x20] sm:$0xff]
    %v316 = vld [vmem:[#allocation2 + $0x28] sm:$0xff]
    %v317 = vld [vmem:[#allocation2 + $0x30] sm:$0xff]
    %v318 = vld [vmem:[#allocation2 + $0x38] sm:$0xff]
    %v319 = vld [vmem:[#allocation2 + $0x40] sm:$0xff]
    %v320 = vld [vmem:[#allocation2 + $0x48] sm:$0xff]
    %v321 = vld [vmem:[#allocation2 + $0x50] sm:$0xff]
    %v322 = vld [vmem:[#allocation2 + $0x58] sm:$0xff]
    %v323 = vld [vmem:[#allocation2 + $0x60] sm:$0xff]
    %v324 = vld [vmem:[#allocation2 + $0x68] sm:$0xff]
    %v325 = vld [vmem:[#allocation2 + $0x70] sm:$0xff]
    %v326 = vld [vmem:[#allocation2 + $0x78] sm:$0xff]
    %v327 = vld [vmem:[%s2] sm:$0x1]
    %v329 = vlaneseq
    %v330 = vshrl.u32 %v329, 7
    %v331 = vsub.s32 0, %v330
    %v332 = vrot.slane %v327, %v331
    %v334 = vadd.f32 %v311, %v332
    %v335 = vadd.f32 %v312, %v332
    %v336 = vadd.f32 %v313, %v332
    %v337 = vadd.f32 %v314, %v332
    %v338 = vadd.f32 %v315, %v332
    %v339 = vadd.f32 %v316, %v332
    %v340 = vadd.f32 %v317, %v332
    %v341 = vadd.f32 %v318, %v332
    %v342 = vadd.f32 %v319, %v332
    %v343 = vadd.f32 %v320, %v332
    %v344 = vadd.f32 %v321, %v332
    %v345 = vadd.f32 %v322, %v332
    %v346 = vadd.f32 %v323, %v332
    %v347 = vadd.f32 %v324, %v332
    %v348 = vadd.f32 %v325, %v332
    %v349 = vadd.f32 %v326, %v332
    %v350 = vmax.f32 %v334, 0.0
    %v351 = vmax.f32 %v335, 0.0
    %v352 = vmax.f32 %v336, 0.0
    %v353 = vmax.f32 %v337, 0.0
    %v354 = vmax.f32 %v338, 0.0
    %v355 = vmax.f32 %v339, 0.0
    %v356 = vmax.f32 %v340, 0.0
    %v357 = vmax.f32 %v341, 0.0
    %v358 = vmax.f32 %v342, 0.0
    %v359 = vmax.f32 %v343, 0.0
    %v360 = vmax.f32 %v344, 0.0
    %v361 = vmax.f32 %v345, 0.0
    %v362 = vmax.f32 %v346, 0.0
    %v363 = vmax.f32 %v347, 0.0
    %v364 = vmax.f32 %v348, 0.0
    %v365 = vmax.f32 %v349, 0.0
    %v366 = vpack.c.bf16 %v351, %v350
    %v367 = vpack.c.bf16 %v353, %v352
    %v368 = vpack.c.bf16 %v355, %v354
    %v369 = vpack.c.bf16 %v357, %v356
    %v370 = vpack.c.bf16 %v359, %v358
    %v371 = vpack.c.bf16 %v361, %v360
    %v372 = vpack.c.bf16 %v363, %v362
    %v373 = vpack.c.bf16 %v365, %v364
    %v382 = vunpack.c.l.b16 %v366
    %v383 = vunpack.c.h.b16 %v366
    %v384 = vunpack.c.l.b16 %v367
    %v385 = vunpack.c.h.b16 %v367
    %v386 = vunpack.c.l.b16 %v368
    %v387 = vunpack.c.h.b16 %v368
    %v388 = vunpack.c.l.b16 %v369
    %v389 = vunpack.c.h.b16 %v369
    %v390 = vunpack.c.l.b16 %v370
    %v391 = vunpack.c.h.b16 %v370
    %v392 = vunpack.c.l.b16 %v371
    %v393 = vunpack.c.h.b16 %v371
    %v394 = vunpack.c.l.b16 %v372
    %v395 = vunpack.c.h.b16 %v372
    %v396 = vunpack.c.l.b16 %v373
    %v397 = vunpack.c.h.b16 %v373
    %v398 = vpack.c.b16 %v382, %v382
    %v399 = vpack.c.b16 %v383, %v383
    %v400 = vpack.c.b16 %v384, %v384
    %v401 = vpack.c.b16 %v385, %v385
    %v402 = vpack.c.b16 %v386, %v386
    %v403 = vpack.c.b16 %v387, %v387
    %v404 = vpack.c.b16 %v388, %v388
    %v405 = vpack.c.b16 %v389, %v389
    %v406 = vpack.c.b16 %v390, %v390
    %v407 = vpack.c.b16 %v391, %v391
    %v408 = vpack.c.b16 %v392, %v392
    %v409 = vpack.c.b16 %v393, %v393
    %v410 = vpack.c.b16 %v394, %v394
    %v411 = vpack.c.b16 %v395, %v395
    %v412 = vpack.c.b16 %v396, %v396
    %v413 = vpack.c.b16 %v397, %v397
    %430 = vst [vmem:[%s3] sm:$0xf] %v398
    %431 = vst [vmem:[%s3 + $0x4] sm:$0xf] %v399
    %432 = vst [vmem:[%s3 + $0x8] sm:$0xf] %v400
    %433 = vst [vmem:[%s3 + $0xc] sm:$0xf] %v401
    %434 = vst [vmem:[%s3 + $0x10] sm:$0xf] %v402
    %435 = vst [vmem:[%s3 + $0x14] sm:$0xf] %v403
    %436 = vst [vmem:[%s3 + $0x18] sm:$0xf] %v404
    %437 = vst [vmem:[%s3 + $0x1c] sm:$0xf] %v405
    %438 = vst [vmem:[%s3 + $0x20] sm:$0xf] %v406
    %439 = vst [vmem:[%s3 + $0x24] sm:$0xf] %v407
    %440 = vst [vmem:[%s3 + $0x28] sm:$0xf] %v408
    %441 = vst [vmem:[%s3 + $0x2c] sm:$0xf] %v409
    %442 = vst [vmem:[%s3 + $0x30] sm:$0xf] %v410
    %443 = vst [vmem:[%s3 + $0x34] sm:$0xf] %v411
    %444 = vst [vmem:[%s3 + $0x38] sm:$0xf] %v412
    %445 = vst [vmem:[%s3 + $0x3c] sm:$0xf] %v413
  $region21: #{smc_forward.6} parent=0 // pred_fallthru
    _
  // Predicated region
  $region22: #{smc_forward.6} parent=0 // pred_check
    _
  $region23: #{smc_forward.6} parent=0 // pred_check_branch
    %447 = sbr.rel (0) target = $region25
  $region24: #{smc_forward.6} parent=0 // pred_region
    _
  $region25: #{smc_forward.6} parent=0 // pred_fallthru
    _
  // Predicated region
  $region26: #{smc_forward.6} parent=0 // pred_check
    _
  $region27: #{smc_forward.6} parent=0 // pred_check_branch
    %449 = sbr.rel (0) target = $region29
  $region28: #{smc_forward.6} parent=0 // pred_region
    _
  $region29: #{smc_forward.6} parent=0 // pred_fallthru
    _

// kernel: tile.13
$region0: #{tile.13}
  #allocation0 [shape = 's32[1]{0}', space=sflag, size = 0x4, scoped, tag = 'scoped memory for tile.13']
  %s0 = inlined_call_operand.vmem [shape: f32[64], index: 0, kind: input, shape index: {}]
  %s1 = inlined_call_operand.vmem [shape: f32[4,64], index: 1, kind: output, shape index: {}]
  // Predicated region
  $region2: #{tile.13} parent=0 // pred_check
    _
  $region3: #{tile.13} parent=0 // pred_check_branch
    %3 = sbr.rel (0) target = $region5
  $region4: #{tile.13} parent=0 // pred_region
    _
  $region5: #{tile.13} parent=0 // pred_fallthru
    _
  %v4 = vld [vmem:[%s0] ss:$0 sm:$0xff]
  %5 = vst [vmem:[%s1] sm:$0xf] %v4

// kernel: tile.14
$region0: #{tile.14}
  %s0 = inlined_call_operand.vmem [shape: f32[4,64], index: 0, kind: input, shape index: {}]
  %s1 = inlined_call_operand.vmem [shape: f32[1,256], index: 1, kind: output, shape index: {}]
  $region1: #{tile.14} parent=0
    #allocation0 [shape = 'u8[8192]{0}', space=vmem, size = 0x2000, scoped, tag = 'scoped mem for output reshape']
    #allocation1 [shape = 'u8[4096]{0}', space=vmem, size = 0x1000, scoped, tag = 'scoped mem for input reshape']
    %s3 = sshllo.u32 0, 4
    %v4 = vld [vmem:[%s0] sm:%s3]
    %5 = vst [vmem:[#allocation1] sm:%s3] %v4
    %s6 = smov 3
    %v7 = vld [vmem:[#allocation1] ss:$2 sm:%s6]
    %vm8 = vcmask 523264
    %9 = vst.msk [vmem:[#allocation0] ss:$8 sm:$0x3] %vm8, %v7
    %s10 = scalar_lea.vmem [#allocation1], 1
    %s11 = smov 3
    %v12 = vld [vmem:[%s10] ss:$2 sm:%s11]
    %13 = vrot.lane.b32.xlu0 %v12, 64
    %v14 = vpop.permute.xlu0 %13
    %vm15 = vcmask 1048064
    %16 = vst.msk [vmem:[#allocation0] ss:$8 sm:$0x3] %vm15, %v14
    %s18 = sshllo.u32 0, 1
    %v20 = vld [vmem:[#allocation0] sm:%s18]
    %s21 = sshllo.u32 0, 1
    %22 = vst [vmem:[%s1] sm:%s21] %v20
    %s23 = scalar_lea.vmem [#allocation0], 8
    %v24 = vld [vmem:[%s23] sm:%s18]
    %s25 = sshllo.u32 0, 1
    %s26 = scalar_lea.vmem %s1, 1
    %27 = vst [vmem:[%s26] sm:%s25] %v24

// kernel: smc_forward.7
$region0: #{smc_forward.7}
  #allocation0 [shape = 'u32[]', space=smem, size = 0x4, offset = 0x4, fixed_abs, tag = 'smem constant byte address 0x4 - core index']
  #allocation1 [shape = 'u32[144,128]{1,0:T(1,128)}', space=vmem, size = 0x12000, scoped, tag = 'internal scratch']
  #allocation2 [shape = 'f32[32,128]{1,0:T(8,128)}', space=vmem, size = 0x4000, scoped, tag = 'scratch operand']
  %s0 = inlined_call_operand.vmem [shape: bf16[32,384], index: 0, kind: input, shape index: {}]
  %s1 = inlined_call_operand.vmem [shape: bf16[384,128], index: 1, kind: input, shape index: {}]
  %s2 = inlined_call_operand.vmem [shape: f32[1,128], index: 2, kind: input, shape index: {}]
  %s3 = inlined_call_operand.vmem [shape: bf16[32,128], index: 3, kind: output, shape index: {}]
  %s4 = sld [smem:[#allocation0]]
  $region94: #{smc_forward.7} parent=0
    _
  %s6 = ssub.s32 1, %s4
  %s7 = scalar_select 0, %s6, %s4
  $region1: #{smc_forward.7} parent=0
    #allocation3 [shape = 'u8[16384]{0}', space=vmem, size = 0x4000, scoped, tag = 'input window, operand 0']
    loop: start=0, step=1, limit=5
    $region2: #{smc_forward.7} parent=1 // loop_pre_header
      _
    $region3: #{smc_forward.7} parent=1 // loop_header
      %s9 = sphi 0, %s13
      %p10 = scmp.ge.s32.totalorder %s9, 5
      %s16 = sphi 0, %s35
      %s17 = sphi 0, %s31
      %s18 = sphi 0, %s27
      %s19 = sphi 0, %s16
      %s20 = sphi 0, %s17
      %s21 = sphi 0, %s18
      %s22 = sphi 0, %s19
      %s23 = sphi 0, %s20
      %s24 = sphi 0, %s21
      %s40 = sphi 0, %s42
      %s43 = sphi 0, %s40
      %s44 = sphi 0, %s43
      %s60 = sphi 0, %s44
      %s68 = sphi 0, %s70
      %s71 = sphi 0, %s68
      %s72 = sphi 0, %s71
      %s88 = sphi 0, %s72
      %s94 = sphi 0, %s96
      %s97 = sphi 0, %s94
      %s98 = sphi 0, %s97
      %s114 = sphi 0, %s98
      %s122 = sphi 0, %s124
      %s125 = sphi 0, %s122
      %s126 = sphi 0, %s125
      %s142 = sphi 0, %s126
    $region4: #{smc_forward.7} parent=1 // loop_header_branch
      %12 = sbr.rel (%p10) target = $region8
    $region5: #{smc_forward.7} parent=1 // loop_body
      %s14 = ssub.s32 %s9, 1
      %s15 = ssub.s32 %s9, 2
      %s25 = sadd.s32 1, %s18
      %p26 = scmp.ge.s32.totalorder %s25, 3
      %s27 = scalar_select %p26, 0, %s25
      %s28 = sadd.s32 1, %s17
      %s29 = scalar_select %p26, %s28, %s17
      %p30 = scmp.ge.s32.totalorder %s29, 1
      %s31 = scalar_select %p30, 0, %s29
      %s32 = sadd.s32 1, %s16
      %s33 = scalar_select %p30, %s32, %s16
      %p34 = scmp.ge.s32.totalorder %s33, 1
      %s35 = scalar_select %p34, 0, %s33
      %s36 = ssub.s32 %s16, %s35
      %s37 = ssub.s32 %s18, %s27
      %s38 = sor.u32 %s36, %s37
      %p39 = scmp.eq.s32.totalorder %s38, 0
      %s41 = sadd.s32 %s40, 1
      %s42 = scalar_select %p39, %s40, %s41
      %p45 = pneg %p39
      %p46 = scmp.eq.s32.totalorder %s9, 2
      %p47 = por %p45, %p46
      %p48 = scmp.ne.s32.totalorder %s40, %s43
      %p49 = scmp.eq.s32.totalorder %s9, 0
      %p50 = por %p48, %p49
      %p51 = scmp.ne.s32.totalorder %s40, %s43
      %p52 = scmp.eq.s32.totalorder %s14, 2
      %p53 = por %p51, %p52
      %p54 = scmp.ne.s32.totalorder %s43, %s44
      %p55 = scmp.eq.s32.totalorder %s14, 0
      %p56 = por %p54, %p55
      %p57 = scmp.ne.s32.totalorder %s43, %s44
      %p58 = scmp.eq.s32.totalorder %s15, 2
      %p59 = por %p57, %p58
      %p61 = scmp.ne.s32.totalorder %s44, %s60
      %p62 = scmp.eq.s32.totalorder %s15, 0
      %p63 = por %p61, %p62
      %s64 = ssub.s32 %s18, %s27
      %s65 = ssub.s32 %s17, %s31
      %s66 = sor.u32 %s64, %s65
      %p67 = scmp.eq.s32.totalorder %s66, 0
      %s69 = sadd.s32 %s68, 1
      %s70 = scalar_select %p67, %s68, %s69
      %p73 = pneg %p67
      %p74 = scmp.eq.s32.totalorder %s9, 2
      %p75 = por %p73, %p74
      %p76 = scmp.ne.s32.totalorder %s68, %s71
      %p77 = scmp.eq.s32.totalorder %s9, 0
      %p78 = por %p76, %p77
      %p79 = scmp.ne.s32.totalorder %s68, %s71
      %p80 = scmp.eq.s32.totalorder %s14, 2
      %p81 = por %p79, %p80
      %p82 = scmp.ne.s32.totalorder %s71, %s72
      %p83 = scmp.eq.s32.totalorder %s14, 0
      %p84 = por %p82, %p83
      %p85 = scmp.ne.s32.totalorder %s71, %s72
      %p86 = scmp.eq.s32.totalorder %s15, 2
      %p87 = por %p85, %p86
      %p89 = scmp.ne.s32.totalorder %s72, %s88
      %p90 = scmp.eq.s32.totalorder %s15, 0
      %p91 = por %p89, %p90
      %s92 = ssub.s32 %s17, %s31
      %p93 = scmp.eq.s32.totalorder %s92, 0
      %s95 = sadd.s32 %s94, 1
      %s96 = scalar_select %p93, %s94, %s95
      %p99 = pneg %p93
      %p100 = scmp.eq.s32.totalorder %s9, 2
      %p101 = por %p99, %p100
      %p102 = scmp.ne.s32.totalorder %s94, %s97
      %p103 = scmp.eq.s32.totalorder %s9, 0
      %p104 = por %p102, %p103
      %p105 = scmp.ne.s32.totalorder %s94, %s97
      %p106 = scmp.eq.s32.totalorder %s14, 2
      %p107 = por %p105, %p106
      %p108 = scmp.ne.s32.totalorder %s97, %s98
      %p109 = scmp.eq.s32.totalorder %s14, 0
      %p110 = por %p108, %p109
      %p111 = scmp.ne.s32.totalorder %s97, %s98
      %p112 = scmp.eq.s32.totalorder %s15, 2
      %p113 = por %p111, %p112
      %p115 = scmp.ne.s32.totalorder %s98, %s114
      %p116 = scmp.eq.s32.totalorder %s15, 0
      %p117 = por %p115, %p116
      %s118 = ssub.s32 %s16, %s35
      %s119 = ssub.s32 %s17, %s31
      %s120 = sor.u32 %s118, %s119
      %p121 = scmp.eq.s32.totalorder %s120, 0
      %s123 = sadd.s32 %s122, 1
      %s124 = scalar_select %p121, %s122, %s123
      %p127 = pneg %p121
      %p128 = scmp.eq.s32.totalorder %s9, 2
      %p129 = por %p127, %p128
      %p130 = scmp.ne.s32.totalorder %s122, %s125
      %p131 = scmp.eq.s32.totalorder %s9, 0
      %p132 = por %p130, %p131
      %p133 = scmp.ne.s32.totalorder %s122, %s125
      %p134 = scmp.eq.s32.totalorder %s14, 2
      %p135 = por %p133, %p134
      %p136 = scmp.ne.s32.totalorder %s125, %s126
      %p137 = scmp.eq.s32.totalorder %s14, 0
      %p138 = por %p136, %p137
      %p139 = scmp.ne.s32.totalorder %s125, %s126
      %p140 = scmp.eq.s32.totalorder %s15, 2
      %p141 = por %p139, %p140
      %p143 = scmp.ne.s32.totalorder %s126, %s142
      %p144 = scmp.eq.s32.totalorder %s15, 0
      %p145 = por %p143, %p144
      %p146 = scmp.le.s32.totalorder 1, %s9
      %p147 = scmp.lt.s32.totalorder %s9, 4
      %p148 = pnand %p146, %p147
      %p149 = pneg %p148
      // Predicated region
      $region9: #{smc_forward.7} parent=5 // pred_check
        _
      $region10: #{smc_forward.7} parent=5 // pred_check_branch
        %151 = sbr.rel (%p148) target = $region12
      $region11: #{smc_forward.7} parent=5 // pred_region
        %s152 = ssub.s32 %s9, 1
        // Predicated region
        $region13: #{smc_forward.7} parent=11 // pred_check
          %p153 = pneg %p110
        $region14: #{smc_forward.7} parent=11 // pred_check_branch
          %155 = sbr.rel (%p153) target = $region16
        $region15: #{smc_forward.7} parent=11 // pred_region
          %p156 = scmp.lt.s32.totalorder %s20, 0
          %s157 = scalar_select %p156, %s20, 0
          %s158 = scalar_lea.vmem %s2, %s157
        $region16: #{smc_forward.7} parent=11 // pred_fallthru
          _
      $region12: #{smc_forward.7} parent=5 // pred_fallthru
        _
      %p159 = scmp.lt.s32.totalorder %s9, 3
      // Predicated region
      $region17: #{smc_forward.7} parent=5 // pred_check
        %p160 = pneg %p159
      $region18: #{smc_forward.7} parent=5 // pred_check_branch
        %162 = sbr.rel (%p160) target = $region20
      $region19: #{smc_forward.7} parent=5 // pred_region
        // Predicated region
        $region21: #{smc_forward.7} parent=19 // pred_check
          %p163 = pneg %p50
        $region22: #{smc_forward.7} parent=19 // pred_check_branch
          %165 = sbr.rel (%p163) target = $region24
        $region23: #{smc_forward.7} parent=19 // pred_region
          %s166 = sand.u32 %s40, 1
          %s167 = sand.u32 %s40, 1
          %s168 = smul.addr %s167, 16
          %s169 = scalar_lea.vmem [#allocation3], %s168
          %s170 = smul.u32 4, %s16
          %s171 = smul.addr %s170, 3
          %s172 = sadd.s32 %s18, %s171
          %s173 = smul.addr %s172, 4
          %s174 = scalar_lea.vmem %s0, %s173
          // Predicated region
          $region25: #{smc_forward.7} parent=23 // pred_check
            _
          $region26: #{smc_forward.7} parent=23 // pred_check_branch
            %176 = sbr.rel (0) target = $region28
          $region27: #{smc_forward.7} parent=23 // pred_region
            // Predicated region
            $region29: #{smc_forward.7} parent=27 // pred_check
              _
            $region30: #{smc_forward.7} parent=27 // pred_check_branch
              %178 = sbr.rel target = $region32
            $region31: #{smc_forward.7} parent=27 // pred_region
              // Predicated region
              $region44: #{smc_forward.7} parent=31 // pred_check
                _
              $region45: #{smc_forward.7} parent=31 // pred_check_branch
                %199 = sbr.rel (0) target = $region47
              $region46: #{smc_forward.7} parent=31 // pred_region
                loop: start=0, step=1, limit=1
                $region48: #{smc_forward.7} parent=46 // loop_pre_header
                  _
                $region49: #{smc_forward.7} parent=46 // loop_header
                  %s201 = sphi 0, %s205
                  %p202 = scmp.ge.s32.totalorder %s201, 1
                  %s206 = sphi %s174, %s174
                  %s207 = sphi %s169, %s169
                $region50: #{smc_forward.7} parent=46 // loop_header_branch
                  %204 = sbr.rel (%p202) target = $region54
                $region51: #{smc_forward.7} parent=46 // loop_body
                  _
                $region52: #{smc_forward.7} parent=46 // loop_footer
                  %s205 = sadd.s32 1, %s201
                $region53: #{smc_forward.7} parent=46 // loop_footer_branch
                  %200 = sbr.rel target = $region49
                $region54: #{smc_forward.7} parent=46 // loop_exit
                  _
                loop: start=0, step=1, limit=1
                $region55: #{smc_forward.7} parent=46 // loop_pre_header
                  _
                $region56: #{smc_forward.7} parent=46 // loop_header
                  %s210 = sphi 0, %s214
                  %p211 = scmp.ge.s32.totalorder %s210, 1
                  %s215 = sphi %s174, %s174
                  %s216 = sphi %s169, %s169
                $region57: #{smc_forward.7} parent=46 // loop_header_branch
                  %213 = sbr.rel (%p211) target = $region61
                $region58: #{smc_forward.7} parent=46 // loop_body
                  %v217 = vld [vmem:[%s215] sm:$0xf]
                  %218 = vst [vmem:[%s216] sm:$0xf] %v217
                  %v219 = vld [vmem:[%s215 + $0xc] sm:$0xf]
                  %220 = vst [vmem:[%s216 + $0x4] sm:$0xf] %v219
                  %v221 = vld [vmem:[%s215 + $0x18] sm:$0xf]
                  %222 = vst [vmem:[%s216 + $0x8] sm:$0xf] %v221
                  %v223 = vld [vmem:[%s215 + $0x24] sm:$0xf]
                  %224 = vst [vmem:[%s216 + $0xc] sm:$0xf] %v223
                $region59: #{smc_forward.7} parent=46 // loop_footer
                  %s214 = sadd.s32 1, %s210
                $region60: #{smc_forward.7} parent=46 // loop_footer_branch
                  %209 = sbr.rel target = $region56
                $region61: #{smc_forward.7} parent=46 // loop_exit
                  _
              $region47: #{smc_forward.7} parent=31 // pred_fallthru
                _
            $region32: #{smc_forward.7} parent=27 // pred_fallthru
              _
            // Predicated region
            $region33: #{smc_forward.7} parent=27 // pred_check
              _
            $region34: #{smc_forward.7} parent=27 // pred_check_branch
              %180 = sbr.rel (0) target = $region36
            $region35: #{smc_forward.7} parent=27 // pred_region
              loop: start=0, step=1, limit=1
              $region37: #{smc_forward.7} parent=35 // loop_pre_header
                _
              $region38: #{smc_forward.7} parent=35 // loop_header
                %s183 = sphi 0, %s187
                %p184 = scmp.ge.s32.totalorder %s183, 1
                %s188 = sphi %s174, %s174
                %s189 = sphi %s169, %s169
              $region39: #{smc_forward.7} parent=35 // loop_header_branch
                %186 = sbr.rel (%p184) target = $region43
              $region40: #{smc_forward.7} parent=35 // loop_body
                %v190 = vld [vmem:[%s188] sm:$0xf]
                %191 = vst [vmem:[%s189] sm:$0xf] %v190
                %v192 = vld [vmem:[%s188 + $0xc] sm:$0xf]
                %193 = vst [vmem:[%s189 + $0x4] sm:$0xf] %v192
                %v194 = vld [vmem:[%s188 + $0x18] sm:$0xf]
                %195 = vst [vmem:[%s189 + $0x8] sm:$0xf] %v194
                %v196 = vld [vmem:[%s188 + $0x24] sm:$0xf]
                %197 = vst [vmem:[%s189 + $0xc] sm:$0xf] %v196
              $region41: #{smc_forward.7} parent=35 // loop_footer
                %s187 = sadd.s32 1, %s183
              $region42: #{smc_forward.7} parent=35 // loop_footer_branch
                %182 = sbr.rel target = $region38
              $region43: #{smc_forward.7} parent=35 // loop_exit
                _
            $region36: #{smc_forward.7} parent=27 // pred_fallthru
              _
          $region28: #{smc_forward.7} parent=23 // pred_fallthru
            _
          %225 = vnop
        $region24: #{smc_forward.7} parent=19 // pred_fallthru
          _
        // Predicated region
        $region62: #{smc_forward.7} parent=19 // pred_check
          %p226 = pneg %p78
        $region63: #{smc_forward.7} parent=19 // pred_check_branch
          %228 = sbr.rel (%p226) target = $region65
        $region64: #{smc_forward.7} parent=19 // pred_region
          %s229 = smul.u32 16, %s18
          %p230 = scmp.lt.s32.totalorder %s229, 47
          %s231 = scalar_select %p230, %s229, 47
          %p232 = scmp.lt.s32.totalorder %s17, 0
          %s233 = scalar_select %p232, %s17, 0
          %s234 = sadd.s32 %s233, %s231
          %s235 = smul.addr %s234, 4
          %s236 = scalar_lea.vmem %s1, %s235
          %s237 = smul.u32 16, %s18
        $region65: #{smc_forward.7} parent=19 // pred_fallthru
          _
      $region20: #{smc_forward.7} parent=5 // pred_fallthru
        _
      %p238 = scmp.le.s32.totalorder 1, %s9
      %p239 = scmp.lt.s32.totalorder %s9, 4
      %p240 = pnand %p238, %p239
      %p241 = pneg %p240
      // Predicated region
      $region66: #{smc_forward.7} parent=5 // pred_check
        _
      $region67: #{smc_forward.7} parent=5 // pred_check_branch
        %243 = sbr.rel (%p240) target = $region69
      $region68: #{smc_forward.7} parent=5 // pred_region
        %s244 = ssub.s32 %s9, 1
        %s245 = sand.u32 %s43, 1
        %s246 = sand.u32 %s43, 1
        %s247 = smul.addr %s246, 16
        %s248 = scalar_lea.vmem [#allocation3], %s247
        // Predicated region
        $region70: #{smc_forward.7} parent=68 // pred_check
          %p249 = pneg %p56
        $region71: #{smc_forward.7} parent=68 // pred_check_branch
          %251 = sbr.rel (%p249) target = $region73
        $region72: #{smc_forward.7} parent=68 // pred_region
          _
        $region73: #{smc_forward.7} parent=68 // pred_fallthru
          _
        %s252 = sand.u32 %s43, 1
        %s253 = sand.u32 %s43, 1
        %s254 = smul.addr %s253, 16
        %s255 = scalar_lea.vmem [#allocation3], %s254
        %p256 = pneg %p56
        %p257 = pneg %p53
        %s258 = smul.u32 16, %s21
        %p259 = scmp.lt.s32.totalorder %s258, 47
        %s260 = scalar_select %p259, %s258, 47
        %p261 = scmp.lt.s32.totalorder %s20, 0
        %s262 = scalar_select %p261, %s20, 0
        %s263 = sadd.s32 %s262, %s260
        %s264 = smul.addr %s263, 4
        %s265 = scalar_lea.vmem %s1, %s264
        %p266 = pneg %p84
        %p267 = pneg %p81
        %p268 = scmp.lt.s32.totalorder %s20, 0
        %s269 = scalar_select %p268, %s20, 0
        %s270 = scalar_lea.vmem %s2, %s269
        %p271 = pneg %p110
        %p272 = pneg %p107
        %p273 = pneg %p138
        %p274 = pneg %p135
        %s275 = smul.u32 4, %s19
        %p276 = scmp.lt.s32.totalorder %s275, 3
        %s277 = scalar_select %p276, %s275, 3
        %p278 = scmp.lt.s32.totalorder %s20, 0
        %s279 = scalar_select %p278, %s20, 0
        %s280 = sadd.s32 %s279, %s277
        %s281 = smul.addr %s280, 4
        %s282 = scalar_lea.vmem %s3, %s281
        %s283 = smul.u32 4, %s19
        %s284 = smul.u32 16, %s21
        %p285 = scmp.lt.s32.totalorder %s284, 47
        %s286 = scalar_select %p285, %s284, 47
        %p287 = scmp.lt.s32.totalorder %s20, 0
        %s288 = scalar_select %p287, %s20, 0
        %s289 = sadd.s32 %s288, %s286
        %s290 = smul.addr %s289, 4
        %s291 = scalar_lea.vmem %s1, %s290
        %s292 = smul.u32 16, %s21
        %p293 = scmp.lt.s32.totalorder %s20, 0
        %s294 = scalar_select %p293, %s20, 0
        %s295 = scalar_lea.vmem %s2, %s294
        %s296 = smul.u32 4, %s19
        %p297 = scmp.lt.s32.totalorder %s296, 3
        %s298 = scalar_select %p297, %s296, 3
        %p299 = scmp.lt.s32.totalorder %s20, 0
        %s300 = scalar_select %p299, %s20, 0
        %s301 = sadd.s32 %s300, %s298
        %s302 = smul.addr %s301, 4
        %s303 = scalar_lea.vmem %s3, %s302
        %s304 = smul.u32 4, %s19
        %p306 = scmp.eq.s32.totalorder %s21, 0
        // Predicated region
        $region74: #{smc_forward.7} parent=68 // pred_check
          %p307 = pneg %p306
        $region75: #{smc_forward.7} parent=68 // pred_check_branch
          %309 = sbr.rel (%p307) target = $region77
        $region76: #{smc_forward.7} parent=68 // pred_region
          %310 = vst [vmem:[#allocation2] sm:$0xff] 0.0
          %311 = vst [vmem:[#allocation2 + $0x8] sm:$0xff] 0.0
          %312 = vst [vmem:[#allocation2 + $0x10] sm:$0xff] 0.0
          %313 = vst [vmem:[#allocation2 + $0x18] sm:$0xff] 0.0
        $region77: #{smc_forward.7} parent=68 // pred_fallthru
          _
        %v314 = vld [vmem:[#allocation2] sm:$0xff]
        %v315 = vld [vmem:[#allocation2 + $0x8] sm:$0xff]
        %v316 = vld [vmem:[#allocation2 + $0x10] sm:$0xff]
        %v317 = vld [vmem:[#allocation2 + $0x18] sm:$0xff]
        %v318 = vld [vmem:[%s248] sm:$0xf]
        %v319 = vld [vmem:[%s248 + $0x4] sm:$0xf]
        %v320 = vld [vmem:[%s248 + $0x8] sm:$0xf]
        %v321 = vld [vmem:[%s248 + $0xc] sm:$0xf]
        %v322 = vld [vmem:[%s291] sm:$0xf]
        %v323 = vld [vmem:[%s291 + $0x4] sm:$0xf]
        %v324 = vld [vmem:[%s291 + $0x8] sm:$0xf]
        %v325 = vld [vmem:[%s291 + $0xc] sm:$0xf]
        %v326 = vld [vmem:[%s291 + $0x10] sm:$0xf]
        %v327 = vld [vmem:[%s291 + $0x14] sm:$0xf]
        %v328 = vld [vmem:[%s291 + $0x18] sm:$0xf]
        %v329 = vld [vmem:[%s291 + $0x1c] sm:$0xf]
        %v330 = vld [vmem:[%s291 + $0x20] sm:$0xf]
        %v331 = vld [vmem:[%s291 + $0x24] sm:$0xf]
        %v332 = vld [vmem:[%s291 + $0x28] sm:$0xf]
        %v333 = vld [vmem:[%s291 + $0x2c] sm:$0xf]
        %v334 = vld [vmem:[%s291 + $0x30] sm:$0xf]
        %v335 = vld [vmem:[%s291 + $0x34] sm:$0xf]
        %v336 = vld [vmem:[%s291 + $0x38] sm:$0xf]
        %v337 = vld [vmem:[%s291 + $0x3c] sm:$0xf]
        %v342 = vunpack.c.l.b16 %v318
        %v343 = vunpack.c.l.b16 %v319
        %v344 = vunpack.c.l.b16 %v320
        %v345 = vunpack.c.l.b16 %v321
        %v346 = vpack.c.b16 %v343, %v342
        %v347 = vpack.c.b16 %v345, %v344
        %v366 = vunpack.c.l.b16 %v322
        %v367 = vunpack.c.l.b16 %v323
        %v368 = vunpack.c.l.b16 %v324
        %v369 = vunpack.c.l.b16 %v325
        %v370 = vunpack.c.l.b16 %v326
        %v371 = vunpack.c.l.b16 %v327
        %v372 = vunpack.c.l.b16 %v328
        %v373 = vunpack.c.l.b16 %v329
        %v374 = vunpack.c.l.b16 %v330
        %v375 = vunpack.c.l.b16 %v331
        %v376 = vunpack.c.l.b16 %v332
        %v377 = vunpack.c.l.b16 %v333
        %v378 = vunpack.c.l.b16 %v334
        %v379 = vunpack.c.l.b16 %v335
        %v380 = vunpack.c.l.b16 %v336
        %v381 = vunpack.c.l.b16 %v337
        %v382 = vpack.c.b16 %v367, %v366
        %v383 = vpack.c.b16 %v369, %v368
        %v384 = vpack.c.b16 %v371, %v370
        %v385 = vpack.c.b16 %v373, %v372
        %v386 = vpack.c.b16 %v375, %v374
        %v387 = vpack.c.b16 %v377, %v376
        %v388 = vpack.c.b16 %v379, %v378
        %v389 = vpack.c.b16 %v381, %v380
        %398 = vmatprep.subr.bf16.mxu0 0
        %399 = vmatpush1.bf16.msra.mxu0 %v382
        %400 = vmatprep.subr.bf16.mxu0 0
        %401 = vmatpush1.bf16.msra.mxu0 %v383
        %402 = vmatprep.subr.bf16.mxu0 0
        %403 = vmatpush1.bf16.msra.mxu0 %v384
        %404 = vmatprep.subr.bf16.mxu0 0
        %405 = vmatpush1.bf16.msra.mxu0 %v385
        %406 = vmatprep.subr.bf16.mxu0 0
        %407 = vmatpush1.bf16.msra.mxu0 %v386
        %408 = vmatprep.subr.bf16.mxu0 0
        %409 = vmatpush1.bf16.msra.mxu0 %v387
        %410 = vmatprep.subr.bf16.mxu0 0
        %411 = vmatpush1.bf16.msra.mxu0 %v388
        %412 = vmatprep.subr.bf16.mxu0 0
        %413 = vmatpush1.bf16.msra.mxu0 %v389
        %414 = vmatprep.subr.bf16.mxu0 0
        %415 = vmatpush1.bf16.msra.mxu0 0
        %416 = vmatprep.subr.bf16.mxu0 0
        %417 = vmatpush1.bf16.msra.mxu0 0
        %418 = vmatprep.subr.bf16.mxu0 0
        %419 = vmatpush1.bf16.msra.mxu0 0
        %420 = vmatprep.subr.bf16.mxu0 0
        %421 = vmatpush1.bf16.msra.mxu0 0
        %422 = vmatprep.subr.bf16.mxu0 0
        %423 = vmatpush1.bf16.msra.mxu0 0
        %424 = vmatprep.subr.bf16.mxu0 0
        %425 = vmatpush1.bf16.msra.mxu0 0
        %426 = vmatprep.subr.bf16.mxu0 0
        %427 = vmatpush1.bf16.msra.mxu0 0
        %428 = vmatprep.subr.bf16.mxu0 0
        %429 = vmatpush1.bf16.msra.mxu0 0
        %430 = vmatprep.mubr.bf16.mxu0 0
        %431 = vmatmul.mubr.bf16.gmra.mrb[0].mxu0 %v346
        %v432 = vpop.f32.mrb[0].mxu0
        %v433 = vadd.f32 0.0, %v432
        %v434 = vpop.f32.mrb[0].mxu0
        %v435 = vpop.f32.mrb[0].mxu0
        %v436 = vadd.f32 0.0, %v435
        %v437 = vpop.f32.mrb[0].mxu0
        %438 = vmatprep.mubr.bf16.mxu0 0
        %439 = vmatmul.mubr.bf16.gmra.mrb[0].mxu0 %v347
        %v440 = vpop.f32.mrb[0].mxu0
        %v441 = vadd.f32 0.0, %v440
        %v442 = vpop.f32.mrb[0].mxu0
        %v443 = vpop.f32.mrb[0].mxu0
        %v444 = vadd.f32 0.0, %v443
        %v445 = vpop.f32.mrb[0].mxu0
        %446 = vdwg.mxu0
        %v447 = vadd.f32 %v314, %v433
        %v448 = vadd.f32 %v315, %v436
        %v449 = vadd.f32 %v316, %v441
        %v450 = vadd.f32 %v317, %v444
        %451 = vst [vmem:[#allocation2] sm:$0xff] %v447
        %452 = vst [vmem:[#allocation2 + $0x8] sm:$0xff] %v448
        %453 = vst [vmem:[#allocation2 + $0x10] sm:$0xff] %v449
        %454 = vst [vmem:[#allocation2 + $0x18] sm:$0xff] %v450
        %p455 = scmp.eq.s32.totalorder %s21, 2
        // Predicated region
        $region78: #{smc_forward.7} parent=68 // pred_check
          %p456 = pneg %p455
        $region79: #{smc_forward.7} parent=68 // pred_check_branch
          %458 = sbr.rel (%p456) target = $region81
        $region80: #{smc_forward.7} parent=68 // pred_region
          %v459 = vld [vmem:[#allocation2] sm:$0xff]
          %v460 = vld [vmem:[#allocation2 + $0x8] sm:$0xff]
          %v461 = vld [vmem:[#allocation2 + $0x10] sm:$0xff]
          %v462 = vld [vmem:[#allocation2 + $0x18] sm:$0xff]
          %v463 = vld [vmem:[%s295] sm:$0x1]
          %v465 = vlaneseq
          %v466 = vshrl.u32 %v465, 7
          %v467 = vsub.s32 0, %v466
          %v468 = vrot.slane %v463, %v467
          %v470 = vadd.f32 %v459, %v468
          %v471 = vadd.f32 %v460, %v468
          %v472 = vadd.f32 %v461, %v468
          %v473 = vadd.f32 %v462, %v468
          %v474 = vmax.f32 %v470, 0.0
          %v475 = vmax.f32 %v471, 0.0
          %v476 = vmax.f32 %v472, 0.0
          %v477 = vmax.f32 %v473, 0.0
          %v478 = vpack.c.bf16 %v475, %v474
          %v479 = vpack.c.bf16 %v477, %v476
          %v482 = vunpack.c.l.b16 %v478
          %v483 = vunpack.c.h.b16 %v478
          %v484 = vunpack.c.l.b16 %v479
          %v485 = vunpack.c.h.b16 %v479
          %v486 = vpack.c.b16 %v482, %v482
          %v487 = vpack.c.b16 %v483, %v483
          %v488 = vpack.c.b16 %v484, %v484
          %v489 = vpack.c.b16 %v485, %v485
          %494 = vst [vmem:[%s303] sm:$0xf] %v486
          %495 = vst [vmem:[%s303 + $0x4] sm:$0xf] %v487
          %496 = vst [vmem:[%s303 + $0x8] sm:$0xf] %v488
          %497 = vst [vmem:[%s303 + $0xc] sm:$0xf] %v489
        $region81: #{smc_forward.7} parent=68 // pred_fallthru
          _
        %s498 = smul.u32 4, %s19
        %p499 = scmp.lt.s32.totalorder %s498, 3
        %s500 = scalar_select %p499, %s498, 3
        %p501 = scmp.lt.s32.totalorder %s20, 0
        %s502 = scalar_select %p501, %s20, 0
        %s503 = sadd.s32 %s502, %s500
        %s504 = smul.addr %s503, 4
        %s505 = scalar_lea.vmem %s3, %s504
        // Predicated region
        $region82: #{smc_forward.7} parent=68 // pred_check
          %p506 = pneg %p135
        $region83: #{smc_forward.7} parent=68 // pred_check_branch
          %508 = sbr.rel (%p506) target = $region85
        $region84: #{smc_forward.7} parent=68 // pred_region
          %s509 = smul.u32 4, %s19
        $region85: #{smc_forward.7} parent=68 // pred_fallthru
          _
        // Predicated region
        $region86: #{smc_forward.7} parent=68 // pred_check
          %p510 = pneg %p135
        $region87: #{smc_forward.7} parent=68 // pred_check_branch
          %512 = sbr.rel (%p510) target = $region89
        $region88: #{smc_forward.7} parent=68 // pred_region
          %s513 = smul.u32 4, %s19
          %p514 = scmp.lt.s32.totalorder %s513, 3
          %s515 = scalar_select %p514, %s513, 3
          %p516 = scmp.lt.s32.totalorder %s20, 0
          %s517 = scalar_select %p516, %s20, 0
          %s518 = sadd.s32 %s517, %s515
          %s519 = smul.addr %s518, 4
          %s520 = scalar_lea.vmem %s3, %s519
        $region89: #{smc_forward.7} parent=68 // pred_fallthru
          _
      $region69: #{smc_forward.7} parent=5 // pred_fallthru
        _
      %p521 = scmp.le.s32.totalorder 2, %s9
      // Predicated region
      $region90: #{smc_forward.7} parent=5 // pred_check
        %p522 = pneg %p521
      $region91: #{smc_forward.7} parent=5 // pred_check_branch
        %524 = sbr.rel (%p522) target = $region93
      $region92: #{smc_forward.7} parent=5 // pred_region
        %s525 = ssub.s32 %s9, 2
      $region93: #{smc_forward.7} parent=5 // pred_fallthru
        _
    $region6: #{smc_forward.7} parent=1 // loop_footer
      %s13 = sadd.s32 1, %s9
    $region7: #{smc_forward.7} parent=1 // loop_footer_branch
      %8 = sbr.rel target = $region3
    $region8: #{smc_forward.7} parent=1 // loop_exit
      _

// kernel: smc_forward.9
$region0: #{smc_forward.9}
  #allocation0 [shape = 'u32[]', space=smem, size = 0x4, offset = 0x4, fixed_abs, tag = 'smem constant byte address 0x4 - core index']
  #allocation1 [shape = 'u32[144,128]{1,0:T(1,128)}', space=vmem, size = 0x12000, scoped, tag = 'internal scratch']
  #allocation2 [shape = 'f32[32,256]{1,0:T(8,128)}', space=vmem, size = 0x8000, scoped, tag = 'scratch operand']
  %s0 = inlined_call_operand.vmem [shape: bf16[32,128], index: 0, kind: input, shape index: {}]
  %s1 = inlined_call_operand.vmem [shape: bf16[128,256], index: 1, kind: input, shape index: {}]
  %s2 = inlined_call_operand.vmem [shape: f32[1,256], index: 2, kind: input, shape index: {}]
  %s3 = inlined_call_operand.vmem [shape: bf16[32,256], index: 3, kind: output, shape index: {}]
  %s4 = sld [smem:[#allocation0]]
  $region30: #{smc_forward.9} parent=0
    _
  %s6 = ssub.s32 1, %s4
  %s7 = scalar_select 0, %s6, %s4
  // Predicated region
  $region2: #{smc_forward.9} parent=0 // pred_check
    _
  $region3: #{smc_forward.9} parent=0 // pred_check_branch
    %9 = sbr.rel (0) target = $region5
  $region4: #{smc_forward.9} parent=0 // pred_region
    _
  $region5: #{smc_forward.9} parent=0 // pred_fallthru
    _
  // Predicated region
  $region6: #{smc_forward.9} parent=0 // pred_check
    _
  $region7: #{smc_forward.9} parent=0 // pred_check_branch
    %11 = sbr.rel (0) target = $region9
  $region8: #{smc_forward.9} parent=0 // pred_region
    _
  $region9: #{smc_forward.9} parent=0 // pred_fallthru
    _
  // Predicated region
  $region10: #{smc_forward.9} parent=0 // pred_check
    _
  $region11: #{smc_forward.9} parent=0 // pred_check_branch
    %13 = sbr.rel (0) target = $region13
  $region12: #{smc_forward.9} parent=0 // pred_region
    _
  $region13: #{smc_forward.9} parent=0 // pred_fallthru
    _
  %p15 = scmp.eq.s32.totalorder 0, 0
  // Predicated region
  $region14: #{smc_forward.9} parent=0 // pred_check
    %p16 = pneg %p15
  $region15: #{smc_forward.9} parent=0 // pred_check_branch
    %18 = sbr.rel (%p16) target = $region17
  $region16: #{smc_forward.9} parent=0 // pred_region
    %19 = vst [vmem:[#allocation2] sm:$0xff] 0.0
    %20 = vst [vmem:[#allocation2 + $0x8] sm:$0xff] 0.0
    %21 = vst [vmem:[#allocation2 + $0x10] sm:$0xff] 0.0
    %22 = vst [vmem:[#allocation2 + $0x18] sm:$0xff] 0.0
    %23 = vst [vmem:[#allocation2 + $0x20] sm:$0xff] 0.0
    %24 = vst [vmem:[#allocation2 + $0x28] sm:$0xff] 0.0
    %25 = vst [vmem:[#allocation2 + $0x30] sm:$0xff] 0.0
    %26 = vst [vmem:[#allocation2 + $0x38] sm:$0xff] 0.0
  $region17: #{smc_forward.9} parent=0 // pred_fallthru
    _
  %v27 = vld [vmem:[#allocation2] sm:$0xff]
  %v28 = vld [vmem:[#allocation2 + $0x8] sm:$0xff]
  %v29 = vld [vmem:[#allocation2 + $0x10] sm:$0xff]
  %v30 = vld [vmem:[#allocation2 + $0x18] sm:$0xff]
  %v31 = vld [vmem:[#allocation2 + $0x20] sm:$0xff]
  %v32 = vld [vmem:[#allocation2 + $0x28] sm:$0xff]
  %v33 = vld [vmem:[#allocation2 + $0x30] sm:$0xff]
  %v34 = vld [vmem:[#allocation2 + $0x38] sm:$0xff]
  %v35 = vld [vmem:[%s0] sm:$0xf]
  %v36 = vld [vmem:[%s0 + $0x4] sm:$0xf]
  %v37 = vld [vmem:[%s0 + $0x8] sm:$0xf]
  %v38 = vld [vmem:[%s0 + $0xc] sm:$0xf]
  %v39 = vld [vmem:[%s1] sm:$0xff]
  %v40 = vld [vmem:[%s1 + $0x8] sm:$0xff]
  %v41 = vld [vmem:[%s1 + $0x10] sm:$0xff]
  %v42 = vld [vmem:[%s1 + $0x18] sm:$0xff]
  %v43 = vld [vmem:[%s1 + $0x20] sm:$0xff]
  %v44 = vld [vmem:[%s1 + $0x28] sm:$0xff]
  %v45 = vld [vmem:[%s1 + $0x30] sm:$0xff]
  %v46 = vld [vmem:[%s1 + $0x38] sm:$0xff]
  %v47 = vld [vmem:[%s1 + $0x40] sm:$0xff]
  %v48 = vld [vmem:[%s1 + $0x48] sm:$0xff]
  %v49 = vld [vmem:[%s1 + $0x50] sm:$0xff]
  %v50 = vld [vmem:[%s1 + $0x58] sm:$0xff]
  %v51 = vld [vmem:[%s1 + $0x60] sm:$0xff]
  %v52 = vld [vmem:[%s1 + $0x68] sm:$0xff]
  %v53 = vld [vmem:[%s1 + $0x70] sm:$0xff]
  %v54 = vld [vmem:[%s1 + $0x78] sm:$0xff]
  %v59 = vunpack.c.l.b16 %v35
  %v60 = vunpack.c.l.b16 %v36
  %v61 = vunpack.c.l.b16 %v37
  %v62 = vunpack.c.l.b16 %v38
  %v63 = vpack.c.b16 %v60, %v59
  %v64 = vpack.c.b16 %v62, %v61
  %v83 = vunpack.c.l.b16 %v39
  %v84 = vunpack.c.h.b16 %v39
  %v85 = vunpack.c.l.b16 %v40
  %v86 = vunpack.c.h.b16 %v40
  %v87 = vunpack.c.l.b16 %v41
  %v88 = vunpack.c.h.b16 %v41
  %v89 = vunpack.c.l.b16 %v42
  %v90 = vunpack.c.h.b16 %v42
  %v91 = vunpack.c.l.b16 %v43
  %v92 = vunpack.c.h.b16 %v43
  %v93 = vunpack.c.l.b16 %v44
  %v94 = vunpack.c.h.b16 %v44
  %v95 = vunpack.c.l.b16 %v45
  %v96 = vunpack.c.h.b16 %v45
  %v97 = vunpack.c.l.b16 %v46
  %v98 = vunpack.c.h.b16 %v46
  %v99 = vunpack.c.l.b16 %v47
  %v100 = vunpack.c.h.b16 %v47
  %v101 = vunpack.c.l.b16 %v48
  %v102 = vunpack.c.h.b16 %v48
  %v103 = vunpack.c.l.b16 %v49
  %v104 = vunpack.c.h.b16 %v49
  %v105 = vunpack.c.l.b16 %v50
  %v106 = vunpack.c.h.b16 %v50
  %v107 = vunpack.c.l.b16 %v51
  %v108 = vunpack.c.h.b16 %v51
  %v109 = vunpack.c.l.b16 %v52
  %v110 = vunpack.c.h.b16 %v52
  %v111 = vunpack.c.l.b16 %v53
  %v112 = vunpack.c.h.b16 %v53
  %v113 = vunpack.c.l.b16 %v54
  %v114 = vunpack.c.h.b16 %v54
  %v115 = vpack.c.b16 %v85, %v83
  %v116 = vpack.c.b16 %v86, %v84
  %v117 = vpack.c.b16 %v89, %v87
  %v118 = vpack.c.b16 %v90, %v88
  %v119 = vpack.c.b16 %v93, %v91
  %v120 = vpack.c.b16 %v94, %v92
  %v121 = vpack.c.b16 %v97, %v95
  %v122 = vpack.c.b16 %v98, %v96
  %v123 = vpack.c.b16 %v101, %v99
  %v124 = vpack.c.b16 %v102, %v100
  %v125 = vpack.c.b16 %v105, %v103
  %v126 = vpack.c.b16 %v106, %v104
  %v127 = vpack.c.b16 %v109, %v107
  %v128 = vpack.c.b16 %v110, %v108
  %v129 = vpack.c.b16 %v113, %v111
  %v130 = vpack.c.b16 %v114, %v112
  %147 = vmatprep.subr.bf16.mxu0 %v116
  %148 = vmatpush1.bf16.msra.mxu0 %v115
  %149 = vmatprep.subr.bf16.mxu0 %v118
  %150 = vmatpush1.bf16.msra.mxu0 %v117
  %151 = vmatprep.subr.bf16.mxu0 %v120
  %152 = vmatpush1.bf16.msra.mxu0 %v119
  %153 = vmatprep.subr.bf16.mxu0 %v122
  %154 = vmatpush1.bf16.msra.mxu0 %v121
  %155 = vmatprep.subr.bf16.mxu0 %v124
  %156 = vmatpush1.bf16.msra.mxu0 %v123
  %157 = vmatprep.subr.bf16.mxu0 %v126
  %158 = vmatpush1.bf16.msra.mxu0 %v125
  %159 = vmatprep.subr.bf16.mxu0 %v128
  %160 = vmatpush1.bf16.msra.mxu0 %v127
  %161 = vmatprep.subr.bf16.mxu0 %v130
  %162 = vmatpush1.bf16.msra.mxu0 %v129
  %163 = vmatprep.subr.bf16.mxu0 0
  %164 = vmatpush1.bf16.msra.mxu0 0
  %165 = vmatprep.subr.bf16.mxu0 0
  %166 = vmatpush1.bf16.msra.mxu0 0
  %167 = vmatprep.subr.bf16.mxu0 0
  %168 = vmatpush1.bf16.msra.mxu0 0
  %169 = vmatprep.subr.bf16.mxu0 0
  %170 = vmatpush1.bf16.msra.mxu0 0
  %171 = vmatprep.subr.bf16.mxu0 0
  %172 = vmatpush1.bf16.msra.mxu0 0
  %173 = vmatprep.subr.bf16.mxu0 0
  %174 = vmatpush1.bf16.msra.mxu0 0
  %175 = vmatprep.subr.bf16.mxu0 0
  %176 = vmatpush1.bf16.msra.mxu0 0
  %177 = vmatprep.subr.bf16.mxu0 0
  %178 = vmatpush1.bf16.msra.mxu0 0
  %179 = vmatprep.mubr.bf16.mxu0 0
  %180 = vmatmul.mubr.bf16.gmra.mrb[0].mxu0 %v63
  %v181 = vpop.f32.mrb[0].mxu0
  %v182 = vadd.f32 0.0, %v181
  %v183 = vpop.f32.mrb[0].mxu0
  %v184 = vadd.f32 0.0, %v183
  %v185 = vpop.f32.mrb[0].mxu0
  %v186 = vadd.f32 0.0, %v185
  %v187 = vpop.f32.mrb[0].mxu0
  %v188 = vadd.f32 0.0, %v187
  %189 = vmatprep.mubr.bf16.mxu0 0
  %190 = vmatmul.mubr.bf16.gmra.mrb[0].mxu0 %v64
  %v191 = vpop.f32.mrb[0].mxu0
  %v192 = vadd.f32 0.0, %v191
  %v193 = vpop.f32.mrb[0].mxu0
  %v194 = vadd.f32 0.0, %v193
  %v195 = vpop.f32.mrb[0].mxu0
  %v196 = vadd.f32 0.0, %v195
  %v197 = vpop.f32.mrb[0].mxu0
  %v198 = vadd.f32 0.0, %v197
  %199 = vdwg.mxu0
  %v200 = vadd.f32 %v27, %v182
  %v201 = vadd.f32 %v28, %v184
  %v202 = vadd.f32 %v29, %v186
  %v203 = vadd.f32 %v30, %v188
  %v204 = vadd.f32 %v31, %v192
  %v205 = vadd.f32 %v32, %v194
  %v206 = vadd.f32 %v33, %v196
  %v207 = vadd.f32 %v34, %v198
  %208 = vst [vmem:[#allocation2] sm:$0xff] %v200
  %209 = vst [vmem:[#allocation2 + $0x8] sm:$0xff] %v201
  %210 = vst [vmem:[#allocation2 + $0x10] sm:$0xff] %v202
  %211 = vst [vmem:[#allocation2 + $0x18] sm:$0xff] %v203
  %212 = vst [vmem:[#allocation2 + $0x20] sm:$0xff] %v204
  %213 = vst [vmem:[#allocation2 + $0x28] sm:$0xff] %v205
  %214 = vst [vmem:[#allocation2 + $0x30] sm:$0xff] %v206
  %215 = vst [vmem:[#allocation2 + $0x38] sm:$0xff] %v207
  // Predicated region
  $region18: #{smc_forward.9} parent=0 // pred_check
    %p216 = pneg %p15
  $region19: #{smc_forward.9} parent=0 // pred_check_branch
    %218 = sbr.rel (%p216) target = $region21
  $region20: #{smc_forward.9} parent=0 // pred_region
    %v219 = vld [vmem:[#allocation2] sm:$0xff]
    %v220 = vld [vmem:[#allocation2 + $0x8] sm:$0xff]
    %v221 = vld [vmem:[#allocation2 + $0x10] sm:$0xff]
    %v222 = vld [vmem:[#allocation2 + $0x18] sm:$0xff]
    %v223 = vld [vmem:[#allocation2 + $0x20] sm:$0xff]
    %v224 = vld [vmem:[#allocation2 + $0x28] sm:$0xff]
    %v225 = vld [vmem:[#allocation2 + $0x30] sm:$0xff]
    %v226 = vld [vmem:[#allocation2 + $0x38] sm:$0xff]
    %v227 = vld [vmem:[%s2] sm:$0x3]
    %v229 = vlaneseq
    %v230 = vshrl.u32 %v229, 7
    %v231 = vsub.s32 0, %v230
    %v232 = vrot.slane %v227, %v231
    %v233 = vlaneseq
    %v234 = vshrl.u32 %v233, 7
    %v235 = vsub.s32 1, %v234
    %v236 = vrot.slane %v227, %v235
    %v239 = vadd.f32 %v219, %v232
    %v240 = vadd.f32 %v220, %v236
    %v241 = vadd.f32 %v221, %v232
    %v242 = vadd.f32 %v222, %v236
    %v243 = vadd.f32 %v223, %v232
    %v244 = vadd.f32 %v224, %v236
    %v245 = vadd.f32 %v225, %v232
    %v246 = vadd.f32 %v226, %v236
    %v247 = vmax.f32 %v239, 0.0
    %v248 = vmax.f32 %v240, 0.0
    %v249 = vmax.f32 %v241, 0.0
    %v250 = vmax.f32 %v242, 0.0
    %v251 = vmax.f32 %v243, 0.0
    %v252 = vmax.f32 %v244, 0.0
    %v253 = vmax.f32 %v245, 0.0
    %v254 = vmax.f32 %v246, 0.0
    %v255 = vpack.c.bf16 %v249, %v247
    %v256 = vpack.c.bf16 %v250, %v248
    %v257 = vpack.c.bf16 %v253, %v251
    %v258 = vpack.c.bf16 %v254, %v252
    %v263 = vunpack.c.l.b16 %v255
    %v264 = vunpack.c.l.b16 %v256
    %v265 = vunpack.c.h.b16 %v255
    %v266 = vunpack.c.h.b16 %v256
    %v267 = vunpack.c.l.b16 %v257
    %v268 = vunpack.c.l.b16 %v258
    %v269 = vunpack.c.h.b16 %v257
    %v270 = vunpack.c.h.b16 %v258
    %v271 = vpack.c.b16 %v264, %v263
    %v272 = vpack.c.b16 %v266, %v265
    %v273 = vpack.c.b16 %v268, %v267
    %v274 = vpack.c.b16 %v270, %v269
    %279 = vst [vmem:[%s3] sm:$0xff] %v271
    %280 = vst [vmem:[%s3 + $0x8] sm:$0xff] %v272
    %281 = vst [vmem:[%s3 + $0x10] sm:$0xff] %v273
    %282 = vst [vmem:[%s3 + $0x18] sm:$0xff] %v274
  $region21: #{smc_forward.9} parent=0 // pred_fallthru
    _
  // Predicated region
  $region22: #{smc_forward.9} parent=0 // pred_check
    _
  $region23: #{smc_forward.9} parent=0 // pred_check_branch
    %284 = sbr.rel (0) target = $region25
  $region24: #{smc_forward.9} parent=0 // pred_region
    _
  $region25: #{smc_forward.9} parent=0 // pred_fallthru
    _
  // Predicated region
  $region26: #{smc_forward.9} parent=0 // pred_check
    _
  $region27: #{smc_forward.9} parent=0 // pred_check_branch
    %286 = sbr.rel (0) target = $region29
  $region28: #{smc_forward.9} parent=0 // pred_region
    _
  $region29: #{smc_forward.9} parent=0 // pred_fallthru
    _

// kernel: smc_forward.10
$region0: #{smc_forward.10}
  #allocation0 [shape = 'u32[]', space=smem, size = 0x4, offset = 0x4, fixed_abs, tag = 'smem constant byte address 0x4 - core index']
  #allocation1 [shape = 'u32[144,128]{1,0:T(1,128)}', space=vmem, size = 0x12000, scoped, tag = 'internal scratch']
  #allocation2 [shape = 'f32[128,256]{1,0:T(8,128)}', space=vmem, size = 0x20000, scoped, tag = 'scratch operand']
  %s0 = inlined_call_operand.vmem [shape: bf16[128,128], index: 0, kind: input, shape index: {}]
  %s1 = inlined_call_operand.vmem [shape: bf16[128,256], index: 1, kind: input, shape index: {}]
  %s2 = inlined_call_operand.vmem [shape: f32[1,256], index: 2, kind: input, shape index: {}]
  %s3 = inlined_call_operand.vmem [shape: bf16[128,256], index: 3, kind: output, shape index: {}]
  %s4 = sld [smem:[#allocation0]]
  $region30: #{smc_forward.10} parent=0
    _
  %s6 = ssub.s32 1, %s4
  %s7 = scalar_select 0, %s6, %s4
  // Predicated region
  $region2: #{smc_forward.10} parent=0 // pred_check
    _
  $region3: #{smc_forward.10} parent=0 // pred_check_branch
    %9 = sbr.rel (0) target = $region5
  $region4: #{smc_forward.10} parent=0 // pred_region
    _
  $region5: #{smc_forward.10} parent=0 // pred_fallthru
    _
  // Predicated region
  $region6: #{smc_forward.10} parent=0 // pred_check
    _
  $region7: #{smc_forward.10} parent=0 // pred_check_branch
    %11 = sbr.rel (0) target = $region9
  $region8: #{smc_forward.10} parent=0 // pred_region
    _
  $region9: #{smc_forward.10} parent=0 // pred_fallthru
    _
  // Predicated region
  $region10: #{smc_forward.10} parent=0 // pred_check
    _
  $region11: #{smc_forward.10} parent=0 // pred_check_branch
    %13 = sbr.rel (0) target = $region13
  $region12: #{smc_forward.10} parent=0 // pred_region
    _
  $region13: #{smc_forward.10} parent=0 // pred_fallthru
    _
  %p15 = scmp.eq.s32.totalorder 0, 0
  // Predicated region
  $region14: #{smc_forward.10} parent=0 // pred_check
    %p16 = pneg %p15
  $region15: #{smc_forward.10} parent=0 // pred_check_branch
    %18 = sbr.rel (%p16) target = $region17
  $region16: #{smc_forward.10} parent=0 // pred_region
    %19 = vst [vmem:[#allocation2] sm:$0xff] 0.0
    %20 = vst [vmem:[#allocation2 + $0x8] sm:$0xff] 0.0
    %21 = vst [vmem:[#allocation2 + $0x10] sm:$0xff] 0.0
    %22 = vst [vmem:[#allocation2 + $0x18] sm:$0xff] 0.0
    %23 = vst [vmem:[#allocation2 + $0x20] sm:$0xff] 0.0
    %24 = vst [vmem:[#allocation2 + $0x28] sm:$0xff] 0.0
    %25 = vst [vmem:[#allocation2 + $0x30] sm:$0xff] 0.0
    %26 = vst [vmem:[#allocation2 + $0x38] sm:$0xff] 0.0
    %27 = vst [vmem:[#allocation2 + $0x40] sm:$0xff] 0.0
    %28 = vst [vmem:[#allocation2 + $0x48] sm:$0xff] 0.0
    %29 = vst [vmem:[#allocation2 + $0x50] sm:$0xff] 0.0
    %30 = vst [vmem:[#allocation2 + $0x58] sm:$0xff] 0.0
    %31 = vst [vmem:[#allocation2 + $0x60] sm:$0xff] 0.0
    %32 = vst [vmem:[#allocation2 + $0x68] sm:$0xff] 0.0
    %33 = vst [vmem:[#allocation2 + $0x70] sm:$0xff] 0.0
    %34 = vst [vmem:[#allocation2 + $0x78] sm:$0xff] 0.0
    %35 = vst [vmem:[#allocation2 + $0x80] sm:$0xff] 0.0
    %36 = vst [vmem:[#allocation2 + $0x88] sm:$0xff] 0.0
    %37 = vst [vmem:[#allocation2 + $0x90] sm:$0xff] 0.0
    %38 = vst [vmem:[#allocation2 + $0x98] sm:$0xff] 0.0
    %39 = vst [vmem:[#allocation2 + $0xa0] sm:$0xff] 0.0
    %40 = vst [vmem:[#allocation2 + $0xa8] sm:$0xff] 0.0
    %41 = vst [vmem:[#allocation2 + $0xb0] sm:$0xff] 0.0
    %42 = vst [vmem:[#allocation2 + $0xb8] sm:$0xff] 0.0
    %43 = vst [vmem:[#allocation2 + $0xc0] sm:$0xff] 0.0
    %44 = vst [vmem:[#allocation2 + $0xc8] sm:$0xff] 0.0
    %45 = vst [vmem:[#allocation2 + $0xd0] sm:$0xff] 0.0
    %46 = vst [vmem:[#allocation2 + $0xd8] sm:$0xff] 0.0
    %47 = vst [vmem:[#allocation2 + $0xe0] sm:$0xff] 0.0
    %48 = vst [vmem:[#allocation2 + $0xe8] sm:$0xff] 0.0
    %49 = vst [vmem:[#allocation2 + $0xf0] sm:$0xff] 0.0
    %50 = vst [vmem:[#allocation2 + $0xf8] sm:$0xff] 0.0
  $region17: #{smc_forward.10} parent=0 // pred_fallthru
    _
  %v51 = vld [vmem:[#allocation2] sm:$0xff]
  %v52 = vld [vmem:[#allocation2 + $0x8] sm:$0xff]
  %v53 = vld [vmem:[#allocation2 + $0x10] sm:$0xff]
  %v54 = vld [vmem:[#allocation2 + $0x18] sm:$0xff]
  %v55 = vld [vmem:[#allocation2 + $0x20] sm:$0xff]
  %v56 = vld [vmem:[#allocation2 + $0x28] sm:$0xff]
  %v57 = vld [vmem:[#allocation2 + $0x30] sm:$0xff]
  %v58 = vld [vmem:[#allocation2 + $0x38] sm:$0xff]
  %v59 = vld [vmem:[#allocation2 + $0x40] sm:$0xff]
  %v60 = vld [vmem:[#allocation2 + $0x48] sm:$0xff]
  %v61 = vld [vmem:[#allocation2 + $0x50] sm:$0xff]
  %v62 = vld [vmem:[#allocation2 + $0x58] sm:$0xff]
  %v63 = vld [vmem:[#allocation2 + $0x60] sm:$0xff]
  %v64 = vld [vmem:[#allocation2 + $0x68] sm:$0xff]
  %v65 = vld [vmem:[#allocation2 + $0x70] sm:$0xff]
  %v66 = vld [vmem:[#allocation2 + $0x78] sm:$0xff]
  %v67 = vld [vmem:[#allocation2 + $0x80] sm:$0xff]
  %v68 = vld [vmem:[#allocation2 + $0x88] sm:$0xff]
  %v69 = vld [vmem:[#allocation2 + $0x90] sm:$0xff]
  %v70 = vld [vmem:[#allocation2 + $0x98] sm:$0xff]
  %v71 = vld [vmem:[#allocation2 + $0xa0] sm:$0xff]
  %v72 = vld [vmem:[#allocation2 + $0xa8] sm:$0xff]
  %v73 = vld [vmem:[#allocation2 + $0xb0] sm:$0xff]
  %v74 = vld [vmem:[#allocation2 + $0xb8] sm:$0xff]
  %v75 = vld [vmem:[#allocation2 + $0xc0] sm:$0xff]
  %v76 = vld [vmem:[#allocation2 + $0xc8] sm:$0xff]
  %v77 = vld [vmem:[#allocation2 + $0xd0] sm:$0xff]
  %v78 = vld [vmem:[#allocation2 + $0xd8] sm:$0xff]
  %v79 = vld [vmem:[#allocation2 + $0xe0] sm:$0xff]
  %v80 = vld [vmem:[#allocation2 + $0xe8] sm:$0xff]
  %v81 = vld [vmem:[#allocation2 + $0xf0] sm:$0xff]
  %v82 = vld [vmem:[#allocation2 + $0xf8] sm:$0xff]
  %v83 = vld [vmem:[%s0] sm:$0xf]
  %v84 = vld [vmem:[%s0 + $0x4] sm:$0xf]
  %v85 = vld [vmem:[%s0 + $0x8] sm:$0xf]
  %v86 = vld [vmem:[%s0 + $0xc] sm:$0xf]
  %v87 = vld [vmem:[%s0 + $0x10] sm:$0xf]
  %v88 = vld [vmem:[%s0 + $0x14] sm:$0xf]
  %v89 = vld [vmem:[%s0 + $0x18] sm:$0xf]
  %v90 = vld [vmem:[%s0 + $0x1c] sm:$0xf]
  %v91 = vld [vmem:[%s0 + $0x20] sm:$0xf]
  %v92 = vld [vmem:[%s0 + $0x24] sm:$0xf]
  %v93 = vld [vmem:[%s0 + $0x28] sm:$0xf]
  %v94 = vld [vmem:[%s0 + $0x2c] sm:$0xf]
  %v95 = vld [vmem:[%s0 + $0x30] sm:$0xf]
  %v96 = vld [vmem:[%s0 + $0x34] sm:$0xf]
  %v97 = vld [vmem:[%s0 + $0x38] sm:$0xf]
  %v98 = vld [vmem:[%s0 + $0x3c] sm:$0xf]
  %v99 = vld [vmem:[%s1] sm:$0xff]
  %v100 = vld [vmem:[%s1 + $0x8] sm:$0xff]
  %v101 = vld [vmem:[%s1 + $0x10] sm:$0xff]
  %v102 = vld [vmem:[%s1 + $0x18] sm:$0xff]
  %v103 = vld [vmem:[%s1 + $0x20] sm:$0xff]
  %v104 = vld [vmem:[%s1 + $0x28] sm:$0xff]
  %v105 = vld [vmem:[%s1 + $0x30] sm:$0xff]
  %v106 = vld [vmem:[%s1 + $0x38] sm:$0xff]
  %v107 = vld [vmem:[%s1 + $0x40] sm:$0xff]
  %v108 = vld [vmem:[%s1 + $0x48] sm:$0xff]
  %v109 = vld [vmem:[%s1 + $0x50] sm:$0xff]
  %v110 = vld [vmem:[%s1 + $0x58] sm:$0xff]
  %v111 = vld [vmem:[%s1 + $0x60] sm:$0xff]
  %v112 = vld [vmem:[%s1 + $0x68] sm:$0xff]
  %v113 = vld [vmem:[%s1 + $0x70] sm:$0xff]
  %v114 = vld [vmem:[%s1 + $0x78] sm:$0xff]
  %v131 = vunpack.c.l.b16 %v83
  %v132 = vunpack.c.l.b16 %v84
  %v133 = vunpack.c.l.b16 %v85
  %v134 = vunpack.c.l.b16 %v86
  %v135 = vunpack.c.l.b16 %v87
  %v136 = vunpack.c.l.b16 %v88
  %v137 = vunpack.c.l.b16 %v89
  %v138 = vunpack.c.l.b16 %v90
  %v139 = vunpack.c.l.b16 %v91
  %v140 = vunpack.c.l.b16 %v92
  %v141 = vunpack.c.l.b16 %v93
  %v142 = vunpack.c.l.b16 %v94
  %v143 = vunpack.c.l.b16 %v95
  %v144 = vunpack.c.l.b16 %v96
  %v145 = vunpack.c.l.b16 %v97
  %v146 = vunpack.c.l.b16 %v98
  %v147 = vpack.c.b16 %v132, %v131
  %v148 = vpack.c.b16 %v134, %v133
  %v149 = vpack.c.b16 %v136, %v135
  %v150 = vpack.c.b16 %v138, %v137
  %v151 = vpack.c.b16 %v140, %v139
  %v152 = vpack.c.b16 %v142, %v141
  %v153 = vpack.c.b16 %v144, %v143
  %v154 = vpack.c.b16 %v146, %v145
  %v179 = vunpack.c.l.b16 %v99
  %v180 = vunpack.c.h.b16 %v99
  %v181 = vunpack.c.l.b16 %v100
  %v182 = vunpack.c.h.b16 %v100
  %v183 = vunpack.c.l.b16 %v101
  %v184 = vunpack.c.h.b16 %v101
  %v185 = vunpack.c.l.b16 %v102
  %v186 = vunpack.c.h.b16 %v102
  %v187 = vunpack.c.l.b16 %v103
  %v188 = vunpack.c.h.b16 %v103
  %v189 = vunpack.c.l.b16 %v104
  %v190 = vunpack.c.h.b16 %v104
  %v191 = vunpack.c.l.b16 %v105
  %v192 = vunpack.c.h.b16 %v105
  %v193 = vunpack.c.l.b16 %v106
  %v194 = vunpack.c.h.b16 %v106
  %v195 = vunpack.c.l.b16 %v107
  %v196 = vunpack.c.h.b16 %v107
  %v197 = vunpack.c.l.b16 %v108
  %v198 = vunpack.c.h.b16 %v108
  %v199 = vunpack.c.l.b16 %v109
  %v200 = vunpack.c.h.b16 %v109
  %v201 = vunpack.c.l.b16 %v110
  %v202 = vunpack.c.h.b16 %v110
  %v203 = vunpack.c.l.b16 %v111
  %v204 = vunpack.c.h.b16 %v111
  %v205 = vunpack.c.l.b16 %v112
  %v206 = vunpack.c.h.b16 %v112
  %v207 = vunpack.c.l.b16 %v113
  %v208 = vunpack.c.h.b16 %v113
  %v209 = vunpack.c.l.b16 %v114
  %v210 = vunpack.c.h.b16 %v114
  %v211 = vpack.c.b16 %v181, %v179
  %v212 = vpack.c.b16 %v182, %v180
  %v213 = vpack.c.b16 %v185, %v183
  %v214 = vpack.c.b16 %v186, %v184
  %v215 = vpack.c.b16 %v189, %v187
  %v216 = vpack.c.b16 %v190, %v188
  %v217 = vpack.c.b16 %v193, %v191
  %v218 = vpack.c.b16 %v194, %v192
  %v219 = vpack.c.b16 %v197, %v195
  %v220 = vpack.c.b16 %v198, %v196
  %v221 = vpack.c.b16 %v201, %v199
  %v222 = vpack.c.b16 %v202, %v200
  %v223 = vpack.c.b16 %v205, %v203
  %v224 = vpack.c.b16 %v206, %v204
  %v225 = vpack.c.b16 %v209, %v207
  %v226 = vpack.c.b16 %v210, %v208
  %243 = vmatprep.subr.bf16.mxu0 %v212
  %244 = vmatpush1.bf16.msra.mxu0 %v211
  %245 = vmatprep.subr.bf16.mxu0 %v214
  %246 = vmatpush1.bf16.msra.mxu0 %v213
  %247 = vmatprep.subr.bf16.mxu0 %v216
  %248 = vmatpush1.bf16.msra.mxu0 %v215
  %249 = vmatprep.subr.bf16.mxu0 %v218
  %250 = vmatpush1.bf16.msra.mxu0 %v217
  %251 = vmatprep.subr.bf16.mxu0 %v220
  %252 = vmatpush1.bf16.msra.mxu0 %v219
  %253 = vmatprep.subr.bf16.mxu0 %v222
  %254 = vmatpush1.bf16.msra.mxu0 %v221
  %255 = vmatprep.subr.bf16.mxu0 %v224
  %256 = vmatpush1.bf16.msra.mxu0 %v223
  %257 = vmatprep.subr.bf16.mxu0 %v226
  %258 = vmatpush1.bf16.msra.mxu0 %v225
  %259 = vmatprep.subr.bf16.mxu0 0
  %260 = vmatpush1.bf16.msra.mxu0 0
  %261 = vmatprep.subr.bf16.mxu0 0
  %262 = vmatpush1.bf16.msra.mxu0 0
  %263 = vmatprep.subr.bf16.mxu0 0
  %264 = vmatpush1.bf16.msra.mxu0 0
  %265 = vmatprep.subr.bf16.mxu0 0
  %266 = vmatpush1.bf16.msra.mxu0 0
  %267 = vmatprep.subr.bf16.mxu0 0
  %268 = vmatpush1.bf16.msra.mxu0 0
  %269 = vmatprep.subr.bf16.mxu0 0
  %270 = vmatpush1.bf16.msra.mxu0 0
  %271 = vmatprep.subr.bf16.mxu0 0
  %272 = vmatpush1.bf16.msra.mxu0 0
  %273 = vmatprep.subr.bf16.mxu0 0
  %274 = vmatpush1.bf16.msra.mxu0 0
  %275 = vmatprep.mubr.bf16.mxu0 0
  %276 = vmatmul.mubr.bf16.gmra.mrb[0].mxu0 %v147
  %v277 = vpop.f32.mrb[0].mxu0
  %v278 = vadd.f32 0.0, %v277
  %v279 = vpop.f32.mrb[0].mxu0
  %v280 = vadd.f32 0.0, %v279
  %v281 = vpop.f32.mrb[0].mxu0
  %v282 = vadd.f32 0.0, %v281
  %v283 = vpop.f32.mrb[0].mxu0
  %v284 = vadd.f32 0.0, %v283
  %285 = vmatprep.mubr.bf16.mxu0 0
  %286 = vmatmul.mubr.bf16.gmra.mrb[0].mxu0 %v148
  %v287 = vpop.f32.mrb[0].mxu0
  %v288 = vadd.f32 0.0, %v287
  %v289 = vpop.f32.mrb[0].mxu0
  %v290 = vadd.f32 0.0, %v289
  %v291 = vpop.f32.mrb[0].mxu0
  %v292 = vadd.f32 0.0, %v291
  %v293 = vpop.f32.mrb[0].mxu0
  %v294 = vadd.f32 0.0, %v293
  %295 = vmatprep.mubr.bf16.mxu0 0
  %296 = vmatmul.mubr.bf16.gmra.mrb[0].mxu0 %v149
  %v297 = vpop.f32.mrb[0].mxu0
  %v298 = vadd.f32 0.0, %v297
  %v299 = vpop.f32.mrb[0].mxu0
  %v300 = vadd.f32 0.0, %v299
  %v301 = vpop.f32.mrb[0].mxu0
  %v302 = vadd.f32 0.0, %v301
  %v303 = vpop.f32.mrb[0].mxu0
  %v304 = vadd.f32 0.0, %v303
  %305 = vmatprep.mubr.bf16.mxu0 0
  %306 = vmatmul.mubr.bf16.gmra.mrb[0].mxu0 %v150
  %v307 = vpop.f32.mrb[0].mxu0
  %v308 = vadd.f32 0.0, %v307
  %v309 = vpop.f32.mrb[0].mxu0
  %v310 = vadd.f32 0.0, %v309
  %v311 = vpop.f32.mrb[0].mxu0
  %v312 = vadd.f32 0.0, %v311
  %v313 = vpop.f32.mrb[0].mxu0
  %v314 = vadd.f32 0.0, %v313
  %315 = vmatprep.mubr.bf16.mxu0 0
  %316 = vmatmul.mubr.bf16.gmra.mrb[0].mxu0 %v151
  %v317 = vpop.f32.mrb[0].mxu0
  %v318 = vadd.f32 0.0, %v317
  %v319 = vpop.f32.mrb[0].mxu0
  %v320 = vadd.f32 0.0, %v319
  %v321 = vpop.f32.mrb[0].mxu0
  %v322 = vadd.f32 0.0, %v321
  %v323 = vpop.f32.mrb[0].mxu0
  %v324 = vadd.f32 0.0, %v323
  %325 = vmatprep.mubr.bf16.mxu0 0
  %326 = vmatmul.mubr.bf16.gmra.mrb[0].mxu0 %v152
  %v327 = vpop.f32.mrb[0].mxu0
  %v328 = vadd.f32 0.0, %v327
  %v329 = vpop.f32.mrb[0].mxu0
  %v330 = vadd.f32 0.0, %v329
  %v331 = vpop.f32.mrb[0].mxu0
  %v332 = vadd.f32 0.0, %v331
  %v333 = vpop.f32.mrb[0].mxu0
  %v334 = vadd.f32 0.0, %v333
  %335 = vmatprep.mubr.bf16.mxu0 0
  %336 = vmatmul.mubr.bf16.gmra.mrb[0].mxu0 %v153
  %v337 = vpop.f32.mrb[0].mxu0
  %v338 = vadd.f32 0.0, %v337
  %v339 = vpop.f32.mrb[0].mxu0
  %v340 = vadd.f32 0.0, %v339
  %v341 = vpop.f32.mrb[0].mxu0
  %v342 = vadd.f32 0.0, %v341
  %v343 = vpop.f32.mrb[0].mxu0
  %v344 = vadd.f32 0.0, %v343
  %345 = vmatprep.mubr.bf16.mxu0 0
  %346 = vmatmul.mubr.bf16.gmra.mrb[0].mxu0 %v154
  %v347 = vpop.f32.mrb[0].mxu0
  %v348 = vadd.f32 0.0, %v347
  %v349 = vpop.f32.mrb[0].mxu0
  %v350 = vadd.f32 0.0, %v349
  %v351 = vpop.f32.mrb[0].mxu0
  %v352 = vadd.f32 0.0, %v351
  %v353 = vpop.f32.mrb[0].mxu0
  %v354 = vadd.f32 0.0, %v353
  %355 = vdwg.mxu0
  %v356 = vadd.f32 %v51, %v278
  %v357 = vadd.f32 %v52, %v280
  %v358 = vadd.f32 %v53, %v282
  %v359 = vadd.f32 %v54, %v284
  %v360 = vadd.f32 %v55, %v288
  %v361 = vadd.f32 %v56, %v290
  %v362 = vadd.f32 %v57, %v292
  %v363 = vadd.f32 %v58, %v294
  %v364 = vadd.f32 %v59, %v298
  %v365 = vadd.f32 %v60, %v300
  %v366 = vadd.f32 %v61, %v302
  %v367 = vadd.f32 %v62, %v304
  %v368 = vadd.f32 %v63, %v308
  %v369 = vadd.f32 %v64, %v310
  %v370 = vadd.f32 %v65, %v312
  %v371 = vadd.f32 %v66, %v314
  %v372 = vadd.f32 %v67, %v318
  %v373 = vadd.f32 %v68, %v320
  %v374 = vadd.f32 %v69, %v322
  %v375 = vadd.f32 %v70, %v324
  %v376 = vadd.f32 %v71, %v328
  %v377 = vadd.f32 %v72, %v330
  %v378 = vadd.f32 %v73, %v332
  %v379 = vadd.f32 %v74, %v334
  %v380 = vadd.f32 %v75, %v338
  %v381 = vadd.f32 %v76, %v340
  %v382 = vadd.f32 %v77, %v342
  %v383 = vadd.f32 %v78, %v344
  %v384 = vadd.f32 %v79, %v348
  %v385 = vadd.f32 %v80, %v350
  %v386 = vadd.f32 %v81, %v352
  %v387 = vadd.f32 %v82, %v354
  %388 = vst [vmem:[#allocation2] sm:$0xff] %v356
  %389 = vst [vmem:[#allocation2 + $0x8] sm:$0xff] %v357
  %390 = vst [vmem:[#allocation2 + $0x10] sm:$0xff] %v358
  %391 = vst [vmem:[#allocation2 + $0x18] sm:$0xff] %v359
  %392 = vst [vmem:[#allocation2 + $0x20] sm:$0xff] %v360
  %393 = vst [vmem:[#allocation2 + $0x28] sm:$0xff] %v361
  %394 = vst [vmem:[#allocation2 + $0x30] sm:$0xff] %v362
  %395 = vst [vmem:[#allocation2 + $0x38] sm:$0xff] %v363
  %396 = vst [vmem:[#allocation2 + $0x40] sm:$0xff] %v364
  %397 = vst [vmem:[#allocation2 + $0x48] sm:$0xff] %v365
  %398 = vst [vmem:[#allocation2 + $0x50] sm:$0xff] %v366
  %399 = vst [vmem:[#allocation2 + $0x58] sm:$0xff] %v367
  %400 = vst [vmem:[#allocation2 + $0x60] sm:$0xff] %v368
  %401 = vst [vmem:[#allocation2 + $0x68] sm:$0xff] %v369
  %402 = vst [vmem:[#allocation2 + $0x70] sm:$0xff] %v370
  %403 = vst [vmem:[#allocation2 + $0x78] sm:$0xff] %v371
  %404 = vst [vmem:[#allocation2 + $0x80] sm:$0xff] %v372
  %405 = vst [vmem:[#allocation2 + $0x88] sm:$0xff] %v373
  %406 = vst [vmem:[#allocation2 + $0x90] sm:$0xff] %v374
  %407 = vst [vmem:[#allocation2 + $0x98] sm:$0xff] %v375
  %408 = vst [vmem:[#allocation2 + $0xa0] sm:$0xff] %v376
  %409 = vst [vmem:[#allocation2 + $0xa8] sm:$0xff] %v377
  %410 = vst [vmem:[#allocation2 + $0xb0] sm:$0xff] %v378
  %411 = vst [vmem:[#allocation2 + $0xb8] sm:$0xff] %v379
  %412 = vst [vmem:[#allocation2 + $0xc0] sm:$0xff] %v380
  %413 = vst [vmem:[#allocation2 + $0xc8] sm:$0xff] %v381
  %414 = vst [vmem:[#allocation2 + $0xd0] sm:$0xff] %v382
  %415 = vst [vmem:[#allocation2 + $0xd8] sm:$0xff] %v383
  %416 = vst [vmem:[#allocation2 + $0xe0] sm:$0xff] %v384
  %417 = vst [vmem:[#allocation2 + $0xe8] sm:$0xff] %v385
  %418 = vst [vmem:[#allocation2 + $0xf0] sm:$0xff] %v386
  %419 = vst [vmem:[#allocation2 + $0xf8] sm:$0xff] %v387
  // Predicated region
  $region18: #{smc_forward.10} parent=0 // pred_check
    %p420 = pneg %p15
  $region19: #{smc_forward.10} parent=0 // pred_check_branch
    %422 = sbr.rel (%p420) target = $region21
  $region20: #{smc_forward.10} parent=0 // pred_region
    %v423 = vld [vmem:[#allocation2] sm:$0xff]
    %v424 = vld [vmem:[#allocation2 + $0x8] sm:$0xff]
    %v425 = vld [vmem:[#allocation2 + $0x10] sm:$0xff]
    %v426 = vld [vmem:[#allocation2 + $0x18] sm:$0xff]
    %v427 = vld [vmem:[#allocation2 + $0x20] sm:$0xff]
    %v428 = vld [vmem:[#allocation2 + $0x28] sm:$0xff]
    %v429 = vld [vmem:[#allocation2 + $0x30] sm:$0xff]
    %v430 = vld [vmem:[#allocation2 + $0x38] sm:$0xff]
    %v431 = vld [vmem:[#allocation2 + $0x40] sm:$0xff]
    %v432 = vld [vmem:[#allocation2 + $0x48] sm:$0xff]
    %v433 = vld [vmem:[#allocation2 + $0x50] sm:$0xff]
    %v434 = vld [vmem:[#allocation2 + $0x58] sm:$0xff]
    %v435 = vld [vmem:[#allocation2 + $0x60] sm:$0xff]
    %v436 = vld [vmem:[#allocation2 + $0x68] sm:$0xff]
    %v437 = vld [vmem:[#allocation2 + $0x70] sm:$0xff]
    %v438 = vld [vmem:[#allocation2 + $0x78] sm:$0xff]
    %v439 = vld [vmem:[#allocation2 + $0x80] sm:$0xff]
    %v440 = vld [vmem:[#allocation2 + $0x88] sm:$0xff]
    %v441 = vld [vmem:[#allocation2 + $0x90] sm:$0xff]
    %v442 = vld [vmem:[#allocation2 + $0x98] sm:$0xff]
    %v443 = vld [vmem:[#allocation2 + $0xa0] sm:$0xff]
    %v444 = vld [vmem:[#allocation2 + $0xa8] sm:$0xff]
    %v445 = vld [vmem:[#allocation2 + $0xb0] sm:$0xff]
    %v446 = vld [vmem:[#allocation2 + $0xb8] sm:$0xff]
    %v447 = vld [vmem:[#allocation2 + $0xc0] sm:$0xff]
    %v448 = vld [vmem:[#allocation2 + $0xc8] sm:$0xff]
    %v449 = vld [vmem:[#allocation2 + $0xd0] sm:$0xff]
    %v450 = vld [vmem:[#allocation2 + $0xd8] sm:$0xff]
    %v451 = vld [vmem:[#allocation2 + $0xe0] sm:$0xff]
    %v452 = vld [vmem:[#allocation2 + $0xe8] sm:$0xff]
    %v453 = vld [vmem:[#allocation2 + $0xf0] sm:$0xff]
    %v454 = vld [vmem:[#allocation2 + $0xf8] sm:$0xff]
    %v455 = vld [vmem:[%s2] sm:$0x3]
    %v457 = vlaneseq
    %v458 = vshrl.u32 %v457, 7
    %v459 = vsub.s32 0, %v458
    %v460 = vrot.slane %v455, %v459
    %v461 = vlaneseq
    %v462 = vshrl.u32 %v461, 7
    %v463 = vsub.s32 1, %v462
    %v464 = vrot.slane %v455, %v463
    %v467 = vadd.f32 %v423, %v460
    %v468 = vadd.f32 %v424, %v464
    %v469 = vadd.f32 %v425, %v460
    %v470 = vadd.f32 %v426, %v464
    %v471 = vadd.f32 %v427, %v460
    %v472 = vadd.f32 %v428, %v464
    %v473 = vadd.f32 %v429, %v460
    %v474 = vadd.f32 %v430, %v464
    %v475 = vadd.f32 %v431, %v460
    %v476 = vadd.f32 %v432, %v464
    %v477 = vadd.f32 %v433, %v460
    %v478 = vadd.f32 %v434, %v464
    %v479 = vadd.f32 %v435, %v460
    %v480 = vadd.f32 %v436, %v464
    %v481 = vadd.f32 %v437, %v460
    %v482 = vadd.f32 %v438, %v464
    %v483 = vadd.f32 %v439, %v460
    %v484 = vadd.f32 %v440, %v464
    %v485 = vadd.f32 %v441, %v460
    %v486 = vadd.f32 %v442, %v464
    %v487 = vadd.f32 %v443, %v460
    %v488 = vadd.f32 %v444, %v464
    %v489 = vadd.f32 %v445, %v460
    %v490 = vadd.f32 %v446, %v464
    %v491 = vadd.f32 %v447, %v460
    %v492 = vadd.f32 %v448, %v464
    %v493 = vadd.f32 %v449, %v460
    %v494 = vadd.f32 %v450, %v464
    %v495 = vadd.f32 %v451, %v460
    %v496 = vadd.f32 %v452, %v464
    %v497 = vadd.f32 %v453, %v460
    %v498 = vadd.f32 %v454, %v464
    %v499 = vmax.f32 %v467, 0.0
    %v500 = vmax.f32 %v468, 0.0
    %v501 = vmax.f32 %v469, 0.0
    %v502 = vmax.f32 %v470, 0.0
    %v503 = vmax.f32 %v471, 0.0
    %v504 = vmax.f32 %v472, 0.0
    %v505 = vmax.f32 %v473, 0.0
    %v506 = vmax.f32 %v474, 0.0
    %v507 = vmax.f32 %v475, 0.0
    %v508 = vmax.f32 %v476, 0.0
    %v509 = vmax.f32 %v477, 0.0
    %v510 = vmax.f32 %v478, 0.0
    %v511 = vmax.f32 %v479, 0.0
    %v512 = vmax.f32 %v480, 0.0
    %v513 = vmax.f32 %v481, 0.0
    %v514 = vmax.f32 %v482, 0.0
    %v515 = vmax.f32 %v483, 0.0
    %v516 = vmax.f32 %v484, 0.0
    %v517 = vmax.f32 %v485, 0.0
    %v518 = vmax.f32 %v486, 0.0
    %v519 = vmax.f32 %v487, 0.0
    %v520 = vmax.f32 %v488, 0.0
    %v521 = vmax.f32 %v489, 0.0
    %v522 = vmax.f32 %v490, 0.0
    %v523 = vmax.f32 %v491, 0.0
    %v524 = vmax.f32 %v492, 0.0
    %v525 = vmax.f32 %v493, 0.0
    %v526 = vmax.f32 %v494, 0.0
    %v527 = vmax.f32 %v495, 0.0
    %v528 = vmax.f32 %v496, 0.0
    %v529 = vmax.f32 %v497, 0.0
    %v530 = vmax.f32 %v498, 0.0
    %v531 = vpack.c.bf16 %v501, %v499
    %v532 = vpack.c.bf16 %v502, %v500
    %v533 = vpack.c.bf16 %v505, %v503
    %v534 = vpack.c.bf16 %v506, %v504
    %v535 = vpack.c.bf16 %v509, %v507
    %v536 = vpack.c.bf16 %v510, %v508
    %v537 = vpack.c.bf16 %v513, %v511
    %v538 = vpack.c.bf16 %v514, %v512
    %v539 = vpack.c.bf16 %v517, %v515
    %v540 = vpack.c.bf16 %v518, %v516
    %v541 = vpack.c.bf16 %v521, %v519
    %v542 = vpack.c.bf16 %v522, %v520
    %v543 = vpack.c.bf16 %v525, %v523
    %v544 = vpack.c.bf16 %v526, %v524
    %v545 = vpack.c.bf16 %v529, %v527
    %v546 = vpack.c.bf16 %v530, %v528
    %v563 = vunpack.c.l.b16 %v531
    %v564 = vunpack.c.l.b16 %v532
    %v565 = vunpack.c.h.b16 %v531
    %v566 = vunpack.c.h.b16 %v532
    %v567 = vunpack.c.l.b16 %v533
    %v568 = vunpack.c.l.b16 %v534
    %v569 = vunpack.c.h.b16 %v533
    %v570 = vunpack.c.h.b16 %v534
    %v571 = vunpack.c.l.b16 %v535
    %v572 = vunpack.c.l.b16 %v536
    %v573 = vunpack.c.h.b16 %v535
    %v574 = vunpack.c.h.b16 %v536
    %v575 = vunpack.c.l.b16 %v537
    %v576 = vunpack.c.l.b16 %v538
    %v577 = vunpack.c.h.b16 %v537
    %v578 = vunpack.c.h.b16 %v538
    %v579 = vunpack.c.l.b16 %v539
    %v580 = vunpack.c.l.b16 %v540
    %v581 = vunpack.c.h.b16 %v539
    %v582 = vunpack.c.h.b16 %v540
    %v583 = vunpack.c.l.b16 %v541
    %v584 = vunpack.c.l.b16 %v542
    %v585 = vunpack.c.h.b16 %v541
    %v586 = vunpack.c.h.b16 %v542
    %v587 = vunpack.c.l.b16 %v543
    %v588 = vunpack.c.l.b16 %v544
    %v589 = vunpack.c.h.b16 %v543
    %v590 = vunpack.c.h.b16 %v544
    %v591 = vunpack.c.l.b16 %v545
    %v592 = vunpack.c.l.b16 %v546
    %v593 = vunpack.c.h.b16 %v545
    %v594 = vunpack.c.h.b16 %v546
    %v595 = vpack.c.b16 %v564, %v563
    %v596 = vpack.c.b16 %v566, %v565
    %v597 = vpack.c.b16 %v568, %v567
    %v598 = vpack.c.b16 %v570, %v569
    %v599 = vpack.c.b16 %v572, %v571
    %v600 = vpack.c.b16 %v574, %v573
    %v601 = vpack.c.b16 %v576, %v575
    %v602 = vpack.c.b16 %v578, %v577
    %v603 = vpack.c.b16 %v580, %v579
    %v604 = vpack.c.b16 %v582, %v581
    %v605 = vpack.c.b16 %v584, %v583
    %v606 = vpack.c.b16 %v586, %v585
    %v607 = vpack.c.b16 %v588, %v587
    %v608 = vpack.c.b16 %v590, %v589
    %v609 = vpack.c.b16 %v592, %v591
    %v610 = vpack.c.b16 %v594, %v593
    %627 = vst [vmem:[%s3] sm:$0xff] %v595
    %628 = vst [vmem:[%s3 + $0x8] sm:$0xff] %v596
    %629 = vst [vmem:[%s3 + $0x10] sm:$0xff] %v597
    %630 = vst [vmem:[%s3 + $0x18] sm:$0xff] %v598
    %631 = vst [vmem:[%s3 + $0x20] sm:$0xff] %v599
    %632 = vst [vmem:[%s3 + $0x28] sm:$0xff] %v600
    %633 = vst [vmem:[%s3 + $0x30] sm:$0xff] %v601
    %634 = vst [vmem:[%s3 + $0x38] sm:$0xff] %v602
    %635 = vst [vmem:[%s3 + $0x40] sm:$0xff] %v603
    %636 = vst [vmem:[%s3 + $0x48] sm:$0xff] %v604
    %637 = vst [vmem:[%s3 + $0x50] sm:$0xff] %v605
    %638 = vst [vmem:[%s3 + $0x58] sm:$0xff] %v606
    %639 = vst [vmem:[%s3 + $0x60] sm:$0xff] %v607
    %640 = vst [vmem:[%s3 + $0x68] sm:$0xff] %v608
    %641 = vst [vmem:[%s3 + $0x70] sm:$0xff] %v609
    %642 = vst [vmem:[%s3 + $0x78] sm:$0xff] %v610
  $region21: #{smc_forward.10} parent=0 // pred_fallthru
    _
  // Predicated region
  $region22: #{smc_forward.10} parent=0 // pred_check
    _
  $region23: #{smc_forward.10} parent=0 // pred_check_branch
    %644 = sbr.rel (0) target = $region25
  $region24: #{smc_forward.10} parent=0 // pred_region
    _
  $region25: #{smc_forward.10} parent=0 // pred_fallthru
    _
  // Predicated region
  $region26: #{smc_forward.10} parent=0 // pred_check
    _
  $region27: #{smc_forward.10} parent=0 // pred_check_branch
    %646 = sbr.rel (0) target = $region29
  $region28: #{smc_forward.10} parent=0 // pred_region
    _
  $region29: #{smc_forward.10} parent=0 // pred_fallthru
    _

// kernel: smc_forward.8
$region0: #{smc_forward.8}
  #allocation0 [shape = 'u32[]', space=smem, size = 0x4, offset = 0x4, fixed_abs, tag = 'smem constant byte address 0x4 - core index']
  #allocation1 [shape = 'u32[144,128]{1,0:T(1,128)}', space=vmem, size = 0x12000, scoped, tag = 'internal scratch']
  #allocation2 [shape = 'f32[16,128]{1,0:T(8,128)}', space=vmem, size = 0x2000, scoped, tag = 'scratch operand']
  %s0 = inlined_call_operand.vmem [shape: bf16[16,640], index: 0, kind: input, shape index: {}]
  %s1 = inlined_call_operand.vmem [shape: bf16[640,128], index: 1, kind: input, shape index: {}]
  %s2 = inlined_call_operand.vmem [shape: f32[1,128], index: 2, kind: input, shape index: {}]
  %s3 = inlined_call_operand.vmem [shape: bf16[16,128], index: 3, kind: output, shape index: {}]
  %s4 = sld [smem:[#allocation0]]
  $region94: #{smc_forward.8} parent=0
    _
  %s6 = ssub.s32 1, %s4
  %s7 = scalar_select 0, %s6, %s4
  $region1: #{smc_forward.8} parent=0
    #allocation3 [shape = 'u8[8192]{0}', space=vmem, size = 0x2000, scoped, tag = 'input window, operand 0']
    loop: start=0, step=1, limit=7
    $region2: #{smc_forward.8} parent=1 // loop_pre_header
      _
    $region3: #{smc_forward.8} parent=1 // loop_header
      %s9 = sphi 0, %s13
      %p10 = scmp.ge.s32.totalorder %s9, 7
      %s16 = sphi 0, %s35
      %s17 = sphi 0, %s31
      %s18 = sphi 0, %s27
      %s19 = sphi 0, %s16
      %s20 = sphi 0, %s17
      %s21 = sphi 0, %s18
      %s22 = sphi 0, %s19
      %s23 = sphi 0, %s20
      %s24 = sphi 0, %s21
      %s40 = sphi 0, %s42
      %s43 = sphi 0, %s40
      %s44 = sphi 0, %s43
      %s60 = sphi 0, %s44
      %s68 = sphi 0, %s70
      %s71 = sphi 0, %s68
      %s72 = sphi 0, %s71
      %s88 = sphi 0, %s72
      %s94 = sphi 0, %s96
      %s97 = sphi 0, %s94
      %s98 = sphi 0, %s97
      %s114 = sphi 0, %s98
      %s122 = sphi 0, %s124
      %s125 = sphi 0, %s122
      %s126 = sphi 0, %s125
      %s142 = sphi 0, %s126
    $region4: #{smc_forward.8} parent=1 // loop_header_branch
      %12 = sbr.rel (%p10) target = $region8
    $region5: #{smc_forward.8} parent=1 // loop_body
      %s14 = ssub.s32 %s9, 1
      %s15 = ssub.s32 %s9, 2
      %s25 = sadd.s32 1, %s18
      %p26 = scmp.ge.s32.totalorder %s25, 5
      %s27 = scalar_select %p26, 0, %s25
      %s28 = sadd.s32 1, %s17
      %s29 = scalar_select %p26, %s28, %s17
      %p30 = scmp.ge.s32.totalorder %s29, 1
      %s31 = scalar_select %p30, 0, %s29
      %s32 = sadd.s32 1, %s16
      %s33 = scalar_select %p30, %s32, %s16
      %p34 = scmp.ge.s32.totalorder %s33, 1
      %s35 = scalar_select %p34, 0, %s33
      %s36 = ssub.s32 %s16, %s35
      %s37 = ssub.s32 %s18, %s27
      %s38 = sor.u32 %s36, %s37
      %p39 = scmp.eq.s32.totalorder %s38, 0
      %s41 = sadd.s32 %s40, 1
      %s42 = scalar_select %p39, %s40, %s41
      %p45 = pneg %p39
      %p46 = scmp.eq.s32.totalorder %s9, 4
      %p47 = por %p45, %p46
      %p48 = scmp.ne.s32.totalorder %s40, %s43
      %p49 = scmp.eq.s32.totalorder %s9, 0
      %p50 = por %p48, %p49
      %p51 = scmp.ne.s32.totalorder %s40, %s43
      %p52 = scmp.eq.s32.totalorder %s14, 4
      %p53 = por %p51, %p52
      %p54 = scmp.ne.s32.totalorder %s43, %s44
      %p55 = scmp.eq.s32.totalorder %s14, 0
      %p56 = por %p54, %p55
      %p57 = scmp.ne.s32.totalorder %s43, %s44
      %p58 = scmp.eq.s32.totalorder %s15, 4
      %p59 = por %p57, %p58
      %p61 = scmp.ne.s32.totalorder %s44, %s60
      %p62 = scmp.eq.s32.totalorder %s15, 0
      %p63 = por %p61, %p62
      %s64 = ssub.s32 %s18, %s27
      %s65 = ssub.s32 %s17, %s31
      %s66 = sor.u32 %s64, %s65
      %p67 = scmp.eq.s32.totalorder %s66, 0
      %s69 = sadd.s32 %s68, 1
      %s70 = scalar_select %p67, %s68, %s69
      %p73 = pneg %p67
      %p74 = scmp.eq.s32.totalorder %s9, 4
      %p75 = por %p73, %p74
      %p76 = scmp.ne.s32.totalorder %s68, %s71
      %p77 = scmp.eq.s32.totalorder %s9, 0
      %p78 = por %p76, %p77
      %p79 = scmp.ne.s32.totalorder %s68, %s71
      %p80 = scmp.eq.s32.totalorder %s14, 4
      %p81 = por %p79, %p80
      %p82 = scmp.ne.s32.totalorder %s71, %s72
      %p83 = scmp.eq.s32.totalorder %s14, 0
      %p84 = por %p82, %p83
      %p85 = scmp.ne.s32.totalorder %s71, %s72
      %p86 = scmp.eq.s32.totalorder %s15, 4
      %p87 = por %p85, %p86
      %p89 = scmp.ne.s32.totalorder %s72, %s88
      %p90 = scmp.eq.s32.totalorder %s15, 0
      %p91 = por %p89, %p90
      %s92 = ssub.s32 %s17, %s31
      %p93 = scmp.eq.s32.totalorder %s92, 0
      %s95 = sadd.s32 %s94, 1
      %s96 = scalar_select %p93, %s94, %s95
      %p99 = pneg %p93
      %p100 = scmp.eq.s32.totalorder %s9, 4
      %p101 = por %p99, %p100
      %p102 = scmp.ne.s32.totalorder %s94, %s97
      %p103 = scmp.eq.s32.totalorder %s9, 0
      %p104 = por %p102, %p103
      %p105 = scmp.ne.s32.totalorder %s94, %s97
      %p106 = scmp.eq.s32.totalorder %s14, 4
      %p107 = por %p105, %p106
      %p108 = scmp.ne.s32.totalorder %s97, %s98
      %p109 = scmp.eq.s32.totalorder %s14, 0
      %p110 = por %p108, %p109
      %p111 = scmp.ne.s32.totalorder %s97, %s98
      %p112 = scmp.eq.s32.totalorder %s15, 4
      %p113 = por %p111, %p112
      %p115 = scmp.ne.s32.totalorder %s98, %s114
      %p116 = scmp.eq.s32.totalorder %s15, 0
      %p117 = por %p115, %p116
      %s118 = ssub.s32 %s16, %s35
      %s119 = ssub.s32 %s17, %s31
      %s120 = sor.u32 %s118, %s119
      %p121 = scmp.eq.s32.totalorder %s120, 0
      %s123 = sadd.s32 %s122, 1
      %s124 = scalar_select %p121, %s122, %s123
      %p127 = pneg %p121
      %p128 = scmp.eq.s32.totalorder %s9, 4
      %p129 = por %p127, %p128
      %p130 = scmp.ne.s32.totalorder %s122, %s125
      %p131 = scmp.eq.s32.totalorder %s9, 0
      %p132 = por %p130, %p131
      %p133 = scmp.ne.s32.totalorder %s122, %s125
      %p134 = scmp.eq.s32.totalorder %s14, 4
      %p135 = por %p133, %p134
      %p136 = scmp.ne.s32.totalorder %s125, %s126
      %p137 = scmp.eq.s32.totalorder %s14, 0
      %p138 = por %p136, %p137
      %p139 = scmp.ne.s32.totalorder %s125, %s126
      %p140 = scmp.eq.s32.totalorder %s15, 4
      %p141 = por %p139, %p140
      %p143 = scmp.ne.s32.totalorder %s126, %s142
      %p144 = scmp.eq.s32.totalorder %s15, 0
      %p145 = por %p143, %p144
      %p146 = scmp.le.s32.totalorder 1, %s9
      %p147 = scmp.lt.s32.totalorder %s9, 6
      %p148 = pnand %p146, %p147
      %p149 = pneg %p148
      // Predicated region
      $region9: #{smc_forward.8} parent=5 // pred_check
        _
      $region10: #{smc_forward.8} parent=5 // pred_check_branch
        %151 = sbr.rel (%p148) target = $region12
      $region11: #{smc_forward.8} parent=5 // pred_region
        %s152 = ssub.s32 %s9, 1
        // Predicated region
        $region13: #{smc_forward.8} parent=11 // pred_check
          %p153 = pneg %p110
        $region14: #{smc_forward.8} parent=11 // pred_check_branch
          %155 = sbr.rel (%p153) target = $region16
        $region15: #{smc_forward.8} parent=11 // pred_region
          %p156 = scmp.lt.s32.totalorder %s20, 0
          %s157 = scalar_select %p156, %s20, 0
          %s158 = scalar_lea.vmem %s2, %s157
        $region16: #{smc_forward.8} parent=11 // pred_fallthru
          _
      $region12: #{smc_forward.8} parent=5 // pred_fallthru
        _
      %p159 = scmp.lt.s32.totalorder %s9, 5
      // Predicated region
      $region17: #{smc_forward.8} parent=5 // pred_check
        %p160 = pneg %p159
      $region18: #{smc_forward.8} parent=5 // pred_check_branch
        %162 = sbr.rel (%p160) target = $region20
      $region19: #{smc_forward.8} parent=5 // pred_region
        // Predicated region
        $region21: #{smc_forward.8} parent=19 // pred_check
          %p163 = pneg %p50
        $region22: #{smc_forward.8} parent=19 // pred_check_branch
          %165 = sbr.rel (%p163) target = $region24
        $region23: #{smc_forward.8} parent=19 // pred_region
          %s166 = sand.u32 %s40, 1
          %s167 = sand.u32 %s40, 1
          %s168 = smul.addr %s167, 8
          %s169 = scalar_lea.vmem [#allocation3], %s168
          %s170 = smul.u32 2, %s16
          %s171 = smul.addr %s170, 5
          %s172 = sadd.s32 %s18, %s171
          %s173 = smul.addr %s172, 4
          %s174 = scalar_lea.vmem %s0, %s173
          // Predicated region
          $region25: #{smc_forward.8} parent=23 // pred_check
            _
          $region26: #{smc_forward.8} parent=23 // pred_check_branch
            %176 = sbr.rel (0) target = $region28
          $region27: #{smc_forward.8} parent=23 // pred_region
            // Predicated region
            $region29: #{smc_forward.8} parent=27 // pred_check
              _
            $region30: #{smc_forward.8} parent=27 // pred_check_branch
              %178 = sbr.rel target = $region32
            $region31: #{smc_forward.8} parent=27 // pred_region
              // Predicated region
              $region44: #{smc_forward.8} parent=31 // pred_check
                _
              $region45: #{smc_forward.8} parent=31 // pred_check_branch
                %195 = sbr.rel (0) target = $region47
              $region46: #{smc_forward.8} parent=31 // pred_region
                loop: start=0, step=1, limit=1
                $region48: #{smc_forward.8} parent=46 // loop_pre_header
                  _
                $region49: #{smc_forward.8} parent=46 // loop_header
                  %s197 = sphi 0, %s201
                  %p198 = scmp.ge.s32.totalorder %s197, 1
                  %s202 = sphi %s174, %s174
                  %s203 = sphi %s169, %s169
                $region50: #{smc_forward.8} parent=46 // loop_header_branch
                  %200 = sbr.rel (%p198) target = $region54
                $region51: #{smc_forward.8} parent=46 // loop_body
                  _
                $region52: #{smc_forward.8} parent=46 // loop_footer
                  %s201 = sadd.s32 1, %s197
                $region53: #{smc_forward.8} parent=46 // loop_footer_branch
                  %196 = sbr.rel target = $region49
                $region54: #{smc_forward.8} parent=46 // loop_exit
                  _
                loop: start=0, step=1, limit=1
                $region55: #{smc_forward.8} parent=46 // loop_pre_header
                  _
                $region56: #{smc_forward.8} parent=46 // loop_header
                  %s206 = sphi 0, %s210
                  %p207 = scmp.ge.s32.totalorder %s206, 1
                  %s211 = sphi %s174, %s174
                  %s212 = sphi %s169, %s169
                $region57: #{smc_forward.8} parent=46 // loop_header_branch
                  %209 = sbr.rel (%p207) target = $region61
                $region58: #{smc_forward.8} parent=46 // loop_body
                  %v213 = vld [vmem:[%s211] sm:$0xf]
                  %214 = vst [vmem:[%s212] sm:$0xf] %v213
                  %v215 = vld [vmem:[%s211 + $0x14] sm:$0xf]
                  %216 = vst [vmem:[%s212 + $0x4] sm:$0xf] %v215
                $region59: #{smc_forward.8} parent=46 // loop_footer
                  %s210 = sadd.s32 1, %s206
                $region60: #{smc_forward.8} parent=46 // loop_footer_branch
                  %205 = sbr.rel target = $region56
                $region61: #{smc_forward.8} parent=46 // loop_exit
                  _
              $region47: #{smc_forward.8} parent=31 // pred_fallthru
                _
            $region32: #{smc_forward.8} parent=27 // pred_fallthru
              _
            // Predicated region
            $region33: #{smc_forward.8} parent=27 // pred_check
              _
            $region34: #{smc_forward.8} parent=27 // pred_check_branch
              %180 = sbr.rel (0) target = $region36
            $region35: #{smc_forward.8} parent=27 // pred_region
              loop: start=0, step=1, limit=1
              $region37: #{smc_forward.8} parent=35 // loop_pre_header
                _
              $region38: #{smc_forward.8} parent=35 // loop_header
                %s183 = sphi 0, %s187
                %p184 = scmp.ge.s32.totalorder %s183, 1
                %s188 = sphi %s174, %s174
                %s189 = sphi %s169, %s169
              $region39: #{smc_forward.8} parent=35 // loop_header_branch
                %186 = sbr.rel (%p184) target = $region43
              $region40: #{smc_forward.8} parent=35 // loop_body
                %v190 = vld [vmem:[%s188] sm:$0xf]
                %191 = vst [vmem:[%s189] sm:$0xf] %v190
                %v192 = vld [vmem:[%s188 + $0x14] sm:$0xf]
                %193 = vst [vmem:[%s189 + $0x4] sm:$0xf] %v192
              $region41: #{smc_forward.8} parent=35 // loop_footer
                %s187 = sadd.s32 1, %s183
              $region42: #{smc_forward.8} parent=35 // loop_footer_branch
                %182 = sbr.rel target = $region38
              $region43: #{smc_forward.8} parent=35 // loop_exit
                _
            $region36: #{smc_forward.8} parent=27 // pred_fallthru
              _
          $region28: #{smc_forward.8} parent=23 // pred_fallthru
            _
          %217 = vnop
        $region24: #{smc_forward.8} parent=19 // pred_fallthru
          _
        // Predicated region
        $region62: #{smc_forward.8} parent=19 // pred_check
          %p218 = pneg %p78
        $region63: #{smc_forward.8} parent=19 // pred_check_branch
          %220 = sbr.rel (%p218) target = $region65
        $region64: #{smc_forward.8} parent=19 // pred_region
          %s221 = smul.u32 16, %s18
          %p222 = scmp.lt.s32.totalorder %s221, 79
          %s223 = scalar_select %p222, %s221, 79
          %p224 = scmp.lt.s32.totalorder %s17, 0
          %s225 = scalar_select %p224, %s17, 0
          %s226 = sadd.s32 %s225, %s223
          %s227 = smul.addr %s226, 4
          %s228 = scalar_lea.vmem %s1, %s227
          %s229 = smul.u32 16, %s18
        $region65: #{smc_forward.8} parent=19 // pred_fallthru
          _
      $region20: #{smc_forward.8} parent=5 // pred_fallthru
        _
      %p230 = scmp.le.s32.totalorder 1, %s9
      %p231 = scmp.lt.s32.totalorder %s9, 6
      %p232 = pnand %p230, %p231
      %p233 = pneg %p232
      // Predicated region
      $region66: #{smc_forward.8} parent=5 // pred_check
        _
      $region67: #{smc_forward.8} parent=5 // pred_check_branch
        %235 = sbr.rel (%p232) target = $region69
      $region68: #{smc_forward.8} parent=5 // pred_region
        %s236 = ssub.s32 %s9, 1
        %s237 = sand.u32 %s43, 1
        %s238 = sand.u32 %s43, 1
        %s239 = smul.addr %s238, 8
        %s240 = scalar_lea.vmem [#allocation3], %s239
        // Predicated region
        $region70: #{smc_forward.8} parent=68 // pred_check
          %p241 = pneg %p56
        $region71: #{smc_forward.8} parent=68 // pred_check_branch
          %243 = sbr.rel (%p241) target = $region73
        $region72: #{smc_forward.8} parent=68 // pred_region
          _
        $region73: #{smc_forward.8} parent=68 // pred_fallthru
          _
        %s244 = sand.u32 %s43, 1
        %s245 = sand.u32 %s43, 1
        %s246 = smul.addr %s245, 8
        %s247 = scalar_lea.vmem [#allocation3], %s246
        %p248 = pneg %p56
        %p249 = pneg %p53
        %s250 = smul.u32 16, %s21
        %p251 = scmp.lt.s32.totalorder %s250, 79
        %s252 = scalar_select %p251, %s250, 79
        %p253 = scmp.lt.s32.totalorder %s20, 0
        %s254 = scalar_select %p253, %s20, 0
        %s255 = sadd.s32 %s254, %s252
        %s256 = smul.addr %s255, 4
        %s257 = scalar_lea.vmem %s1, %s256
        %p258 = pneg %p84
        %p259 = pneg %p81
        %p260 = scmp.lt.s32.totalorder %s20, 0
        %s261 = scalar_select %p260, %s20, 0
        %s262 = scalar_lea.vmem %s2, %s261
        %p263 = pneg %p110
        %p264 = pneg %p107
        %p265 = pneg %p138
        %p266 = pneg %p135
        %s267 = smul.u32 2, %s19
        %p268 = scmp.lt.s32.totalorder %s267, 1
        %s269 = scalar_select %p268, %s267, 1
        %p270 = scmp.lt.s32.totalorder %s20, 0
        %s271 = scalar_select %p270, %s20, 0
        %s272 = sadd.s32 %s271, %s269
        %s273 = smul.addr %s272, 4
        %s274 = scalar_lea.vmem %s3, %s273
        %s275 = smul.u32 2, %s19
        %s276 = smul.u32 16, %s21
        %p277 = scmp.lt.s32.totalorder %s276, 79
        %s278 = scalar_select %p277, %s276, 79
        %p279 = scmp.lt.s32.totalorder %s20, 0
        %s280 = scalar_select %p279, %s20, 0
        %s281 = sadd.s32 %s280, %s278
        %s282 = smul.addr %s281, 4
        %s283 = scalar_lea.vmem %s1, %s282
        %s284 = smul.u32 16, %s21
        %p285 = scmp.lt.s32.totalorder %s20, 0
        %s286 = scalar_select %p285, %s20, 0
        %s287 = scalar_lea.vmem %s2, %s286
        %s288 = smul.u32 2, %s19
        %p289 = scmp.lt.s32.totalorder %s288, 1
        %s290 = scalar_select %p289, %s288, 1
        %p291 = scmp.lt.s32.totalorder %s20, 0
        %s292 = scalar_select %p291, %s20, 0
        %s293 = sadd.s32 %s292, %s290
        %s294 = smul.addr %s293, 4
        %s295 = scalar_lea.vmem %s3, %s294
        %s296 = smul.u32 2, %s19
        %p298 = scmp.eq.s32.totalorder %s21, 0
        // Predicated region
        $region74: #{smc_forward.8} parent=68 // pred_check
          %p299 = pneg %p298
        $region75: #{smc_forward.8} parent=68 // pred_check_branch
          %301 = sbr.rel (%p299) target = $region77
        $region76: #{smc_forward.8} parent=68 // pred_region
          %302 = vst [vmem:[#allocation2] sm:$0xff] 0.0
          %303 = vst [vmem:[#allocation2 + $0x8] sm:$0xff] 0.0
        $region77: #{smc_forward.8} parent=68 // pred_fallthru
          _
        %v304 = vld [vmem:[#allocation2] sm:$0xff]
        %v305 = vld [vmem:[#allocation2 + $0x8] sm:$0xff]
        %v306 = vld [vmem:[%s240] sm:$0xf]
        %v307 = vld [vmem:[%s240 + $0x4] sm:$0xf]
        %v308 = vld [vmem:[%s283] sm:$0xf]
        %v309 = vld [vmem:[%s283 + $0x4] sm:$0xf]
        %v310 = vld [vmem:[%s283 + $0x8] sm:$0xf]
        %v311 = vld [vmem:[%s283 + $0xc] sm:$0xf]
        %v312 = vld [vmem:[%s283 + $0x10] sm:$0xf]
        %v313 = vld [vmem:[%s283 + $0x14] sm:$0xf]
        %v314 = vld [vmem:[%s283 + $0x18] sm:$0xf]
        %v315 = vld [vmem:[%s283 + $0x1c] sm:$0xf]
        %v316 = vld [vmem:[%s283 + $0x20] sm:$0xf]
        %v317 = vld [vmem:[%s283 + $0x24] sm:$0xf]
        %v318 = vld [vmem:[%s283 + $0x28] sm:$0xf]
        %v319 = vld [vmem:[%s283 + $0x2c] sm:$0xf]
        %v320 = vld [vmem:[%s283 + $0x30] sm:$0xf]
        %v321 = vld [vmem:[%s283 + $0x34] sm:$0xf]
        %v322 = vld [vmem:[%s283 + $0x38] sm:$0xf]
        %v323 = vld [vmem:[%s283 + $0x3c] sm:$0xf]
        %v326 = vunpack.c.l.b16 %v306
        %v327 = vunpack.c.l.b16 %v307
        %v328 = vpack.c.b16 %v327, %v326
        %v346 = vunpack.c.l.b16 %v308
        %v347 = vunpack.c.l.b16 %v309
        %v348 = vunpack.c.l.b16 %v310
        %v349 = vunpack.c.l.b16 %v311
        %v350 = vunpack.c.l.b16 %v312
        %v351 = vunpack.c.l.b16 %v313
        %v352 = vunpack.c.l.b16 %v314
        %v353 = vunpack.c.l.b16 %v315
        %v354 = vunpack.c.l.b16 %v316
        %v355 = vunpack.c.l.b16 %v317
        %v356 = vunpack.c.l.b16 %v318
        %v357 = vunpack.c.l.b16 %v319
        %v358 = vunpack.c.l.b16 %v320
        %v359 = vunpack.c.l.b16 %v321
        %v360 = vunpack.c.l.b16 %v322
        %v361 = vunpack.c.l.b16 %v323
        %v362 = vpack.c.b16 %v347, %v346
        %v363 = vpack.c.b16 %v349, %v348
        %v364 = vpack.c.b16 %v351, %v350
        %v365 = vpack.c.b16 %v353, %v352
        %v366 = vpack.c.b16 %v355, %v354
        %v367 = vpack.c.b16 %v357, %v356
        %v368 = vpack.c.b16 %v359, %v358
        %v369 = vpack.c.b16 %v361, %v360
        %378 = vmatprep.subr.bf16.mxu0 0
        %379 = vmatpush1.bf16.msra.mxu0 %v362
        %380 = vmatprep.subr.bf16.mxu0 0
        %381 = vmatpush1.bf16.msra.mxu0 %v363
        %382 = vmatprep.subr.bf16.mxu0 0
        %383 = vmatpush1.bf16.msra.mxu0 %v364
        %384 = vmatprep.subr.bf16.mxu0 0
        %385 = vmatpush1.bf16.msra.mxu0 %v365
        %386 = vmatprep.subr.bf16.mxu0 0
        %387 = vmatpush1.bf16.msra.mxu0 %v366
        %388 = vmatprep.subr.bf16.mxu0 0
        %389 = vmatpush1.bf16.msra.mxu0 %v367
        %390 = vmatprep.subr.bf16.mxu0 0
        %391 = vmatpush1.bf16.msra.mxu0 %v368
        %392 = vmatprep.subr.bf16.mxu0 0
        %393 = vmatpush1.bf16.msra.mxu0 %v369
        %394 = vmatprep.subr.bf16.mxu0 0
        %395 = vmatpush1.bf16.msra.mxu0 0
        %396 = vmatprep.subr.bf16.mxu0 0
        %397 = vmatpush1.bf16.msra.mxu0 0
        %398 = vmatprep.subr.bf16.mxu0 0
        %399 = vmatpush1.bf16.msra.mxu0 0
        %400 = vmatprep.subr.bf16.mxu0 0
        %401 = vmatpush1.bf16.msra.mxu0 0
        %402 = vmatprep.subr.bf16.mxu0 0
        %403 = vmatpush1.bf16.msra.mxu0 0
        %404 = vmatprep.subr.bf16.mxu0 0
        %405 = vmatpush1.bf16.msra.mxu0 0
        %406 = vmatprep.subr.bf16.mxu0 0
        %407 = vmatpush1.bf16.msra.mxu0 0
        %408 = vmatprep.subr.bf16.mxu0 0
        %409 = vmatpush1.bf16.msra.mxu0 0
        %410 = vmatprep.mubr.bf16.mxu0 0
        %411 = vmatmul.mubr.bf16.gmra.mrb[0].mxu0 %v328
        %v412 = vpop.f32.mrb[0].mxu0
        %v413 = vadd.f32 0.0, %v412
        %v414 = vpop.f32.mrb[0].mxu0
        %v415 = vpop.f32.mrb[0].mxu0
        %v416 = vadd.f32 0.0, %v415
        %v417 = vpop.f32.mrb[0].mxu0
        %418 = vdwg.mxu0
        %v419 = vadd.f32 %v304, %v413
        %v420 = vadd.f32 %v305, %v416
        %421 = vst [vmem:[#allocation2] sm:$0xff] %v419
        %422 = vst [vmem:[#allocation2 + $0x8] sm:$0xff] %v420
        %p423 = scmp.eq.s32.totalorder %s21, 4
        // Predicated region
        $region78: #{smc_forward.8} parent=68 // pred_check
          %p424 = pneg %p423
        $region79: #{smc_forward.8} parent=68 // pred_check_branch
          %426 = sbr.rel (%p424) target = $region81
        $region80: #{smc_forward.8} parent=68 // pred_region
          %v427 = vld [vmem:[#allocation2] sm:$0xff]
          %v428 = vld [vmem:[#allocation2 + $0x8] sm:$0xff]
          %v429 = vld [vmem:[%s287] sm:$0x1]
          %v431 = vlaneseq
          %v432 = vshrl.u32 %v431, 7
          %v433 = vsub.s32 0, %v432
          %v434 = vrot.slane %v429, %v433
          %v436 = vadd.f32 %v427, %v434
          %v437 = vadd.f32 %v428, %v434
          %v438 = vmax.f32 %v436, 0.0
          %v439 = vmax.f32 %v437, 0.0
          %v440 = vpack.c.bf16 %v439, %v438
          %v442 = vunpack.c.l.b16 %v440
          %v443 = vunpack.c.h.b16 %v440
          %v444 = vpack.c.b16 %v442, %v442
          %v445 = vpack.c.b16 %v443, %v443
          %448 = vst [vmem:[%s295] sm:$0xf] %v444
          %449 = vst [vmem:[%s295 + $0x4] sm:$0xf] %v445
        $region81: #{smc_forward.8} parent=68 // pred_fallthru
          _
        %s450 = smul.u32 2, %s19
        %p451 = scmp.lt.s32.totalorder %s450, 1
        %s452 = scalar_select %p451, %s450, 1
        %p453 = scmp.lt.s32.totalorder %s20, 0
        %s454 = scalar_select %p453, %s20, 0
        %s455 = sadd.s32 %s454, %s452
        %s456 = smul.addr %s455, 4
        %s457 = scalar_lea.vmem %s3, %s456
        // Predicated region
        $region82: #{smc_forward.8} parent=68 // pred_check
          %p458 = pneg %p135
        $region83: #{smc_forward.8} parent=68 // pred_check_branch
          %460 = sbr.rel (%p458) target = $region85
        $region84: #{smc_forward.8} parent=68 // pred_region
          %s461 = smul.u32 2, %s19
        $region85: #{smc_forward.8} parent=68 // pred_fallthru
          _
        // Predicated region
        $region86: #{smc_forward.8} parent=68 // pred_check
          %p462 = pneg %p135
        $region87: #{smc_forward.8} parent=68 // pred_check_branch
          %464 = sbr.rel (%p462) target = $region89
        $region88: #{smc_forward.8} parent=68 // pred_region
          %s465 = smul.u32 2, %s19
          %p466 = scmp.lt.s32.totalorder %s465, 1
          %s467 = scalar_select %p466, %s465, 1
          %p468 = scmp.lt.s32.totalorder %s20, 0
          %s469 = scalar_select %p468, %s20, 0
          %s470 = sadd.s32 %s469, %s467
          %s471 = smul.addr %s470, 4
          %s472 = scalar_lea.vmem %s3, %s471
        $region89: #{smc_forward.8} parent=68 // pred_fallthru
          _
      $region69: #{smc_forward.8} parent=5 // pred_fallthru
        _
      %p473 = scmp.le.s32.totalorder 2, %s9
      // Predicated region
      $region90: #{smc_forward.8} parent=5 // pred_check
        %p474 = pneg %p473
      $region91: #{smc_forward.8} parent=5 // pred_check_branch
        %476 = sbr.rel (%p474) target = $region93
      $region92: #{smc_forward.8} parent=5 // pred_region
        %s477 = ssub.s32 %s9, 2
      $region93: #{smc_forward.8} parent=5 // pred_fallthru
        _
    $region6: #{smc_forward.8} parent=1 // loop_footer
      %s13 = sadd.s32 1, %s9
    $region7: #{smc_forward.8} parent=1 // loop_footer_branch
      %8 = sbr.rel target = $region3
    $region8: #{smc_forward.8} parent=1 // loop_exit
      _

// kernel: smc_forward.11
$region0: #{smc_forward.11}
  #allocation0 [shape = 'u32[]', space=smem, size = 0x4, offset = 0x4, fixed_abs, tag = 'smem constant byte address 0x4 - core index']
  #allocation1 [shape = 'u32[144,128]{1,0:T(1,128)}', space=vmem, size = 0x12000, scoped, tag = 'internal scratch']
  %s0 = inlined_call_operand.vmem [shape: bf16[2,4,128], index: 0, kind: input, shape index: {}]
  %s1 = inlined_call_operand.vmem [shape: bf16[2,256,64], index: 1, kind: input, shape index: {}]
  %s2 = inlined_call_operand.vmem [shape: bf16[64,7], index: 2, kind: input, shape index: {}]
  %s3 = inlined_call_operand.vmem [shape: f32[1,7], index: 3, kind: input, shape index: {}]
  %s4 = inlined_call_operand.vmem [shape: f32[256,1], index: 4, kind: input, shape index: {}]
  %s5 = inlined_call_operand.vmem [shape: f32[7,256], index: 5, kind: input, shape index: {}]
  %s6 = inlined_call_operand.vmem [shape: f32[7,256], index: 6, kind: input, shape index: {}]
  %s7 = inlined_call_operand.vmem [shape: f32[1,256], index: 7, kind: input, shape index: {}]
  %s8 = inlined_call_operand.vmem [shape: f32[2,1,128], index: 8, kind: output, shape index: {0}]
  %s9 = inlined_call_operand.vmem [shape: f32[2,1,256], index: 9, kind: output, shape index: {1}]
  %10 = xla_tuple %s8, %s9
  %s11 = sld [smem:[#allocation0]]
  $region73: #{smc_forward.11} parent=0
    _
  %s13 = ssub.s32 1, %s11
  %s14 = scalar_select 0, %s13, %s11
  loop: start=0, step=1, limit=4
  $region2: #{smc_forward.11} parent=0 // loop_pre_header
    _
  $region3: #{smc_forward.11} parent=0 // loop_header
    %s16 = sphi 0, %s20
    %p17 = scmp.ge.s32.totalorder %s16, 4
    %s26 = sphi 0, %s28
    %s29 = sphi 0, %s26
    %s30 = sphi 0, %s29
    %s46 = sphi 0, %s30
    %s52 = sphi 0, %s54
    %s55 = sphi 0, %s52
    %s56 = sphi 0, %s55
    %s72 = sphi 0, %s56
    %s76 = sphi 0, %s76
    %s78 = sphi 0, %s76
    %s79 = sphi 0, %s78
    %s93 = sphi 0, %s79
    %s97 = sphi 0, %s97
    %s99 = sphi 0, %s97
    %s100 = sphi 0, %s99
    %s114 = sphi 0, %s100
    %s118 = sphi 0, %s118
    %s120 = sphi 0, %s118
    %s121 = sphi 0, %s120
    %s135 = sphi 0, %s121
    %s139 = sphi 0, %s139
    %s141 = sphi 0, %s139
    %s142 = sphi 0, %s141
    %s156 = sphi 0, %s142
    %s160 = sphi 0, %s160
    %s162 = sphi 0, %s160
    %s163 = sphi 0, %s162
    %s177 = sphi 0, %s163
    %s181 = sphi 0, %s181
    %s183 = sphi 0, %s181
    %s184 = sphi 0, %s183
    %s198 = sphi 0, %s184
    %s204 = sphi 0, %s206
    %s207 = sphi 0, %s204
    %s208 = sphi 0, %s207
    %s224 = sphi 0, %s208
    %s230 = sphi 0, %s232
    %s233 = sphi 0, %s230
    %s234 = sphi 0, %s233
    %s250 = sphi 0, %s234
  $region4: #{smc_forward.11} parent=0 // loop_header_branch
    %19 = sbr.rel (%p17) target = $region8
  $region5: #{smc_forward.11} parent=0 // loop_body
    %s21 = ssub.s32 %s16, 1
    %s22 = ssub.s32 %s16, 2
    %s23 = sadd.s32 %s16, 1
    %s24 = ssub.s32 %s16, %s23
    %p25 = scmp.eq.s32.totalorder %s24, 0
    %s27 = sadd.s32 %s26, 1
    %s28 = scalar_select %p25, %s26, %s27
    %p31 = pneg %p25
    %p32 = scmp.eq.s32.totalorder %s16, 1
    %p33 = por %p31, %p32
    %p34 = scmp.ne.s32.totalorder %s26, %s29
    %p35 = scmp.eq.s32.totalorder %s16, 0
    %p36 = por %p34, %p35
    %p37 = scmp.ne.s32.totalorder %s26, %s29
    %p38 = scmp.eq.s32.totalorder %s21, 1
    %p39 = por %p37, %p38
    %p40 = scmp.ne.s32.totalorder %s29, %s30
    %p41 = scmp.eq.s32.totalorder %s21, 0
    %p42 = por %p40, %p41
    %p43 = scmp.ne.s32.totalorder %s29, %s30
    %p44 = scmp.eq.s32.totalorder %s22, 1
    %p45 = por %p43, %p44
    %p47 = scmp.ne.s32.totalorder %s30, %s46
    %p48 = scmp.eq.s32.totalorder %s22, 0
    %p49 = por %p47, %p48
    %s50 = ssub.s32 %s16, %s23
    %p51 = scmp.eq.s32.totalorder %s50, 0
    %s53 = sadd.s32 %s52, 1
    %s54 = scalar_select %p51, %s52, %s53
    %p57 = pneg %p51
    %p58 = scmp.eq.s32.totalorder %s16, 1
    %p59 = por %p57, %p58
    %p60 = scmp.ne.s32.totalorder %s52, %s55
    %p61 = scmp.eq.s32.totalorder %s16, 0
    %p62 = por %p60, %p61
    %p63 = scmp.ne.s32.totalorder %s52, %s55
    %p64 = scmp.eq.s32.totalorder %s21, 1
    %p65 = por %p63, %p64
    %p66 = scmp.ne.s32.totalorder %s55, %s56
    %p67 = scmp.eq.s32.totalorder %s21, 0
    %p68 = por %p66, %p67
    %p69 = scmp.ne.s32.totalorder %s55, %s56
    %p70 = scmp.eq.s32.totalorder %s22, 1
    %p71 = por %p69, %p70
    %p73 = scmp.ne.s32.totalorder %s56, %s72
    %p74 = scmp.eq.s32.totalorder %s22, 0
    %p75 = por %p73, %p74
    %s77 = sadd.s32 %s76, 1
    %p80 = scmp.eq.s32.totalorder %s16, 1
    %p81 = scmp.ne.s32.totalorder %s76, %s78
    %p82 = scmp.eq.s32.totalorder %s16, 0
    %p83 = por %p81, %p82
    %p84 = scmp.ne.s32.totalorder %s76, %s78
    %p85 = scmp.eq.s32.totalorder %s21, 1
    %p86 = por %p84, %p85
    %p87 = scmp.ne.s32.totalorder %s78, %s79
    %p88 = scmp.eq.s32.totalorder %s21, 0
    %p89 = por %p87, %p88
    %p90 = scmp.ne.s32.totalorder %s78, %s79
    %p91 = scmp.eq.s32.totalorder %s22, 1
    %p92 = por %p90, %p91
    %p94 = scmp.ne.s32.totalorder %s79, %s93
    %p95 = scmp.eq.s32.totalorder %s22, 0
    %p96 = por %p94, %p95
    %s98 = sadd.s32 %s97, 1
    %p101 = scmp.eq.s32.totalorder %s16, 1
    %p102 = scmp.ne.s32.totalorder %s97, %s99
    %p103 = scmp.eq.s32.totalorder %s16, 0
    %p104 = por %p102, %p103
    %p105 = scmp.ne.s32.totalorder %s97, %s99
    %p106 = scmp.eq.s32.totalorder %s21, 1
    %p107 = por %p105, %p106
    %p108 = scmp.ne.s32.totalorder %s99, %s100
    %p109 = scmp.eq.s32.totalorder %s21, 0
    %p110 = por %p108, %p109
    %p111 = scmp.ne.s32.totalorder %s99, %s100
    %p112 = scmp.eq.s32.totalorder %s22, 1
    %p113 = por %p111, %p112
    %p115 = scmp.ne.s32.totalorder %s100, %s114
    %p116 = scmp.eq.s32.totalorder %s22, 0
    %p117 = por %p115, %p116
    %s119 = sadd.s32 %s118, 1
    %p122 = scmp.eq.s32.totalorder %s16, 1
    %p123 = scmp.ne.s32.totalorder %s118, %s120
    %p124 = scmp.eq.s32.totalorder %s16, 0
    %p125 = por %p123, %p124
    %p126 = scmp.ne.s32.totalorder %s118, %s120
    %p127 = scmp.eq.s32.totalorder %s21, 1
    %p128 = por %p126, %p127
    %p129 = scmp.ne.s32.totalorder %s120, %s121
    %p130 = scmp.eq.s32.totalorder %s21, 0
    %p131 = por %p129, %p130
    %p132 = scmp.ne.s32.totalorder %s120, %s121
    %p133 = scmp.eq.s32.totalorder %s22, 1
    %p134 = por %p132, %p133
    %p136 = scmp.ne.s32.totalorder %s121, %s135
    %p137 = scmp.eq.s32.totalorder %s22, 0
    %p138 = por %p136, %p137
    %s140 = sadd.s32 %s139, 1
    %p143 = scmp.eq.s32.totalorder %s16, 1
    %p144 = scmp.ne.s32.totalorder %s139, %s141
    %p145 = scmp.eq.s32.totalorder %s16, 0
    %p146 = por %p144, %p145
    %p147 = scmp.ne.s32.totalorder %s139, %s141
    %p148 = scmp.eq.s32.totalorder %s21, 1
    %p149 = por %p147, %p148
    %p150 = scmp.ne.s32.totalorder %s141, %s142
    %p151 = scmp.eq.s32.totalorder %s21, 0
    %p152 = por %p150, %p151
    %p153 = scmp.ne.s32.totalorder %s141, %s142
    %p154 = scmp.eq.s32.totalorder %s22, 1
    %p155 = por %p153, %p154
    %p157 = scmp.ne.s32.totalorder %s142, %s156
    %p158 = scmp.eq.s32.totalorder %s22, 0
    %p159 = por %p157, %p158
    %s161 = sadd.s32 %s160, 1
    %p164 = scmp.eq.s32.totalorder %s16, 1
    %p165 = scmp.ne.s32.totalorder %s160, %s162
    %p166 = scmp.eq.s32.totalorder %s16, 0
    %p167 = por %p165, %p166
    %p168 = scmp.ne.s32.totalorder %s160, %s162
    %p169 = scmp.eq.s32.totalorder %s21, 1
    %p170 = por %p168, %p169
    %p171 = scmp.ne.s32.totalorder %s162, %s163
    %p172 = scmp.eq.s32.totalorder %s21, 0
    %p173 = por %p171, %p172
    %p174 = scmp.ne.s32.totalorder %s162, %s163
    %p175 = scmp.eq.s32.totalorder %s22, 1
    %p176 = por %p174, %p175
    %p178 = scmp.ne.s32.totalorder %s163, %s177
    %p179 = scmp.eq.s32.totalorder %s22, 0
    %p180 = por %p178, %p179
    %s182 = sadd.s32 %s181, 1
    %p185 = scmp.eq.s32.totalorder %s16, 1
    %p186 = scmp.ne.s32.totalorder %s181, %s183
    %p187 = scmp.eq.s32.totalorder %s16, 0
    %p188 = por %p186, %p187
    %p189 = scmp.ne.s32.totalorder %s181, %s183
    %p190 = scmp.eq.s32.totalorder %s21, 1
    %p191 = por %p189, %p190
    %p192 = scmp.ne.s32.totalorder %s183, %s184
    %p193 = scmp.eq.s32.totalorder %s21, 0
    %p194 = por %p192, %p193
    %p195 = scmp.ne.s32.totalorder %s183, %s184
    %p196 = scmp.eq.s32.totalorder %s22, 1
    %p197 = por %p195, %p196
    %p199 = scmp.ne.s32.totalorder %s184, %s198
    %p200 = scmp.eq.s32.totalorder %s22, 0
    %p201 = por %p199, %p200
    %s202 = ssub.s32 %s16, %s23
    %p203 = scmp.eq.s32.totalorder %s202, 0
    %s205 = sadd.s32 %s204, 1
    %s206 = scalar_select %p203, %s204, %s205
    %p209 = pneg %p203
    %p210 = scmp.eq.s32.totalorder %s16, 1
    %p211 = por %p209, %p210
    %p212 = scmp.ne.s32.totalorder %s204, %s207
    %p213 = scmp.eq.s32.totalorder %s16, 0
    %p214 = por %p212, %p213
    %p215 = scmp.ne.s32.totalorder %s204, %s207
    %p216 = scmp.eq.s32.totalorder %s21, 1
    %p217 = por %p215, %p216
    %p218 = scmp.ne.s32.totalorder %s207, %s208
    %p219 = scmp.eq.s32.totalorder %s21, 0
    %p220 = por %p218, %p219
    %p221 = scmp.ne.s32.totalorder %s207, %s208
    %p222 = scmp.eq.s32.totalorder %s22, 1
    %p223 = por %p221, %p222
    %p225 = scmp.ne.s32.totalorder %s208, %s224
    %p226 = scmp.eq.s32.totalorder %s22, 0
    %p227 = por %p225, %p226
    %s228 = ssub.s32 %s16, %s23
    %p229 = scmp.eq.s32.totalorder %s228, 0
    %s231 = sadd.s32 %s230, 1
    %s232 = scalar_select %p229, %s230, %s231
    %p235 = pneg %p229
    %p236 = scmp.eq.s32.totalorder %s16, 1
    %p237 = por %p235, %p236
    %p238 = scmp.ne.s32.totalorder %s230, %s233
    %p239 = scmp.eq.s32.totalorder %s16, 0
    %p240 = por %p238, %p239
    %p241 = scmp.ne.s32.totalorder %s230, %s233
    %p242 = scmp.eq.s32.totalorder %s21, 1
    %p243 = por %p241, %p242
    %p244 = scmp.ne.s32.totalorder %s233, %s234
    %p245 = scmp.eq.s32.totalorder %s21, 0
    %p246 = por %p244, %p245
    %p247 = scmp.ne.s32.totalorder %s233, %s234
    %p248 = scmp.eq.s32.totalorder %s22, 1
    %p249 = por %p247, %p248
    %p251 = scmp.ne.s32.totalorder %s234, %s250
    %p252 = scmp.eq.s32.totalorder %s22, 0
    %p253 = por %p251, %p252
    %p254 = scmp.le.s32.totalorder 1, %s16
    %p255 = scmp.lt.s32.totalorder %s16, 3
    %p256 = pnand %p254, %p255
    %p257 = pneg %p256
    // Predicated region
    $region9: #{smc_forward.11} parent=5 // pred_check
      _
    $region10: #{smc_forward.11} parent=5 // pred_check_branch
      %259 = sbr.rel (%p256) target = $region12
    $region11: #{smc_forward.11} parent=5 // pred_region
      %s260 = ssub.s32 %s16, 1
      // Predicated region
      $region13: #{smc_forward.11} parent=11 // pred_check
        %p261 = pneg %p89
      $region14: #{smc_forward.11} parent=11 // pred_check_branch
        %263 = sbr.rel (%p261) target = $region16
      $region15: #{smc_forward.11} parent=11 // pred_region
        _
      $region16: #{smc_forward.11} parent=11 // pred_fallthru
        _
      // Predicated region
      $region17: #{smc_forward.11} parent=11 // pred_check
        %p264 = pneg %p110
      $region18: #{smc_forward.11} parent=11 // pred_check_branch
        %266 = sbr.rel (%p264) target = $region20
      $region19: #{smc_forward.11} parent=11 // pred_region
        _
      $region20: #{smc_forward.11} parent=11 // pred_fallthru
        _
      // Predicated region
      $region21: #{smc_forward.11} parent=11 // pred_check
        %p267 = pneg %p131
      $region22: #{smc_forward.11} parent=11 // pred_check_branch
        %269 = sbr.rel (%p267) target = $region24
      $region23: #{smc_forward.11} parent=11 // pred_region
        _
      $region24: #{smc_forward.11} parent=11 // pred_fallthru
        _
      // Predicated region
      $region25: #{smc_forward.11} parent=11 // pred_check
        %p270 = pneg %p152
      $region26: #{smc_forward.11} parent=11 // pred_check_branch
        %272 = sbr.rel (%p270) target = $region28
      $region27: #{smc_forward.11} parent=11 // pred_region
        _
      $region28: #{smc_forward.11} parent=11 // pred_fallthru
        _
      // Predicated region
      $region29: #{smc_forward.11} parent=11 // pred_check
        %p273 = pneg %p173
      $region30: #{smc_forward.11} parent=11 // pred_check_branch
        %275 = sbr.rel (%p273) target = $region32
      $region31: #{smc_forward.11} parent=11 // pred_region
        _
      $region32: #{smc_forward.11} parent=11 // pred_fallthru
        _
      // Predicated region
      $region33: #{smc_forward.11} parent=11 // pred_check
        %p276 = pneg %p194
      $region34: #{smc_forward.11} parent=11 // pred_check_branch
        %278 = sbr.rel (%p276) target = $region36
      $region35: #{smc_forward.11} parent=11 // pred_region
        _
      $region36: #{smc_forward.11} parent=11 // pred_fallthru
        _
    $region12: #{smc_forward.11} parent=5 // pred_fallthru
      _
    %p279 = scmp.lt.s32.totalorder %s16, 2
    // Predicated region
    $region37: #{smc_forward.11} parent=5 // pred_check
      %p280 = pneg %p279
    $region38: #{smc_forward.11} parent=5 // pred_check_branch
      %282 = sbr.rel (%p280) target = $region40
    $region39: #{smc_forward.11} parent=5 // pred_region
      // Predicated region
      $region41: #{smc_forward.11} parent=39 // pred_check
        %p283 = pneg %p36
      $region42: #{smc_forward.11} parent=39 // pred_check_branch
        %285 = sbr.rel (%p283) target = $region44
      $region43: #{smc_forward.11} parent=39 // pred_region
        %p286 = scmp.lt.s32.totalorder %s16, 1
        %s287 = scalar_select %p286, %s16, 1
        %s288 = smul.addr %s287, 2
        %s289 = scalar_lea.vmem %s0, %s288
      $region44: #{smc_forward.11} parent=39 // pred_fallthru
        _
      // Predicated region
      $region45: #{smc_forward.11} parent=39 // pred_check
        %p290 = pneg %p62
      $region46: #{smc_forward.11} parent=39 // pred_check_branch
        %292 = sbr.rel (%p290) target = $region48
      $region47: #{smc_forward.11} parent=39 // pred_region
        %p293 = scmp.lt.s32.totalorder %s16, 1
        %s294 = scalar_select %p293, %s16, 1
        %s295 = smul.addr %s294, 32
        %s296 = smul.addr %s295, 4
        %s297 = scalar_lea.vmem %s1, %s296
      $region48: #{smc_forward.11} parent=39 // pred_fallthru
        _
    $region40: #{smc_forward.11} parent=5 // pred_fallthru
      _
    %p298 = scmp.le.s32.totalorder 1, %s16
    %p299 = scmp.lt.s32.totalorder %s16, 3
    %p300 = pnand %p298, %p299
    %p301 = pneg %p300
    // Predicated region
    $region49: #{smc_forward.11} parent=5 // pred_check
      _
    $region50: #{smc_forward.11} parent=5 // pred_check_branch
      %303 = sbr.rel (%p300) target = $region52
    $region51: #{smc_forward.11} parent=5 // pred_region
      %s304 = ssub.s32 %s16, 1
      %p305 = scmp.lt.s32.totalorder %s21, 1
      %s306 = scalar_select %p305, %s21, 1
      %s307 = smul.addr %s306, 2
      %s308 = scalar_lea.vmem %s0, %s307
      %p309 = pneg %p42
      %p310 = pneg %p39
      %p311 = scmp.lt.s32.totalorder %s21, 1
      %s312 = scalar_select %p311, %s21, 1
      %s313 = smul.addr %s312, 32
      %s314 = smul.addr %s313, 4
      %s315 = scalar_lea.vmem %s1, %s314
      %p316 = pneg %p68
      %p317 = pneg %p65
      %p318 = pneg %p89
      %p319 = pneg %p86
      %p320 = pneg %p110
      %p321 = pneg %p107
      %p322 = pneg %p131
      %p323 = pneg %p128
      %p324 = pneg %p152
      %p325 = pneg %p149
      %p326 = pneg %p173
      %p327 = pneg %p170
      %p328 = pneg %p194
      %p329 = pneg %p191
      %p330 = pneg %p220
      %p331 = pneg %p217
      %p332 = scmp.lt.s32.totalorder %s21, 1
      %s333 = scalar_select %p332, %s21, 1
      %s334 = scalar_lea.vmem %s8, %s333
      %p335 = pneg %p246
      %p336 = pneg %p243
      %p337 = scmp.lt.s32.totalorder %s21, 1
      %s338 = scalar_select %p337, %s21, 1
      %s339 = smul.addr %s338, 2
      %s340 = scalar_lea.vmem %s9, %s339
      %p341 = scmp.lt.s32.totalorder %s21, 1
      %s342 = scalar_select %p341, %s21, 1
      %s343 = smul.addr %s342, 2
      %s344 = scalar_lea.vmem %s0, %s343
      %p345 = scmp.lt.s32.totalorder %s21, 1
      %s346 = scalar_select %p345, %s21, 1
      %s347 = smul.addr %s346, 32
      %s348 = smul.addr %s347, 4
      %s349 = scalar_lea.vmem %s1, %s348
      %p350 = scmp.lt.s32.totalorder %s21, 1
      %s351 = scalar_select %p350, %s21, 1
      %s352 = scalar_lea.vmem %s8, %s351
      %p353 = scmp.lt.s32.totalorder %s21, 1
      %s354 = scalar_select %p353, %s21, 1
      %s355 = smul.addr %s354, 2
      %s356 = scalar_lea.vmem %s9, %s355
      %v358 = vld [vmem:[%s344] sm:$0x3]
      %v359 = vunpack.c.l.bf16 %v358
      %vm360 = vcmask 1043456
      %v361 = vsel %vm360, %v359, 0.0
      %v362 = vrot.slane %v361, 4
      %v363 = vadd.f32 %v361, %v362
      %v364 = vrot.slane %v363, 2
      %v365 = vadd.f32 %v363, %v364
      %v366 = vrot.slane %v365, 1
      %v367 = vadd.f32 %v365, %v366
      %v368 = vrcp.pop 4.0
      %v369 = vmul.f32 %v367, %v368
      %370 = vst [vmem:[%s352] sm:$0x1] %v369
      %v371 = vld [vmem:[%s349] sm:$0xf]
      %v372 = vld [vmem:[%s349 + $0x4] sm:$0xf]
      %v373 = vld [vmem:[%s349 + $0x8] sm:$0xf]
      %v374 = vld [vmem:[%s349 + $0xc] sm:$0xf]
      %v375 = vld [vmem:[%s349 + $0x10] sm:$0xf]
      %v376 = vld [vmem:[%s349 + $0x14] sm:$0xf]
      %v377 = vld [vmem:[%s349 + $0x18] sm:$0xf]
      %v378 = vld [vmem:[%s349 + $0x1c] sm:$0xf]
      %v379 = vld [vmem:[%s349 + $0x20] sm:$0xf]
      %v380 = vld [vmem:[%s349 + $0x24] sm:$0xf]
      %v381 = vld [vmem:[%s349 + $0x28] sm:$0xf]
      %v382 = vld [vmem:[%s349 + $0x2c] sm:$0xf]
      %v383 = vld [vmem:[%s349 + $0x30] sm:$0xf]
      %v384 = vld [vmem:[%s349 + $0x34] sm:$0xf]
      %v385 = vld [vmem:[%s349 + $0x38] sm:$0xf]
      %v386 = vld [vmem:[%s349 + $0x3c] sm:$0xf]
      %v387 = vld [vmem:[%s349 + $0x40] sm:$0xf]
      %v388 = vld [vmem:[%s349 + $0x44] sm:$0xf]
      %v389 = vld [vmem:[%s349 + $0x48] sm:$0xf]
      %v390 = vld [vmem:[%s349 + $0x4c] sm:$0xf]
      %v391 = vld [vmem:[%s349 + $0x50] sm:$0xf]
      %v392 = vld [vmem:[%s349 + $0x54] sm:$0xf]
      %v393 = vld [vmem:[%s349 + $0x58] sm:$0xf]
      %v394 = vld [vmem:[%s349 + $0x5c] sm:$0xf]
      %v395 = vld [vmem:[%s349 + $0x60] sm:$0xf]
      %v396 = vld [vmem:[%s349 + $0x64] sm:$0xf]
      %v397 = vld [vmem:[%s349 + $0x68] sm:$0xf]
      %v398 = vld [vmem:[%s349 + $0x6c] sm:$0xf]
      %v399 = vld [vmem:[%s349 + $0x70] sm:$0xf]
      %v400 = vld [vmem:[%s349 + $0x74] sm:$0xf]
      %v401 = vld [vmem:[%s349 + $0x78] sm:$0xf]
      %v402 = vld [vmem:[%s349 + $0x7c] sm:$0xf]
      %v403 = vld [vmem:[%s2] sm:$0xf]
      %v404 = vld [vmem:[%s2 + $0x4] sm:$0xf]
      %v405 = vld [vmem:[%s2 + $0x8] sm:$0xf]
      %v406 = vld [vmem:[%s2 + $0xc] sm:$0xf]
      %v407 = vld [vmem:[%s2 + $0x10] sm:$0xf]
      %v408 = vld [vmem:[%s2 + $0x14] sm:$0xf]
      %v409 = vld [vmem:[%s2 + $0x18] sm:$0xf]
      %v410 = vld [vmem:[%s2 + $0x1c] sm:$0xf]
      %v411 = vld [vmem:[%s3] sm:$0x1]
      %v413 = vlaneseq
      %v414 = vshrl.u32 %v413, 7
      %v415 = vsub.s32 0, %v414
      %v416 = vrot.slane %v411, %v415
      %v450 = vunpack.c.l.b16 %v371
      %v451 = vunpack.c.l.b16 %v372
      %v452 = vunpack.c.l.b16 %v373
      %v453 = vunpack.c.l.b16 %v374
      %v454 = vunpack.c.l.b16 %v375
      %v455 = vunpack.c.l.b16 %v376
      %v456 = vunpack.c.l.b16 %v377
      %v457 = vunpack.c.l.b16 %v378
      %v458 = vunpack.c.l.b16 %v379
      %v459 = vunpack.c.l.b16 %v380
      %v460 = vunpack.c.l.b16 %v381
      %v461 = vunpack.c.l.b16 %v382
      %v462 = vunpack.c.l.b16 %v383
      %v463 = vunpack.c.l.b16 %v384
      %v464 = vunpack.c.l.b16 %v385
      %v465 = vunpack.c.l.b16 %v386
      %v466 = vunpack.c.l.b16 %v387
      %v467 = vunpack.c.l.b16 %v388
      %v468 = vunpack.c.l.b16 %v389
      %v469 = vunpack.c.l.b16 %v390
      %v470 = vunpack.c.l.b16 %v391
      %v471 = vunpack.c.l.b16 %v392
      %v472 = vunpack.c.l.b16 %v393
      %v473 = vunpack.c.l.b16 %v394
      %v474 = vunpack.c.l.b16 %v395
      %v475 = vunpack.c.l.b16 %v396
      %v476 = vunpack.c.l.b16 %v397
      %v477 = vunpack.c.l.b16 %v398
      %v478 = vunpack.c.l.b16 %v399
      %v479 = vunpack.c.l.b16 %v400
      %v480 = vunpack.c.l.b16 %v401
      %v481 = vunpack.c.l.b16 %v402
      %v482 = vpack.c.b16 %v451, %v450
      %v483 = vpack.c.b16 %v453, %v452
      %v484 = vpack.c.b16 %v455, %v454
      %v485 = vpack.c.b16 %v457, %v456
      %v486 = vpack.c.b16 %v459, %v458
      %v487 = vpack.c.b16 %v461, %v460
      %v488 = vpack.c.b16 %v463, %v462
      %v489 = vpack.c.b16 %v465, %v464
      %v490 = vpack.c.b16 %v467, %v466
      %v491 = vpack.c.b16 %v469, %v468
      %v492 = vpack.c.b16 %v471, %v470
      %v493 = vpack.c.b16 %v473, %v472
      %v494 = vpack.c.b16 %v475, %v474
      %v495 = vpack.c.b16 %v477, %v476
      %v496 = vpack.c.b16 %v479, %v478
      %v497 = vpack.c.b16 %v481, %v480
      %v506 = vunpack.c.l.b16 %v403
      %v507 = vunpack.c.l.b16 %v404
      %v508 = vunpack.c.l.b16 %v405
      %v509 = vunpack.c.l.b16 %v406
      %v510 = vunpack.c.l.b16 %v407
      %v511 = vunpack.c.l.b16 %v408
      %v512 = vunpack.c.l.b16 %v409
      %v513 = vunpack.c.l.b16 %v410
      %v514 = vpack.c.b16 %v507, %v506
      %v515 = vpack.c.b16 %v509, %v508
      %v516 = vpack.c.b16 %v511, %v510
      %v517 = vpack.c.b16 %v513, %v512
      %vm522 = vcmask 523264
      %v524 = vsel %vm522, %v482, 0
      %v527 = vsel %vm522, %v483, 0
      %v530 = vsel %vm522, %v484, 0
      %v533 = vsel %vm522, %v485, 0
      %v536 = vsel %vm522, %v486, 0
      %v539 = vsel %vm522, %v487, 0
      %v542 = vsel %vm522, %v488, 0
      %v545 = vsel %vm522, %v489, 0
      %v548 = vsel %vm522, %v490, 0
      %v551 = vsel %vm522, %v491, 0
      %v554 = vsel %vm522, %v492, 0
      %v557 = vsel %vm522, %v493, 0
      %v560 = vsel %vm522, %v494, 0
      %v563 = vsel %vm522, %v495, 0
      %v566 = vsel %vm522, %v496, 0
      %v569 = vsel %vm522, %v497, 0
      %571 = vmatprep.subr.bf16.mxu0 0
      %572 = vmatpush1.bf16.msra.mxu0 %v514
      %573 = vmatprep.subr.bf16.mxu0 0
      %574 = vmatpush1.bf16.msra.mxu0 %v515
      %575 = vmatprep.subr.bf16.mxu0 0
      %576 = vmatpush1.bf16.msra.mxu0 %v516
      %577 = vmatprep.subr.bf16.mxu0 0
      %578 = vmatpush1.bf16.msra.mxu0 %v517
      %579 = vmatprep.subr.bf16.mxu0 0
      %580 = vmatpush1.bf16.msra.mxu0 0
      %581 = vmatprep.subr.bf16.mxu0 0
      %582 = vmatpush1.bf16.msra.mxu0 0
      %583 = vmatprep.subr.bf16.mxu0 0
      %584 = vmatpush1.bf16.msra.mxu0 0
      %585 = vmatprep.subr.bf16.mxu0 0
      %586 = vmatpush1.bf16.msra.mxu0 0
      %587 = vmatprep.subr.bf16.mxu0 0
      %588 = vmatpush1.bf16.msra.mxu0 0
      %589 = vmatprep.subr.bf16.mxu0 0
      %590 = vmatpush1.bf16.msra.mxu0 0
      %591 = vmatprep.subr.bf16.mxu0 0
      %592 = vmatpush1.bf16.msra.mxu0 0
      %593 = vmatprep.subr.bf16.mxu0 0
      %594 = vmatpush1.bf16.msra.mxu0 0
      %595 = vmatprep.subr.bf16.mxu0 0
      %596 = vmatpush1.bf16.msra.mxu0 0
      %597 = vmatprep.subr.bf16.mxu0 0
      %598 = vmatpush1.bf16.msra.mxu0 0
      %599 = vmatprep.subr.bf16.mxu0 0
      %600 = vmatpush1.bf16.msra.mxu0 0
      %601 = vmatprep.subr.bf16.mxu0 0
      %602 = vmatpush1.bf16.msra.mxu0 0
      %603 = vmatprep.mubr.bf16.mxu0 0
      %604 = vmatmul.mubr.bf16.gmra.mrb[0].mxu0 %v524
      %v605 = vpop.f32.mrb[0].mxu0
      %v606 = vadd.f32 %v416, %v605
      %v607 = vpop.f32.mrb[0].mxu0
      %v608 = vpop.f32.mrb[0].mxu0
      %v609 = vadd.f32 %v416, %v608
      %v610 = vpop.f32.mrb[0].mxu0
      %611 = vmatprep.mubr.bf16.mxu0 0
      %612 = vmatmul.mubr.bf16.gmra.mrb[0].mxu0 %v527
      %v613 = vpop.f32.mrb[0].mxu0
      %v614 = vadd.f32 %v416, %v613
      %v615 = vpop.f32.mrb[0].mxu0
      %v616 = vpop.f32.mrb[0].mxu0
      %v617 = vadd.f32 %v416, %v616
      %v618 = vpop.f32.mrb[0].mxu0
      %619 = vmatprep.mubr.bf16.mxu0 0
      %620 = vmatmul.mubr.bf16.gmra.mrb[0].mxu0 %v530
      %v621 = vpop.f32.mrb[0].mxu0
      %v622 = vadd.f32 %v416, %v621
      %v623 = vpop.f32.mrb[0].mxu0
      %v624 = vpop.f32.mrb[0].mxu0
      %v625 = vadd.f32 %v416, %v624
      %v626 = vpop.f32.mrb[0].mxu0
      %627 = vmatprep.mubr.bf16.mxu0 0
      %628 = vmatmul.mubr.bf16.gmra.mrb[0].mxu0 %v533
      %v629 = vpop.f32.mrb[0].mxu0
      %v630 = vadd.f32 %v416, %v629
      %v631 = vpop.f32.mrb[0].mxu0
      %v632 = vpop.f32.mrb[0].mxu0
      %v633 = vadd.f32 %v416, %v632
      %v634 = vpop.f32.mrb[0].mxu0
      %635 = vmatprep.mubr.bf16.mxu0 0
      %636 = vmatmul.mubr.bf16.gmra.mrb[0].mxu0 %v536
      %v637 = vpop.f32.mrb[0].mxu0
      %v638 = vadd.f32 %v416, %v637
      %v639 = vpop.f32.mrb[0].mxu0
      %v640 = vpop.f32.mrb[0].mxu0
      %v641 = vadd.f32 %v416, %v640
      %v642 = vpop.f32.mrb[0].mxu0
      %643 = vmatprep.mubr.bf16.mxu0 0
      %644 = vmatmul.mubr.bf16.gmra.mrb[0].mxu0 %v539
      %v645 = vpop.f32.mrb[0].mxu0
      %v646 = vadd.f32 %v416, %v645
      %v647 = vpop.f32.mrb[0].mxu0
      %v648 = vpop.f32.mrb[0].mxu0
      %v649 = vadd.f32 %v416, %v648
      %v650 = vpop.f32.mrb[0].mxu0
      %651 = vmatprep.mubr.bf16.mxu0 0
      %652 = vmatmul.mubr.bf16.gmra.mrb[0].mxu0 %v542
      %v653 = vpop.f32.mrb[0].mxu0
      %v654 = vadd.f32 %v416, %v653
      %v655 = vpop.f32.mrb[0].mxu0
      %v656 = vpop.f32.mrb[0].mxu0
      %v657 = vadd.f32 %v416, %v656
      %v658 = vpop.f32.mrb[0].mxu0
      %659 = vmatprep.mubr.bf16.mxu0 0
      %660 = vmatmul.mubr.bf16.gmra.mrb[0].mxu0 %v545
      %v661 = vpop.f32.mrb[0].mxu0
      %v662 = vadd.f32 %v416, %v661
      %v663 = vpop.f32.mrb[0].mxu0
      %v664 = vpop.f32.mrb[0].mxu0
      %v665 = vadd.f32 %v416, %v664
      %v666 = vpop.f32.mrb[0].mxu0
      %667 = vmatprep.mubr.bf16.mxu0 0
      %668 = vmatmul.mubr.bf16.gmra.mrb[0].mxu0 %v548
      %v669 = vpop.f32.mrb[0].mxu0
      %v670 = vadd.f32 %v416, %v669
      %v671 = vpop.f32.mrb[0].mxu0
      %v672 = vpop.f32.mrb[0].mxu0
      %v673 = vadd.f32 %v416, %v672
      %v674 = vpop.f32.mrb[0].mxu0
      %675 = vmatprep.mubr.bf16.mxu0 0
      %676 = vmatmul.mubr.bf16.gmra.mrb[0].mxu0 %v551
      %v677 = vpop.f32.mrb[0].mxu0
      %v678 = vadd.f32 %v416, %v677
      %v679 = vpop.f32.mrb[0].mxu0
      %v680 = vpop.f32.mrb[0].mxu0
      %v681 = vadd.f32 %v416, %v680
      %v682 = vpop.f32.mrb[0].mxu0
      %683 = vmatprep.mubr.bf16.mxu0 0
      %684 = vmatmul.mubr.bf16.gmra.mrb[0].mxu0 %v554
      %v685 = vpop.f32.mrb[0].mxu0
      %v686 = vadd.f32 %v416, %v685
      %v687 = vpop.f32.mrb[0].mxu0
      %v688 = vpop.f32.mrb[0].mxu0
      %v689 = vadd.f32 %v416, %v688
      %v690 = vpop.f32.mrb[0].mxu0
      %691 = vmatprep.mubr.bf16.mxu0 0
      %692 = vmatmul.mubr.bf16.gmra.mrb[0].mxu0 %v557
      %v693 = vpop.f32.mrb[0].mxu0
      %v694 = vadd.f32 %v416, %v693
      %v695 = vpop.f32.mrb[0].mxu0
      %v696 = vpop.f32.mrb[0].mxu0
      %v697 = vadd.f32 %v416, %v696
      %v698 = vpop.f32.mrb[0].mxu0
      %699 = vmatprep.mubr.bf16.mxu0 0
      %700 = vmatmul.mubr.bf16.gmra.mrb[0].mxu0 %v560
      %v701 = vpop.f32.mrb[0].mxu0
      %v702 = vadd.f32 %v416, %v701
      %v703 = vpop.f32.mrb[0].mxu0
      %v704 = vpop.f32.mrb[0].mxu0
      %v705 = vadd.f32 %v416, %v704
      %v706 = vpop.f32.mrb[0].mxu0
      %707 = vmatprep.mubr.bf16.mxu0 0
      %708 = vmatmul.mubr.bf16.gmra.mrb[0].mxu0 %v563
      %v709 = vpop.f32.mrb[0].mxu0
      %v710 = vadd.f32 %v416, %v709
      %v711 = vpop.f32.mrb[0].mxu0
      %v712 = vpop.f32.mrb[0].mxu0
      %v713 = vadd.f32 %v416, %v712
      %v714 = vpop.f32.mrb[0].mxu0
      %715 = vmatprep.mubr.bf16.mxu0 0
      %716 = vmatmul.mubr.bf16.gmra.mrb[0].mxu0 %v566
      %v717 = vpop.f32.mrb[0].mxu0
      %v718 = vadd.f32 %v416, %v717
      %v719 = vpop.f32.mrb[0].mxu0
      %v720 = vpop.f32.mrb[0].mxu0
      %v721 = vadd.f32 %v416, %v720
      %v722 = vpop.f32.mrb[0].mxu0
      %723 = vmatprep.mubr.bf16.mxu0 0
      %724 = vmatmul.mubr.bf16.gmra.mrb[0].mxu0 %v569
      %v725 = vpop.f32.mrb[0].mxu0
      %v726 = vadd.f32 %v416, %v725
      %v727 = vpop.f32.mrb[0].mxu0
      %v728 = vpop.f32.mrb[0].mxu0
      %v729 = vadd.f32 %v416, %v728
      %v730 = vpop.f32.mrb[0].mxu0
      %731 = vdwg.mxu0
      %v732 = vmul.f32 %v606, 1000.0
      %v733 = vmul.f32 %v609, 1000.0
      %v734 = vmul.f32 %v614, 1000.0
      %v735 = vmul.f32 %v617, 1000.0
      %v736 = vmul.f32 %v622, 1000.0
      %v737 = vmul.f32 %v625, 1000.0
      %v738 = vmul.f32 %v630, 1000.0
      %v739 = vmul.f32 %v633, 1000.0
      %v740 = vmul.f32 %v638, 1000.0
      %v741 = vmul.f32 %v641, 1000.0
      %v742 = vmul.f32 %v646, 1000.0
      %v743 = vmul.f32 %v649, 1000.0
      %v744 = vmul.f32 %v654, 1000.0
      %v745 = vmul.f32 %v657, 1000.0
      %v746 = vmul.f32 %v662, 1000.0
      %v747 = vmul.f32 %v665, 1000.0
      %v748 = vmul.f32 %v670, 1000.0
      %v749 = vmul.f32 %v673, 1000.0
      %v750 = vmul.f32 %v678, 1000.0
      %v751 = vmul.f32 %v681, 1000.0
      %v752 = vmul.f32 %v686, 1000.0
      %v753 = vmul.f32 %v689, 1000.0
      %v754 = vmul.f32 %v694, 1000.0
      %v755 = vmul.f32 %v697, 1000.0
      %v756 = vmul.f32 %v702, 1000.0
      %v757 = vmul.f32 %v705, 1000.0
      %v758 = vmul.f32 %v710, 1000.0
      %v759 = vmul.f32 %v713, 1000.0
      %v760 = vmul.f32 %v718, 1000.0
      %v761 = vmul.f32 %v721, 1000.0
      %v762 = vmul.f32 %v726, 1000.0
      %v763 = vmul.f32 %v729, 1000.0
      %vm764 = vcmask 56320
      %v765 = vsel %vm764, %v732, -inf
      %v766 = vsel %vm764, %v733, -inf
      %v767 = vsel %vm764, %v734, -inf
      %v768 = vsel %vm764, %v735, -inf
      %v769 = vsel %vm764, %v736, -inf
      %v770 = vmax.f32 %v765, %v769
      %v771 = vsel %vm764, %v737, -inf
      %v772 = vmax.f32 %v766, %v771
      %v773 = vsel %vm764, %v738, -inf
      %v774 = vmax.f32 %v767, %v773
      %v775 = vsel %vm764, %v739, -inf
      %v776 = vmax.f32 %v768, %v775
      %v777 = vsel %vm764, %v740, -inf
      %v778 = vmax.f32 %v770, %v777
      %v779 = vsel %vm764, %v741, -inf
      %v780 = vmax.f32 %v772, %v779
      %v781 = vsel %vm764, %v742, -inf
      %v782 = vmax.f32 %v774, %v781
      %v783 = vsel %vm764, %v743, -inf
      %v784 = vmax.f32 %v776, %v783
      %v785 = vsel %vm764, %v744, -inf
      %v786 = vmax.f32 %v778, %v785
      %v787 = vsel %vm764, %v745, -inf
      %v788 = vmax.f32 %v780, %v787
      %v789 = vsel %vm764, %v746, -inf
      %v790 = vmax.f32 %v782, %v789
      %v791 = vsel %vm764, %v747, -inf
      %v792 = vmax.f32 %v784, %v791
      %v793 = vsel %vm764, %v748, -inf
      %v794 = vmax.f32 %v786, %v793
      %v795 = vsel %vm764, %v749, -inf
      %v796 = vmax.f32 %v788, %v795
      %v797 = vsel %vm764, %v750, -inf
      %v798 = vmax.f32 %v790, %v797
      %v799 = vsel %vm764, %v751, -inf
      %v800 = vmax.f32 %v792, %v799
      %v801 = vsel %vm764, %v752, -inf
      %v802 = vmax.f32 %v794, %v801
      %v803 = vsel %vm764, %v753, -inf
      %v804 = vmax.f32 %v796, %v803
      %v805 = vsel %vm764, %v754, -inf
      %v806 = vmax.f32 %v798, %v805
      %v807 = vsel %vm764, %v755, -inf
      %v808 = vmax.f32 %v800, %v807
      %v809 = vsel %vm764, %v756, -inf
      %v810 = vmax.f32 %v802, %v809
      %v811 = vsel %vm764, %v757, -inf
      %v812 = vmax.f32 %v804, %v811
      %v813 = vsel %vm764, %v758, -inf
      %v814 = vmax.f32 %v806, %v813
      %v815 = vsel %vm764, %v759, -inf
      %v816 = vmax.f32 %v808, %v815
      %v817 = vsel %vm764, %v760, -inf
      %v818 = vmax.f32 %v810, %v817
      %v819 = vsel %vm764, %v761, -inf
      %v820 = vmax.f32 %v812, %v819
      %v821 = vsel %vm764, %v762, -inf
      %v822 = vmax.f32 %v814, %v821
      %v823 = vsel %vm764, %v763, -inf
      %v824 = vmax.f32 %v816, %v823
      %v825 = vmax.f32 %v818, %v820
      %v826 = vmax.f32 %v822, %v824
      %v827 = vmax.f32 %v825, %v826
      %v828 = vrot.slane %v827, 4
      %v829 = vmax.f32 %v827, %v828
      %v830 = vrot.slane %v829, 2
      %v831 = vmax.f32 %v829, %v830
      %v832 = vrot.slane %v831, 1
      %v833 = vmax.f32 %v831, %v832
      %v834 = vsub.f32 %v732, %v833
      %v835 = vsub.f32 %v733, %v833
      %v836 = vsub.f32 %v734, %v833
      %v837 = vsub.f32 %v735, %v833
      %v838 = vsub.f32 %v736, %v833
      %v839 = vsub.f32 %v737, %v833
      %v840 = vsub.f32 %v738, %v833
      %v841 = vsub.f32 %v739, %v833
      %v842 = vsub.f32 %v740, %v833
      %v843 = vsub.f32 %v741, %v833
      %v844 = vsub.f32 %v742, %v833
      %v845 = vsub.f32 %v743, %v833
      %v846 = vsub.f32 %v744, %v833
      %v847 = vsub.f32 %v745, %v833
      %v848 = vsub.f32 %v746, %v833
      %v849 = vsub.f32 %v747, %v833
      %v850 = vsub.f32 %v748, %v833
      %v851 = vsub.f32 %v749, %v833
      %v852 = vsub.f32 %v750, %v833
      %v853 = vsub.f32 %v751, %v833
      %v854 = vsub.f32 %v752, %v833
      %v855 = vsub.f32 %v753, %v833
      %v856 = vsub.f32 %v754, %v833
      %v857 = vsub.f32 %v755, %v833
      %v858 = vsub.f32 %v756, %v833
      %v859 = vsub.f32 %v757, %v833
      %v860 = vsub.f32 %v758, %v833
      %v861 = vsub.f32 %v759, %v833
      %v862 = vsub.f32 %v760, %v833
      %v863 = vsub.f32 %v761, %v833
      %v864 = vsub.f32 %v762, %v833
      %v865 = vsub.f32 %v763, %v833
      %v866 = vmul.f32 %v834, 1.442695
      %v867 = vpow.pop %v866
      %v868 = vmul.f32 %v835, 1.442695
      %v869 = vpow.pop %v868
      %v870 = vmul.f32 %v836, 1.442695
      %v871 = vpow.pop %v870
      %v872 = vmul.f32 %v837, 1.442695
      %v873 = vpow.pop %v872
      %v874 = vmul.f32 %v838, 1.442695
      %v875 = vpow.pop %v874
      %v876 = vmul.f32 %v839, 1.442695
      %v877 = vpow.pop %v876
      %v878 = vmul.f32 %v840, 1.442695
      %v879 = vpow.pop %v878
      %v880 = vmul.f32 %v841, 1.442695
      %v881 = vpow.pop %v880
      %v882 = vmul.f32 %v842, 1.442695
      %v883 = vpow.pop %v882
      %v884 = vmul.f32 %v843, 1.442695
      %v885 = vpow.pop %v884
      %v886 = vmul.f32 %v844, 1.442695
      %v887 = vpow.pop %v886
      %v888 = vmul.f32 %v845, 1.442695
      %v889 = vpow.pop %v888
      %v890 = vmul.f32 %v846, 1.442695
      %v891 = vpow.pop %v890
      %v892 = vmul.f32 %v847, 1.442695
      %v893 = vpow.pop %v892
      %v894 = vmul.f32 %v848, 1.442695
      %v895 = vpow.pop %v894
      %v896 = vmul.f32 %v849, 1.442695
      %v897 = vpow.pop %v896
      %v898 = vmul.f32 %v850, 1.442695
      %v899 = vpow.pop %v898
      %v900 = vmul.f32 %v851, 1.442695
      %v901 = vpow.pop %v900
      %v902 = vmul.f32 %v852, 1.442695
      %v903 = vpow.pop %v902
      %v904 = vmul.f32 %v853, 1.442695
      %v905 = vpow.pop %v904
      %v906 = vmul.f32 %v854, 1.442695
      %v907 = vpow.pop %v906
      %v908 = vmul.f32 %v855, 1.442695
      %v909 = vpow.pop %v908
      %v910 = vmul.f32 %v856, 1.442695
      %v911 = vpow.pop %v910
      %v912 = vmul.f32 %v857, 1.442695
      %v913 = vpow.pop %v912
      %v914 = vmul.f32 %v858, 1.442695
      %v915 = vpow.pop %v914
      %v916 = vmul.f32 %v859, 1.442695
      %v917 = vpow.pop %v916
      %v918 = vmul.f32 %v860, 1.442695
      %v919 = vpow.pop %v918
      %v920 = vmul.f32 %v861, 1.442695
      %v921 = vpow.pop %v920
      %v922 = vmul.f32 %v862, 1.442695
      %v923 = vpow.pop %v922
      %v924 = vmul.f32 %v863, 1.442695
      %v925 = vpow.pop %v924
      %v926 = vmul.f32 %v864, 1.442695
      %v927 = vpow.pop %v926
      %v928 = vmul.f32 %v865, 1.442695
      %v929 = vpow.pop %v928
      %v930 = vsel %vm764, %v867, 0.0
      %v931 = vsel %vm764, %v869, 0.0
      %v932 = vadd.f32 %v930, %v931
      %v933 = vsel %vm764, %v871, 0.0
      %v934 = vadd.f32 %v932, %v933
      %v935 = vsel %vm764, %v873, 0.0
      %v936 = vadd.f32 %v934, %v935
      %v937 = vsel %vm764, %v875, 0.0
      %v938 = vadd.f32 %v936, %v937
      %v939 = vsel %vm764, %v877, 0.0
      %v940 = vadd.f32 %v938, %v939
      %v941 = vsel %vm764, %v879, 0.0
      %v942 = vadd.f32 %v940, %v941
      %v943 = vsel %vm764, %v881, 0.0
      %v944 = vadd.f32 %v942, %v943
      %v945 = vsel %vm764, %v883, 0.0
      %v946 = vadd.f32 %v944, %v945
      %v947 = vsel %vm764, %v885, 0.0
      %v948 = vadd.f32 %v946, %v947
      %v949 = vsel %vm764, %v887, 0.0
      %v950 = vadd.f32 %v948, %v949
      %v951 = vsel %vm764, %v889, 0.0
      %v952 = vadd.f32 %v950, %v951
      %v953 = vsel %vm764, %v891, 0.0
      %v954 = vadd.f32 %v952, %v953
      %v955 = vsel %vm764, %v893, 0.0
      %v956 = vadd.f32 %v954, %v955
      %v957 = vsel %vm764, %v895, 0.0
      %v958 = vadd.f32 %v956, %v957
      %v959 = vsel %vm764, %v897, 0.0
      %v960 = vadd.f32 %v958, %v959
      %v961 = vsel %vm764, %v899, 0.0
      %v962 = vadd.f32 %v960, %v961
      %v963 = vsel %vm764, %v901, 0.0
      %v964 = vadd.f32 %v962, %v963
      %v965 = vsel %vm764, %v903, 0.0
      %v966 = vadd.f32 %v964, %v965
      %v967 = vsel %vm764, %v905, 0.0
      %v968 = vadd.f32 %v966, %v967
      %v969 = vsel %vm764, %v907, 0.0
      %v970 = vadd.f32 %v968, %v969
      %v971 = vsel %vm764, %v909, 0.0
      %v972 = vadd.f32 %v970, %v971
      %v973 = vsel %vm764, %v911, 0.0
      %v974 = vadd.f32 %v972, %v973
      %v975 = vsel %vm764, %v913, 0.0
      %v976 = vadd.f32 %v974, %v975
      %v977 = vsel %vm764, %v915, 0.0
      %v978 = vadd.f32 %v976, %v977
      %v979 = vsel %vm764, %v917, 0.0
      %v980 = vadd.f32 %v978, %v979
      %v981 = vsel %vm764, %v919, 0.0
      %v982 = vadd.f32 %v980, %v981
      %v983 = vsel %vm764, %v921, 0.0
      %v984 = vadd.f32 %v982, %v983
      %v985 = vsel %vm764, %v923, 0.0
      %v986 = vadd.f32 %v984, %v985
      %v987 = vsel %vm764, %v925, 0.0
      %v988 = vadd.f32 %v986, %v987
      %v989 = vsel %vm764, %v927, 0.0
      %v990 = vadd.f32 %v988, %v989
      %v991 = vsel %vm764, %v929, 0.0
      %v992 = vadd.f32 %v990, %v991
      %v993 = vrot.slane %v992, 4
      %v994 = vadd.f32 %v992, %v993
      %v995 = vrot.slane %v994, 2
      %v996 = vadd.f32 %v994, %v995
      %v997 = vrot.slane %v996, 1
      %v998 = vadd.f32 %v996, %v997
      %v999 = vld [vmem:[%s4] sm:$0xff]
      %v1000 = vld [vmem:[%s4 + $0x8] sm:$0xff]
      %v1001 = vld [vmem:[%s4 + $0x10] sm:$0xff]
      %v1002 = vld [vmem:[%s4 + $0x18] sm:$0xff]
      %v1003 = vld [vmem:[%s4 + $0x20] sm:$0xff]
      %v1004 = vld [vmem:[%s4 + $0x28] sm:$0xff]
      %v1005 = vld [vmem:[%s4 + $0x30] sm:$0xff]
      %v1006 = vld [vmem:[%s4 + $0x38] sm:$0xff]
      %v1007 = vld [vmem:[%s4 + $0x40] sm:$0xff]
      %v1008 = vld [vmem:[%s4 + $0x48] sm:$0xff]
      %v1009 = vld [vmem:[%s4 + $0x50] sm:$0xff]
      %v1010 = vld [vmem:[%s4 + $0x58] sm:$0xff]
      %v1011 = vld [vmem:[%s4 + $0x60] sm:$0xff]
      %v1012 = vld [vmem:[%s4 + $0x68] sm:$0xff]
      %v1013 = vld [vmem:[%s4 + $0x70] sm:$0xff]
      %v1014 = vld [vmem:[%s4 + $0x78] sm:$0xff]
      %v1015 = vld [vmem:[%s4 + $0x80] sm:$0xff]
      %v1016 = vld [vmem:[%s4 + $0x88] sm:$0xff]
      %v1017 = vld [vmem:[%s4 + $0x90] sm:$0xff]
      %v1018 = vld [vmem:[%s4 + $0x98] sm:$0xff]
      %v1019 = vld [vmem:[%s4 + $0xa0] sm:$0xff]
      %v1020 = vld [vmem:[%s4 + $0xa8] sm:$0xff]
      %v1021 = vld [vmem:[%s4 + $0xb0] sm:$0xff]
      %v1022 = vld [vmem:[%s4 + $0xb8] sm:$0xff]
      %v1023 = vld [vmem:[%s4 + $0xc0] sm:$0xff]
      %v1024 = vld [vmem:[%s4 + $0xc8] sm:$0xff]
      %v1025 = vld [vmem:[%s4 + $0xd0] sm:$0xff]
      %v1026 = vld [vmem:[%s4 + $0xd8] sm:$0xff]
      %v1027 = vld [vmem:[%s4 + $0xe0] sm:$0xff]
      %v1028 = vld [vmem:[%s4 + $0xe8] sm:$0xff]
      %v1029 = vld [vmem:[%s4 + $0xf0] sm:$0xff]
      %v1030 = vld [vmem:[%s4 + $0xf8] sm:$0xff]
      %1032 = vset.pattern.permute.xlu0 0
      %1033 = vperm.xlu0 %1032, %v999
      %v1034 = vpop.permute.xlu0 %1033
      %1037 = vset.pattern.permute.xlu0 0
      %1038 = vperm.xlu0 %1037, %v1000
      %v1039 = vpop.permute.xlu0 %1038
      %1042 = vset.pattern.permute.xlu0 0
      %1043 = vperm.xlu0 %1042, %v1001
      %v1044 = vpop.permute.xlu0 %1043
      %1047 = vset.pattern.permute.xlu0 0
      %1048 = vperm.xlu0 %1047, %v1002
      %v1049 = vpop.permute.xlu0 %1048
      %1052 = vset.pattern.permute.xlu0 0
      %1053 = vperm.xlu0 %1052, %v1003
      %v1054 = vpop.permute.xlu0 %1053
      %1057 = vset.pattern.permute.xlu0 0
      %1058 = vperm.xlu0 %1057, %v1004
      %v1059 = vpop.permute.xlu0 %1058
      %1062 = vset.pattern.permute.xlu0 0
      %1063 = vperm.xlu0 %1062, %v1005
      %v1064 = vpop.permute.xlu0 %1063
      %1067 = vset.pattern.permute.xlu0 0
      %1068 = vperm.xlu0 %1067, %v1006
      %v1069 = vpop.permute.xlu0 %1068
      %1072 = vset.pattern.permute.xlu0 0
      %1073 = vperm.xlu0 %1072, %v1007
      %v1074 = vpop.permute.xlu0 %1073
      %1077 = vset.pattern.permute.xlu0 0
      %1078 = vperm.xlu0 %1077, %v1008
      %v1079 = vpop.permute.xlu0 %1078
      %1082 = vset.pattern.permute.xlu0 0
      %1083 = vperm.xlu0 %1082, %v1009
      %v1084 = vpop.permute.xlu0 %1083
      %1087 = vset.pattern.permute.xlu0 0
      %1088 = vperm.xlu0 %1087, %v1010
      %v1089 = vpop.permute.xlu0 %1088
      %1092 = vset.pattern.permute.xlu0 0
      %1093 = vperm.xlu0 %1092, %v1011
      %v1094 = vpop.permute.xlu0 %1093
      %1097 = vset.pattern.permute.xlu0 0
      %1098 = vperm.xlu0 %1097, %v1012
      %v1099 = vpop.permute.xlu0 %1098
      %1102 = vset.pattern.permute.xlu0 0
      %1103 = vperm.xlu0 %1102, %v1013
      %v1104 = vpop.permute.xlu0 %1103
      %1107 = vset.pattern.permute.xlu0 0
      %1108 = vperm.xlu0 %1107, %v1014
      %v1109 = vpop.permute.xlu0 %1108
      %1112 = vset.pattern.permute.xlu0 0
      %1113 = vperm.xlu0 %1112, %v1015
      %v1114 = vpop.permute.xlu0 %1113
      %1117 = vset.pattern.permute.xlu0 0
      %1118 = vperm.xlu0 %1117, %v1016
      %v1119 = vpop.permute.xlu0 %1118
      %1122 = vset.pattern.permute.xlu0 0
      %1123 = vperm.xlu0 %1122, %v1017
      %v1124 = vpop.permute.xlu0 %1123
      %1127 = vset.pattern.permute.xlu0 0
      %1128 = vperm.xlu0 %1127, %v1018
      %v1129 = vpop.permute.xlu0 %1128
      %1132 = vset.pattern.permute.xlu0 0
      %1133 = vperm.xlu0 %1132, %v1019
      %v1134 = vpop.permute.xlu0 %1133
      %1137 = vset.pattern.permute.xlu0 0
      %1138 = vperm.xlu0 %1137, %v1020
      %v1139 = vpop.permute.xlu0 %1138
      %1142 = vset.pattern.permute.xlu0 0
      %1143 = vperm.xlu0 %1142, %v1021
      %v1144 = vpop.permute.xlu0 %1143
      %1147 = vset.pattern.permute.xlu0 0
      %1148 = vperm.xlu0 %1147, %v1022
      %v1149 = vpop.permute.xlu0 %1148
      %1152 = vset.pattern.permute.xlu0 0
      %1153 = vperm.xlu0 %1152, %v1023
      %v1154 = vpop.permute.xlu0 %1153
      %1157 = vset.pattern.permute.xlu0 0
      %1158 = vperm.xlu0 %1157, %v1024
      %v1159 = vpop.permute.xlu0 %1158
      %1162 = vset.pattern.permute.xlu0 0
      %1163 = vperm.xlu0 %1162, %v1025
      %v1164 = vpop.permute.xlu0 %1163
      %1167 = vset.pattern.permute.xlu0 0
      %1168 = vperm.xlu0 %1167, %v1026
      %v1169 = vpop.permute.xlu0 %1168
      %1172 = vset.pattern.permute.xlu0 0
      %1173 = vperm.xlu0 %1172, %v1027
      %v1174 = vpop.permute.xlu0 %1173
      %1177 = vset.pattern.permute.xlu0 0
      %1178 = vperm.xlu0 %1177, %v1028
      %v1179 = vpop.permute.xlu0 %1178
      %1182 = vset.pattern.permute.xlu0 0
      %1183 = vperm.xlu0 %1182, %v1029
      %v1184 = vpop.permute.xlu0 %1183
      %1187 = vset.pattern.permute.xlu0 0
      %1188 = vperm.xlu0 %1187, %v1030
      %v1189 = vpop.permute.xlu0 %1188
      %v1191 = vmul.f32 %v867, %v1034
      %v1192 = vmul.f32 %v869, %v1039
      %v1193 = vmul.f32 %v871, %v1044
      %v1194 = vmul.f32 %v873, %v1049
      %v1195 = vmul.f32 %v875, %v1054
      %v1196 = vmul.f32 %v877, %v1059
      %v1197 = vmul.f32 %v879, %v1064
      %v1198 = vmul.f32 %v881, %v1069
      %v1199 = vmul.f32 %v883, %v1074
      %v1200 = vmul.f32 %v885, %v1079
      %v1201 = vmul.f32 %v887, %v1084
      %v1202 = vmul.f32 %v889, %v1089
      %v1203 = vmul.f32 %v891, %v1094
      %v1204 = vmul.f32 %v893, %v1099
      %v1205 = vmul.f32 %v895, %v1104
      %v1206 = vmul.f32 %v897, %v1109
      %v1207 = vmul.f32 %v899, %v1114
      %v1208 = vmul.f32 %v901, %v1119
      %v1209 = vmul.f32 %v903, %v1124
      %v1210 = vmul.f32 %v905, %v1129
      %v1211 = vmul.f32 %v907, %v1134
      %v1212 = vmul.f32 %v909, %v1139
      %v1213 = vmul.f32 %v911, %v1144
      %v1214 = vmul.f32 %v913, %v1149
      %v1215 = vmul.f32 %v915, %v1154
      %v1216 = vmul.f32 %v917, %v1159
      %v1217 = vmul.f32 %v919, %v1164
      %v1218 = vmul.f32 %v921, %v1169
      %v1219 = vmul.f32 %v923, %v1174
      %v1220 = vmul.f32 %v925, %v1179
      %v1221 = vmul.f32 %v927, %v1184
      %v1222 = vmul.f32 %v929, %v1189
      %v1223 = vsel %vm764, %v1191, 0.0
      %v1224 = vsel %vm764, %v1192, 0.0
      %v1225 = vadd.f32 %v1223, %v1224
      %v1226 = vsel %vm764, %v1193, 0.0
      %v1227 = vadd.f32 %v1225, %v1226
      %v1228 = vsel %vm764, %v1194, 0.0
      %v1229 = vadd.f32 %v1227, %v1228
      %v1230 = vsel %vm764, %v1195, 0.0
      %v1231 = vadd.f32 %v1229, %v1230
      %v1232 = vsel %vm764, %v1196, 0.0
      %v1233 = vadd.f32 %v1231, %v1232
      %v1234 = vsel %vm764, %v1197, 0.0
      %v1235 = vadd.f32 %v1233, %v1234
      %v1236 = vsel %vm764, %v1198, 0.0
      %v1237 = vadd.f32 %v1235, %v1236
      %v1238 = vsel %vm764, %v1199, 0.0
      %v1239 = vadd.f32 %v1237, %v1238
      %v1240 = vsel %vm764, %v1200, 0.0
      %v1241 = vadd.f32 %v1239, %v1240
      %v1242 = vsel %vm764, %v1201, 0.0
      %v1243 = vadd.f32 %v1241, %v1242
      %v1244 = vsel %vm764, %v1202, 0.0
      %v1245 = vadd.f32 %v1243, %v1244
      %v1246 = vsel %vm764, %v1203, 0.0
      %v1247 = vadd.f32 %v1245, %v1246
      %v1248 = vsel %vm764, %v1204, 0.0
      %v1249 = vadd.f32 %v1247, %v1248
      %v1250 = vsel %vm764, %v1205, 0.0
      %v1251 = vadd.f32 %v1249, %v1250
      %v1252 = vsel %vm764, %v1206, 0.0
      %v1253 = vadd.f32 %v1251, %v1252
      %v1254 = vsel %vm764, %v1207, 0.0
      %v1255 = vadd.f32 %v1253, %v1254
      %v1256 = vsel %vm764, %v1208, 0.0
      %v1257 = vadd.f32 %v1255, %v1256
      %v1258 = vsel %vm764, %v1209, 0.0
      %v1259 = vadd.f32 %v1257, %v1258
      %v1260 = vsel %vm764, %v1210, 0.0
      %v1261 = vadd.f32 %v1259, %v1260
      %v1262 = vsel %vm764, %v1211, 0.0
      %v1263 = vadd.f32 %v1261, %v1262
      %v1264 = vsel %vm764, %v1212, 0.0
      %v1265 = vadd.f32 %v1263, %v1264
      %v1266 = vsel %vm764, %v1213, 0.0
      %v1267 = vadd.f32 %v1265, %v1266
      %v1268 = vsel %vm764, %v1214, 0.0
      %v1269 = vadd.f32 %v1267, %v1268
      %v1270 = vsel %vm764, %v1215, 0.0
      %v1271 = vadd.f32 %v1269, %v1270
      %v1272 = vsel %vm764, %v1216, 0.0
      %v1273 = vadd.f32 %v1271, %v1272
      %v1274 = vsel %vm764, %v1217, 0.0
      %v1275 = vadd.f32 %v1273, %v1274
      %v1276 = vsel %vm764, %v1218, 0.0
      %v1277 = vadd.f32 %v1275, %v1276
      %v1278 = vsel %vm764, %v1219, 0.0
      %v1279 = vadd.f32 %v1277, %v1278
      %v1280 = vsel %vm764, %v1220, 0.0
      %v1281 = vadd.f32 %v1279, %v1280
      %v1282 = vsel %vm764, %v1221, 0.0
      %v1283 = vadd.f32 %v1281, %v1282
      %v1284 = vsel %vm764, %v1222, 0.0
      %v1285 = vadd.f32 %v1283, %v1284
      %v1286 = vrot.slane %v1285, 4
      %v1287 = vadd.f32 %v1285, %v1286
      %v1288 = vrot.slane %v1287, 2
      %v1289 = vadd.f32 %v1287, %v1288
      %v1290 = vrot.slane %v1289, 1
      %v1291 = vadd.f32 %v1289, %v1290
      %v1292 = vrcp.pop %v998
      %v1293 = vmul.f32 %v1291, %v1292
      %v1294 = vfloor.f32 %v1293
      %v1295 = vand.u32 2147483647, %v1294
      %v1296 = vrcp.pop 16.0
      %v1297 = vmul.f32 %v1295, %v1296
      %v1298 = vfloor.f32 %v1297
      %v1299 = vmul.f32 %v1298, 16.0
      %v1300 = vsub.f32 %v1295, %v1299
      %vm1301 = vcmp.eq.f32.partialorder %v1300, 16.0
      %v1302 = vsel %vm1301, 0.0, %v1300
      %v1303 = vand.u32 2147483647, %v1302
      %v1304 = vand.u32 %v1294, 2147483648
      %v1305 = vor.u32 %v1303, %v1304
      %vm1306 = vcmp.ne.f32.partialorder %v1305, 0.0
      %vm1307 = vcmp.lt.f32.partialorder %v1305, 0.0
      %vm1308 = vmand %vm1307, %vm1306
      %v1309 = vadd.f32 %v1305, 16.0
      %v1310 = vsel %vm1308, %v1309, %v1305
      %v1311 = vrcp.pop 16.0
      %v1312 = vmul.f32 %v1294, %v1311
      %v1313 = vfloor.f32 %v1312
      %v1314 = vand.u32 2147483647, %v1313
      %v1315 = vrcp.pop 16.0
      %v1316 = vmul.f32 %v1314, %v1315
      %v1317 = vfloor.f32 %v1316
      %v1318 = vmul.f32 %v1317, 16.0
      %v1319 = vsub.f32 %v1314, %v1318
      %vm1320 = vcmp.eq.f32.partialorder %v1319, 16.0
      %v1321 = vsel %vm1320, 0.0, %v1319
      %v1322 = vand.u32 2147483647, %v1321
      %v1323 = vand.u32 %v1313, 2147483648
      %v1324 = vor.u32 %v1322, %v1323
      %vm1325 = vcmp.ne.f32.partialorder %v1324, 0.0
      %vm1326 = vcmp.lt.f32.partialorder %v1324, 0.0
      %vm1327 = vmand %vm1326, %vm1325
      %v1328 = vadd.f32 %v1324, 16.0
      %v1329 = vsel %vm1327, %v1328, %v1324
      %v1330 = vld [vmem:[%s5] sm:$0x7f]
      %v1331 = vld [vmem:[%s5 + $0x8] sm:$0x7f]
      %v1332 = vld [vmem:[%s6] sm:$0x7f]
      %v1333 = vld [vmem:[%s6 + $0x8] sm:$0x7f]
      %v1335 = vsel %vm764, %v1310, 0
      %vm1337 = vcmask 1046528
      %v1339 = vsel %vm1337, %v1332, 0
      %v1342 = vsel %vm1337, %v1333, 0
      %1344 = vmatprep.subr.mxu0 %v1342
      %1345 = vmatpush1.msra.mxu0 %v1339
      %1346 = vmatprep.subr.mxu0 0.0
      %1347 = vmatpush1.msra.mxu0 0.0
      %1348 = vmatprep.subr.mxu0 0.0
      %1349 = vmatpush1.msra.mxu0 0.0
      %1350 = vmatprep.subr.mxu0 0.0
      %1351 = vmatpush1.msra.mxu0 0.0
      %1352 = vmatprep.subr.mxu0 0.0
      %1353 = vmatpush1.msra.mxu0 0.0
      %1354 = vmatprep.subr.mxu0 0.0
      %1355 = vmatpush1.msra.mxu0 0.0
      %1356 = vmatprep.subr.mxu0 0.0
      %1357 = vmatpush1.msra.mxu0 0.0
      %1358 = vmatprep.subr.mxu0 0.0
      %1359 = vmatpush1.msra.mxu0 0.0
      %1360 = vmatprep.subr.mxu0 0.0
      %1361 = vmatpush1.msra.mxu0 0.0
      %1362 = vmatprep.subr.mxu0 0.0
      %1363 = vmatpush1.msra.mxu0 0.0
      %1364 = vmatprep.subr.mxu0 0.0
      %1365 = vmatpush1.msra.mxu0 0.0
      %1366 = vmatprep.subr.mxu0 0.0
      %1367 = vmatpush1.msra.mxu0 0.0
      %1368 = vmatprep.subr.mxu0 0.0
      %1369 = vmatpush1.msra.mxu0 0.0
      %1370 = vmatprep.subr.mxu0 0.0
      %1371 = vmatpush1.msra.mxu0 0.0
      %1372 = vmatprep.subr.mxu0 0.0
      %1373 = vmatpush1.msra.mxu0 0.0
      %1374 = vmatprep.subr.mxu0 0.0
      %1375 = vmatpush1.msra.mxu0 0.0
      %1376 = vmatprep.subr.mxu0 0.0
      %1377 = vmatpush1.msra.mxu0 0.0
      %1378 = vmatprep.subr.mxu0 0.0
      %1379 = vmatpush1.msra.mxu0 0.0
      %1380 = vmatprep.subr.mxu0 0.0
      %1381 = vmatpush1.msra.mxu0 0.0
      %1382 = vmatprep.subr.mxu0 0.0
      %1383 = vmatpush1.msra.mxu0 0.0
      %1384 = vmatprep.subr.mxu0 0.0
      %1385 = vmatpush1.msra.mxu0 0.0
      %1386 = vmatprep.subr.mxu0 0.0
      %1387 = vmatpush1.msra.mxu0 0.0
      %1388 = vmatprep.subr.mxu0 0.0
      %1389 = vmatpush1.msra.mxu0 0.0
      %1390 = vmatprep.subr.mxu0 0.0
      %1391 = vmatpush1.msra.mxu0 0.0
      %1392 = vmatprep.subr.mxu0 0.0
      %1393 = vmatpush1.msra.mxu0 0.0
      %1394 = vmatprep.subr.mxu0 0.0
      %1395 = vmatpush1.msra.mxu0 0.0
      %1396 = vmatprep.subr.mxu0 0.0
      %1397 = vmatpush1.msra.mxu0 0.0
      %1398 = vmatprep.subr.mxu0 0.0
      %1399 = vmatpush1.msra.mxu0 0.0
      %1400 = vmatprep.subr.mxu0 0.0
      %1401 = vmatpush1.msra.mxu0 0.0
      %1402 = vmatprep.subr.mxu0 0.0
      %1403 = vmatpush1.msra.mxu0 0.0
      %1404 = vmatprep.subr.mxu0 0.0
      %1405 = vmatpush1.msra.mxu0 0.0
      %1406 = vmatprep.subr.mxu0 0.0
      %1407 = vmatpush1.msra.mxu0 0.0
      %1408 = vmatprep.mubr.f32.mxu0 0.0
      %1409 = vmatmul.mubr.f32.gmra.mrb[0].mxu0 %v1335
      %v1410 = vpop.f32.mrb[0].mxu0
      %v1411 = vadd.f32 0.0, %v1410
      %v1412 = vpop.f32.mrb[0].mxu0
      %v1413 = vadd.f32 0.0, %v1412
      %1414 = vdwg.mxu0
      %v1416 = vsel %vm764, %v1329, 0
      %v1419 = vsel %vm1337, %v1330, 0
      %v1422 = vsel %vm1337, %v1331, 0
      %1424 = vmatprep.subr.mxu0 %v1422
      %1425 = vmatpush1.msra.mxu0 %v1419
      %1426 = vmatprep.subr.mxu0 0.0
      %1427 = vmatpush1.msra.mxu0 0.0
      %1428 = vmatprep.subr.mxu0 0.0
      %1429 = vmatpush1.msra.mxu0 0.0
      %1430 = vmatprep.subr.mxu0 0.0
      %1431 = vmatpush1.msra.mxu0 0.0
      %1432 = vmatprep.subr.mxu0 0.0
      %1433 = vmatpush1.msra.mxu0 0.0
      %1434 = vmatprep.subr.mxu0 0.0
      %1435 = vmatpush1.msra.mxu0 0.0
      %1436 = vmatprep.subr.mxu0 0.0
      %1437 = vmatpush1.msra.mxu0 0.0
      %1438 = vmatprep.subr.mxu0 0.0
      %1439 = vmatpush1.msra.mxu0 0.0
      %1440 = vmatprep.subr.mxu0 0.0
      %1441 = vmatpush1.msra.mxu0 0.0
      %1442 = vmatprep.subr.mxu0 0.0
      %1443 = vmatpush1.msra.mxu0 0.0
      %1444 = vmatprep.subr.mxu0 0.0
      %1445 = vmatpush1.msra.mxu0 0.0
      %1446 = vmatprep.subr.mxu0 0.0
      %1447 = vmatpush1.msra.mxu0 0.0
      %1448 = vmatprep.subr.mxu0 0.0
      %1449 = vmatpush1.msra.mxu0 0.0
      %1450 = vmatprep.subr.mxu0 0.0
      %1451 = vmatpush1.msra.mxu0 0.0
      %1452 = vmatprep.subr.mxu0 0.0
      %1453 = vmatpush1.msra.mxu0 0.0
      %1454 = vmatprep.subr.mxu0 0.0
      %1455 = vmatpush1.msra.mxu0 0.0
      %1456 = vmatprep.subr.mxu0 0.0
      %1457 = vmatpush1.msra.mxu0 0.0
      %1458 = vmatprep.subr.mxu0 0.0
      %1459 = vmatpush1.msra.mxu0 0.0
      %1460 = vmatprep.subr.mxu0 0.0
      %1461 = vmatpush1.msra.mxu0 0.0
      %1462 = vmatprep.subr.mxu0 0.0
      %1463 = vmatpush1.msra.mxu0 0.0
      %1464 = vmatprep.subr.mxu0 0.0
      %1465 = vmatpush1.msra.mxu0 0.0
      %1466 = vmatprep.subr.mxu0 0.0
      %1467 = vmatpush1.msra.mxu0 0.0
      %1468 = vmatprep.subr.mxu0 0.0
      %1469 = vmatpush1.msra.mxu0 0.0
      %1470 = vmatprep.subr.mxu0 0.0
      %1471 = vmatpush1.msra.mxu0 0.0
      %1472 = vmatprep.subr.mxu0 0.0
      %1473 = vmatpush1.msra.mxu0 0.0
      %1474 = vmatprep.subr.mxu0 0.0
      %1475 = vmatpush1.msra.mxu0 0.0
      %1476 = vmatprep.subr.mxu0 0.0
      %1477 = vmatpush1.msra.mxu0 0.0
      %1478 = vmatprep.subr.mxu0 0.0
      %1479 = vmatpush1.msra.mxu0 0.0
      %1480 = vmatprep.subr.mxu0 0.0
      %1481 = vmatpush1.msra.mxu0 0.0
      %1482 = vmatprep.subr.mxu0 0.0
      %1483 = vmatpush1.msra.mxu0 0.0
      %1484 = vmatprep.subr.mxu0 0.0
      %1485 = vmatpush1.msra.mxu0 0.0
      %1486 = vmatprep.subr.mxu0 0.0
      %1487 = vmatpush1.msra.mxu0 0.0
      %1488 = vmatprep.mubr.f32.mxu0 0.0
      %1489 = vmatmul.mubr.f32.gmra.mrb[0].mxu0 %v1416
      %v1490 = vpop.f32.mrb[0].mxu0
      %v1491 = vadd.f32 %v1411, %v1490
      %v1492 = vpop.f32.mrb[0].mxu0
      %v1493 = vadd.f32 %v1413, %v1492
      %1494 = vdwg.mxu0
      %v1495 = vld [vmem:[%s7] sm:$0x3]
      %v1497 = vlaneseq
      %v1498 = vshrl.u32 %v1497, 7
      %v1499 = vsub.s32 0, %v1498
      %v1500 = vrot.slane %v1495, %v1499
      %v1501 = vlaneseq
      %v1502 = vshrl.u32 %v1501, 7
      %v1503 = vsub.s32 1, %v1502
      %v1504 = vrot.slane %v1495, %v1503
      %v1507 = vadd.f32 %v1491, %v1500
      %v1508 = vadd.f32 %v1493, %v1504
      %v1509 = vmax.f32 %v1507, 0.0
      %v1510 = vmax.f32 %v1508, 0.0
      %v1513 = vcombine.low %v1509, %v1510
      %v1515 = vunpack.c.l.s4 1966171168
      %v1516 = vunpack.c.0.s8 %v1515
      %v1517 = vlaneseq
      %v1518 = vshrl.u32 %v1517, 7
      %v1519 = vsub.s32 %v1516, %v1518
      %v1520 = vrot.slane %v1513, %v1519
      %v1522 = vunpack.c.l.s4 1966171168
      %v1523 = vunpack.c.0.s8 %v1522
      %v1524 = vlaneseq
      %v1525 = vshrl.u32 %v1524, 7
      %v1526 = vsub.s32 %v1523, %v1525
      %v1527 = vrot.slane %v1520, %v1526
      %v1529 = vlaneseq
      %vm1530 = vcmp.ge.s32.totalorder %v1529, 0
      %vm1531 = vcmp.lt.s32.totalorder %v1529, 256
      %vm1532 = vmand %vm1530, %vm1531
      %1533 = vst.msk [vmem:[%s356] sm:$0x3] %vm1532, %v1527
      %p1534 = scmp.lt.s32.totalorder %s21, 1
      %s1535 = scalar_select %p1534, %s21, 1
      %s1536 = scalar_lea.vmem %s8, %s1535
      %p1537 = scmp.lt.s32.totalorder %s21, 1
      %s1538 = scalar_select %p1537, %s21, 1
      %s1539 = smul.addr %s1538, 2
      %s1540 = scalar_lea.vmem %s9, %s1539
      // Predicated region
      $region53: #{smc_forward.11} parent=51 // pred_check
        %p1541 = pneg %p217
      $region54: #{smc_forward.11} parent=51 // pred_check_branch
        %1543 = sbr.rel (%p1541) target = $region56
      $region55: #{smc_forward.11} parent=51 // pred_region
        _
      $region56: #{smc_forward.11} parent=51 // pred_fallthru
        _
      // Predicated region
      $region57: #{smc_forward.11} parent=51 // pred_check
        %p1544 = pneg %p243
      $region58: #{smc_forward.11} parent=51 // pred_check_branch
        %1546 = sbr.rel (%p1544) target = $region60
      $region59: #{smc_forward.11} parent=51 // pred_region
        _
      $region60: #{smc_forward.11} parent=51 // pred_fallthru
        _
    $region52: #{smc_forward.11} parent=5 // pred_fallthru
      _
    %p1547 = scmp.le.s32.totalorder 2, %s16
    // Predicated region
    $region61: #{smc_forward.11} parent=5 // pred_check
      %p1548 = pneg %p1547
    $region62: #{smc_forward.11} parent=5 // pred_check_branch
      %1550 = sbr.rel (%p1548) target = $region64
    $region63: #{smc_forward.11} parent=5 // pred_region
      %s1551 = ssub.s32 %s16, 2
      // Predicated region
      $region65: #{smc_forward.11} parent=63 // pred_check
        %p1552 = pneg %p223
      $region66: #{smc_forward.11} parent=63 // pred_check_branch
        %1554 = sbr.rel (%p1552) target = $region68
      $region67: #{smc_forward.11} parent=63 // pred_region
        %p1555 = scmp.lt.s32.totalorder %s22, 1
        %s1556 = scalar_select %p1555, %s22, 1
        %s1557 = scalar_lea.vmem %s8, %s1556
      $region68: #{smc_forward.11} parent=63 // pred_fallthru
        _
      // Predicated region
      $region69: #{smc_forward.11} parent=63 // pred_check
        %p1558 = pneg %p249
      $region70: #{smc_forward.11} parent=63 // pred_check_branch
        %1560 = sbr.rel (%p1558) target = $region72
      $region71: #{smc_forward.11} parent=63 // pred_region
        %p1561 = scmp.lt.s32.totalorder %s22, 1
        %s1562 = scalar_select %p1561, %s22, 1
        %s1563 = smul.addr %s1562, 2
        %s1564 = scalar_lea.vmem %s9, %s1563
      $region72: #{smc_forward.11} parent=63 // pred_fallthru
        _
    $region64: #{smc_forward.11} parent=5 // pred_fallthru
      _
  $region6: #{smc_forward.11} parent=0 // loop_footer
    %s20 = sadd.s32 1, %s16
  $region7: #{smc_forward.11} parent=0 // loop_footer_branch
    %15 = sbr.rel target = $region3
  $region8: #{smc_forward.11} parent=0 // loop_exit
    _

</llo_original>
